<compile_context>
chip_gen: v6e
topology: v6e:2x2x1
jax: 0.10.0
libtpu: 0.0.40
codegen_flags: <defaults>
</compile_context>

<pallas_src>
import numpy as np
import jax
import jax.numpy as jnp
from jax import lax
from jax.experimental import pallas as pl
from jax.experimental.pallas import tpu as pltpu

LANE = 128


def _round_up(v, m):
    return (v + m - 1) // m * m


# ---------------------------------------------------------------------------
# Pallas kernel (built as a closure over the static band layout)
# ---------------------------------------------------------------------------
def _make_kernel(n_bands, band_k, band_stride):
    def kernel(x_ref, a1_ref, b1_ref, a2_ref, b2_ref, wo_ref, bo_ref,
               o_ref, h2_ref):
        # x_ref: (TN, 128) bf16; h2_ref: (TN, n_bands*128) bf16 VMEM scratch.
        x = x_ref[...]
        h1 = jnp.dot(x, a1_ref[...], preferred_element_type=jnp.float32)
        h1 = jnp.maximum(h1 + b1_ref[...], 0.0).astype(jnp.bfloat16)   # (TN, f1_p)
        # Block-banded conv2: each 128-wide output band only touches one
        # 512-wide, lane-aligned slice of h1 (the dense Toeplitz is ~91% zeros).
        for j in range(n_bands):
            h1_j = h1[:, j * band_stride: j * band_stride + band_k]    # (TN, 512)
            h2_j = jnp.dot(h1_j, a2_ref[j], preferred_element_type=jnp.float32)
            h2_j = jnp.maximum(h2_j + b2_ref[:, j * LANE:(j + 1) * LANE], 0.0)
            h2_ref[:, j * LANE:(j + 1) * LANE] = h2_j.astype(jnp.bfloat16)
        out = jnp.dot(h2_ref[...], wo_ref[...], preferred_element_type=jnp.float32)
        o_ref[...] = (out + bo_ref[...]).astype(o_ref.dtype)           # (TN, 128)
    return kernel


# ---------------------------------------------------------------------------
# One-time parameter preparation (hoisted off the hot path, per review)
# ---------------------------------------------------------------------------
def conv1d_as_gemm(w, t_in):
    """w: (C_out, C_in, K) conv weight -> dense GEMM matrix of shape
    (T_in*C_in, T_out*C_out) for a 'valid' conv1d acting on inputs whose
    feature axis is flattened time-major (col = t*C + c)."""
    w = np.asarray(w, dtype=np.float32)
    c_out, c_in, k = w.shape
    t_out = t_in - k + 1
    a = np.zeros((t_in * c_in, t_out * c_out), dtype=np.float32)
    for to in range(t_out):
        for kk in range(k):
            ti = to + kk
            a[ti * c_in:(ti + 1) * c_in, to * c_out:(to + 1) * c_out] = w[:, :, kk].T
    return a


def prepare_params(params, spike_size=121):
    """Build lane-dense bf16 GEMM operands + static layout metadata ONCE.

    Doing this per forward call (host-side Toeplitz loops + ~MB weight
    transfer) would dwarf the kernel itself; cache the result / close over it.
    """
    w1 = np.asarray(params["w1"], np.float32)
    b1 = np.asarray(params["b1"], np.float32)
    w2 = np.asarray(params["w2"], np.float32)
    b2 = np.asarray(params["b2"], np.float32)
    w_out = np.asarray(params["w_out"], np.float32)
    b_out = np.asarray(params["b_out"], np.float32)

    c1, _, f1 = w1.shape
    c2, _, f2 = w2.shape
    t1 = spike_size - f1 + 1                     # 117
    t2 = t1 - f2 + 1                             # 107

    assert LANE % c2 == 0, "banded conv2 layout needs 128 % n_filters[1] == 0"
    tout_band = LANE // c2                       # output time steps per band (16)
    n_bands = pl.cdiv(t2 * c2, LANE)             # 7
    band_stride = tout_band * c1                 # h1-col offset between bands (256)
    band_k = _round_up((tout_band - 1 + f2) * c1, LANE)   # 512 (covers 416 used)

    sp_p = _round_up(spike_size, LANE)                        # 128
    f2_p = n_bands * LANE                                     # 896
    f1_p = max(_round_up(t1 * c1, LANE),
               (n_bands - 1) * band_stride + band_k)          # 2048

    # conv1 as a dense Toeplitz GEMM.
    a1 = np.zeros((sp_p, f1_p), np.float32)
    a1[:spike_size, : t1 * c1] = conv1d_as_gemm(w1, spike_size)
    b1t = np.zeros((1, f1_p), np.float32)
    b1t[0, : t1 * c1] = np.tile(b1, t1)

    # conv2 as a block-banded GEMM.
    a2_full = np.zeros((f1_p, f2_p), np.float32)
    a2_full[: t1 * c1, : t2 * c2] = conv1d_as_gemm(w2, t1)
    a2_band = np.zeros((n_bands, band_k, LANE), np.float32)
    check = a2_full.copy()
    for j in range(n_bands):
        r0, c0 = j * band_stride, j * LANE
        a2_band[j] = a2_full[r0:r0 + band_k, c0:c0 + LANE]
        check[r0:r0 + band_k, c0:c0 + LANE] = 0.0
    # Safety (band-edge off-by-one guard): the bands must capture EVERY nonzero.
    assert not np.any(check), "banded conv2 dropped nonzero Toeplitz entries"
    b2t = np.zeros((1, f2_p), np.float32)
    b2t[0, : t2 * c2] = np.tile(b2, t2)

    # Linear: permute torch flatten order (c*t2 + t) -> time-major (t*c2 + c).
    wo = np.zeros((f2_p, sp_p), np.float32)
    wo[: t2 * c2, :spike_size] = np.transpose(
        w_out.reshape(spike_size, c2, t2), (2, 1, 0)).reshape(t2 * c2, spike_size)
    bo = np.zeros((1, sp_p), np.float32)
    bo[0, :spike_size] = b_out

    # TODO(synk): optional int8 (v5e/v6e) / fp8 (v7x) weight quantization would
    # roughly double MXU rate but needs accuracy validation vs the f32 ref.
    return dict(
        a1=jnp.asarray(a1, jnp.bfloat16), b1=jnp.asarray(b1t),
        a2=jnp.asarray(a2_band, jnp.bfloat16), b2=jnp.asarray(b2t),
        wo=jnp.asarray(wo, jnp.bfloat16), bo=jnp.asarray(bo),
        meta=dict(spike_size=spike_size, sp_p=sp_p, f1_p=f1_p, f2_p=f2_p,
                  n_bands=n_bands, band_k=band_k, band_stride=band_stride),
    )


def init_params(key, n_filters=(16, 8), filter_sizes=(5, 11), spike_size=121):
    """Deterministic synthetic parameters with the shapes nn.Module.__init__ implies."""
    k1, k2, k3, k4, k5, k6 = jax.random.split(key, 6)
    c1, c2 = n_filters
    f1, f2 = filter_sizes
    n_in = c2 * (spike_size - f1 - f2 + 2)            # 8 * 107 = 856
    return dict(
        w1=0.2 * jax.random.normal(k1, (c1, 1, f1), jnp.float32),     # Conv1d(1,16,5)
        b1=0.1 * jax.random.normal(k2, (c1,), jnp.float32),
        w2=0.2 * jax.random.normal(k3, (c2, c1, f2), jnp.float32),    # Conv1d(16,8,11)
        b2=0.1 * jax.random.normal(k4, (c2,), jnp.float32),
        w_out=(1.0 / np.sqrt(n_in))
        * jax.random.normal(k5, (spike_size, n_in), jnp.float32),     # Linear(856,121)
        b_out=0.1 * jax.random.normal(k6, (spike_size,), jnp.float32),
    )


def _pick_tile_n(n):
    """Batch tile: >= 16 rows (natural bf16 sublane tile), capped at 512.

    No forced split for tiny batches: on v7x splitting would only duplicate the
    constant-weight DMA across both TensorCores for almost no compute.  Large
    batches get multiple 512-row steps which the 'parallel' axis shards across
    cores.  (1024-row tiles are also safe under v5e/v6e's 128 MiB VMEM; 512 is
    kept so the same config fits v7x's 64 MiB.)"""
    t = int(pl.next_power_of_2(max(int(n), 1)))
    return max(16, min(t, 512))


# ---------------------------------------------------------------------------
# Jitted forward builder (weights prepared once, closed over)
# ---------------------------------------------------------------------------
def make_denoiser(params, *, spike_size=121, out_dtype=jnp.float32):
    prep = prepare_params(params, spike_size)
    meta = prep["meta"]
    sp_p, f2_p = meta["sp_p"], meta["f2_p"]
    kernel = _make_kernel(meta["n_bands"], meta["band_k"], meta["band_stride"])
    a1, b1, a2, b2, wo, bo = (prep[k] for k in ("a1", "b1", "a2", "b2", "wo", "bo"))

    def const_spec(arr):
        # Grid-invariant operand: always block 0 -> DMA'd once across the grid.
        # (Single-buffering via pipeline_mode would shave another ~1.7 MB of
        # VMEM, but the banded weights are already small enough not to matter.)
        nd = arr.ndim
        return pl.BlockSpec(arr.shape, lambda i, _nd=nd: (0,) * _nd)

    @jax.jit
    def forward(x):
        n = x.shape[0]
        tile_n = _pick_tile_n(n)
        n_tot = _round_up(max(n, tile_n), tile_n)
        # 121 -> 128 lane pad + bf16 cast inside the same jit as the kernel, so
        # it is one fused device op instead of a separately staged HBM pass.
        xp = jnp.zeros((n_tot, sp_p), jnp.bfloat16)
        xp = xp.at[:n, :spike_size].set(x.astype(jnp.bfloat16))

        out = pl.pallas_call(
            kernel,
            out_shape=jax.ShapeDtypeStruct((n_tot, sp_p), out_dtype),
            grid_spec=pltpu.PrefetchScalarGridSpec(
                num_scalar_prefetch=0,
                grid=(n_tot // tile_n,),
                in_specs=[
                    pl.BlockSpec((tile_n, sp_p), lambda i: (i, 0)),   # x tile
                    const_spec(a1), const_spec(b1),
                    const_spec(a2), const_spec(b2),
                    const_spec(wo), const_spec(bo),
                ],
                out_specs=pl.BlockSpec((tile_n, sp_p), lambda i: (i, 0)),
                scratch_shapes=[pltpu.VMEM((tile_n, f2_p), jnp.bfloat16)],
            ),
            compiler_params=pltpu.CompilerParams(
                dimension_semantics=("parallel",),
                # must exceed v5e's 16 MiB scoped default; well under v7x's
                # 64 MiB physical VMEM (footprint at TN=512 is ~12-16 MiB).
                vmem_limit_bytes=48 << 20,
            ),
        )(xp, a1, b1, a2, b2, wo, bo)
        return out[:n, :spike_size]

    return forward


def denoiser_pallas(x, params, *, spike_size=121):
    """One-shot convenience wrapper. For repeated inference prefer
    make_denoiser(params) so the weight preprocessing runs only once."""
    return make_denoiser(params, spike_size=spike_size)(x)


# ---------------------------------------------------------------------------
# Pure-JAX reference (mirrors the PyTorch forward exactly, NCL convs, f32)
# ---------------------------------------------------------------------------
def denoiser_ref(x, params):
    xc = x[:, None, :]                                                # (N, 1, 121)
    h1 = lax.conv_general_dilated(
        xc, params["w1"], (1,), "VALID",
        dimension_numbers=("NCH", "OIH", "NCH"),
        precision=jax.lax.Precision.HIGHEST)
    h1 = jax.nn.relu(h1 + params["b1"][None, :, None])                # (N, 16, 117)
    h2 = lax.conv_general_dilated(
        h1, params["w2"], (1,), "VALID",
        dimension_numbers=("NCH", "OIH", "NCH"),
        precision=jax.lax.Precision.HIGHEST)
    h2 = jax.nn.relu(h2 + params["b2"][None, :, None])                # (N, 8, 107)
    h2f = h2.reshape(h2.shape[0], -1)                                 # torch .view order
    return jnp.dot(h2f, params["w_out"].T,
                   precision=jax.lax.Precision.HIGHEST) + params["b_out"]


if __name__ == "__main__":
    key = jax.random.PRNGKey(0)
    pkey, xkey = jax.random.split(key)
    params = init_params(pkey)

    n, spike_size = 16, 121                    # spike_size fixed by the module
    x = jax.random.normal(xkey, (n, spike_size), jnp.float32)

    fwd = make_denoiser(params, spike_size=spike_size)   # one-time weight prep
    y = jax.block_until_ready(fwd(x))
    _ = jax.block_until_ready(fwd(x))                    # reuses cached weights/compile

    y_ref = denoiser_ref(x, params)
    assert y.shape == (n, spike_size) and y.dtype == jnp.float32
    # bf16 operands/activations with f32 accumulation -> ~1e-3 rms error vs f32 ref.
    np.testing.assert_allclose(np.asarray(y), np.asarray(y_ref), rtol=2e-2, atol=2e-2)
    print("KERNEL_OK")
</pallas_src>

<mosaic_0001>
module attributes {stable_mosaic.version = 11 : i64} {
  func.func @kernel(%arg0: i32, %arg1: memref<16x128xbf16, #tpu.memory_space<vmem>>, %arg2: memref<128x2048xbf16, #tpu.memory_space<vmem>>, %arg3: memref<1x2048xf32, #tpu.memory_space<vmem>>, %arg4: memref<7x512x128xbf16, #tpu.memory_space<vmem>>, %arg5: memref<1x896xf32, #tpu.memory_space<vmem>>, %arg6: memref<896x128xbf16, #tpu.memory_space<vmem>>, %arg7: memref<1x128xf32, #tpu.memory_space<vmem>>, %arg8: memref<16x128xf32, #tpu.memory_space<vmem>>, %arg9: memref<16x896xbf16, #tpu.memory_space<vmem>>) attributes {dimension_semantics = [#tpu.dimension_semantics<parallel>], iteration_bounds = array<i64: 1>, scalar_prefetch = 0 : i64, scratch_operands = 1 : i64, tpu.core_type = #tpu.core_type<tc>, window_params = [{transform_indices = @transform_0, window_bounds = array<i64: 16, 128>}, {pipeline_mode = #tpu.pipeline_mode<synchronous>, transform_indices = @transform_1, window_bounds = array<i64: 128, 2048>}, {pipeline_mode = #tpu.pipeline_mode<synchronous>, transform_indices = @transform_2, window_bounds = array<i64: 1, 2048>}, {pipeline_mode = #tpu.pipeline_mode<synchronous>, transform_indices = @transform_3, window_bounds = array<i64: 7, 512, 128>}, {pipeline_mode = #tpu.pipeline_mode<synchronous>, transform_indices = @transform_4, window_bounds = array<i64: 1, 896>}, {pipeline_mode = #tpu.pipeline_mode<synchronous>, transform_indices = @transform_5, window_bounds = array<i64: 896, 128>}, {pipeline_mode = #tpu.pipeline_mode<synchronous>, transform_indices = @transform_6, window_bounds = array<i64: 1, 128>}, {transform_indices = @transform_7, window_bounds = array<i64: 16, 128>}]} {
    %c0 = arith.constant 0 : index
    %c0_0 = arith.constant 0 : index
    %0 = vector.load %arg1[%c0, %c0_0] : memref<16x128xbf16, #tpu.memory_space<vmem>>, vector<16x128xbf16>
    %c0_1 = arith.constant 0 : index
    %c0_2 = arith.constant 0 : index
    %1 = vector.load %arg2[%c0_1, %c0_2] : memref<128x2048xbf16, #tpu.memory_space<vmem>>, vector<128x2048xbf16>
    %cst = arith.constant dense<0.000000e+00> : vector<16x2048xf32>
    %2 = tpu.matmul %0, %1, %cst {dimension_numbers = #tpu.dot_dimension_numbers<[1], [0], [0], [1], [0, 0, 1, 1], [], []>} : vector<16x128xbf16>, vector<128x2048xbf16>, vector<16x2048xf32> -> vector<16x2048xf32>
    %c0_3 = arith.constant 0 : index
    %c0_4 = arith.constant 0 : index
    %3 = vector.load %arg3[%c0_3, %c0_4] : memref<1x2048xf32, #tpu.memory_space<vmem>>, vector<1x2048xf32>
    %4 = vector.broadcast %3 : vector<1x2048xf32> to vector<16x2048xf32>
    %5 = arith.addf %2, %4 : vector<16x2048xf32>
    %cst_5 = arith.constant 0.000000e+00 : f32
    %6 = vector.broadcast %cst_5 : f32 to vector<16x2048xf32>
    %7 = arith.maximumf %5, %6 : vector<16x2048xf32>
    %8 = arith.truncf %7 : vector<16x2048xf32> to vector<16x2048xbf16>
    %9 = vector.extract_strided_slice %8 {offsets = [0, 0], sizes = [16, 512], strides = [1, 1]} : vector<16x2048xbf16> to vector<16x512xbf16>
    %c0_6 = arith.constant 0 : index
    %c0_7 = arith.constant 0 : index
    %c0_8 = arith.constant 0 : index
    %10 = vector.load %arg4[%c0_6, %c0_7, %c0_8] : memref<7x512x128xbf16, #tpu.memory_space<vmem>>, vector<1x512x128xbf16>
    %11 = vector.shape_cast %10 : vector<1x512x128xbf16> to vector<512x128xbf16>
    %cst_9 = arith.constant dense<0.000000e+00> : vector<16x128xf32>
    %12 = tpu.matmul %9, %11, %cst_9 {dimension_numbers = #tpu.dot_dimension_numbers<[1], [0], [0], [1], [0, 0, 1, 1], [], []>} : vector<16x512xbf16>, vector<512x128xbf16>, vector<16x128xf32> -> vector<16x128xf32>
    %c0_10 = arith.constant 0 : index
    %c0_11 = arith.constant 0 : index
    %13 = vector.load %arg5[%c0_10, %c0_11] : memref<1x896xf32, #tpu.memory_space<vmem>>, vector<1x128xf32>
    %14 = vector.broadcast %13 : vector<1x128xf32> to vector<16x128xf32>
    %15 = arith.addf %12, %14 : vector<16x128xf32>
    %cst_12 = arith.constant 0.000000e+00 : f32
    %16 = vector.broadcast %cst_12 : f32 to vector<16x128xf32>
    %17 = arith.maximumf %15, %16 : vector<16x128xf32>
    %18 = arith.truncf %17 : vector<16x128xf32> to vector<16x128xbf16>
    %c0_13 = arith.constant 0 : index
    %c0_14 = arith.constant 0 : index
    %19 = vector.load %arg9[%c0_13, %c0_14] : memref<16x896xbf16, #tpu.memory_space<vmem>>, vector<16x128xbf16>
    tpu.vector_store %arg9[%c0_13, %c0_14], %18 {strides = array<i32>} : memref<16x896xbf16, #tpu.memory_space<vmem>>, vector<16x128xbf16>,
    %20 = vector.extract_strided_slice %8 {offsets = [0, 256], sizes = [16, 512], strides = [1, 1]} : vector<16x2048xbf16> to vector<16x512xbf16>
    %c1 = arith.constant 1 : index
    %c0_15 = arith.constant 0 : index
    %c0_16 = arith.constant 0 : index
    %21 = vector.load %arg4[%c1, %c0_15, %c0_16] : memref<7x512x128xbf16, #tpu.memory_space<vmem>>, vector<1x512x128xbf16>
    %22 = vector.shape_cast %21 : vector<1x512x128xbf16> to vector<512x128xbf16>
    %cst_17 = arith.constant dense<0.000000e+00> : vector<16x128xf32>
    %23 = tpu.matmul %20, %22, %cst_17 {dimension_numbers = #tpu.dot_dimension_numbers<[1], [0], [0], [1], [0, 0, 1, 1], [], []>} : vector<16x512xbf16>, vector<512x128xbf16>, vector<16x128xf32> -> vector<16x128xf32>
    %c0_18 = arith.constant 0 : index
    %c128 = arith.constant 128 : index
    %24 = vector.load %arg5[%c0_18, %c128] : memref<1x896xf32, #tpu.memory_space<vmem>>, vector<1x128xf32>
    %25 = vector.broadcast %24 : vector<1x128xf32> to vector<16x128xf32>
    %26 = arith.addf %23, %25 : vector<16x128xf32>
    %cst_19 = arith.constant 0.000000e+00 : f32
    %27 = vector.broadcast %cst_19 : f32 to vector<16x128xf32>
    %28 = arith.maximumf %26, %27 : vector<16x128xf32>
    %29 = arith.truncf %28 : vector<16x128xf32> to vector<16x128xbf16>
    %c0_20 = arith.constant 0 : index
    %c128_21 = arith.constant 128 : index
    %30 = vector.load %arg9[%c0_20, %c128_21] : memref<16x896xbf16, #tpu.memory_space<vmem>>, vector<16x128xbf16>
    tpu.vector_store %arg9[%c0_20, %c128_21], %29 {strides = array<i32>} : memref<16x896xbf16, #tpu.memory_space<vmem>>, vector<16x128xbf16>,
    %31 = vector.extract_strided_slice %8 {offsets = [0, 512], sizes = [16, 512], strides = [1, 1]} : vector<16x2048xbf16> to vector<16x512xbf16>
    %c2 = arith.constant 2 : index
    %c0_22 = arith.constant 0 : index
    %c0_23 = arith.constant 0 : index
    %32 = vector.load %arg4[%c2, %c0_22, %c0_23] : memref<7x512x128xbf16, #tpu.memory_space<vmem>>, vector<1x512x128xbf16>
    %33 = vector.shape_cast %32 : vector<1x512x128xbf16> to vector<512x128xbf16>
    %cst_24 = arith.constant dense<0.000000e+00> : vector<16x128xf32>
    %34 = tpu.matmul %31, %33, %cst_24 {dimension_numbers = #tpu.dot_dimension_numbers<[1], [0], [0], [1], [0, 0, 1, 1], [], []>} : vector<16x512xbf16>, vector<512x128xbf16>, vector<16x128xf32> -> vector<16x128xf32>
    %c0_25 = arith.constant 0 : index
    %c256 = arith.constant 256 : index
    %35 = vector.load %arg5[%c0_25, %c256] : memref<1x896xf32, #tpu.memory_space<vmem>>, vector<1x128xf32>
    %36 = vector.broadcast %35 : vector<1x128xf32> to vector<16x128xf32>
    %37 = arith.addf %34, %36 : vector<16x128xf32>
    %cst_26 = arith.constant 0.000000e+00 : f32
    %38 = vector.broadcast %cst_26 : f32 to vector<16x128xf32>
    %39 = arith.maximumf %37, %38 : vector<16x128xf32>
    %40 = arith.truncf %39 : vector<16x128xf32> to vector<16x128xbf16>
    %c0_27 = arith.constant 0 : index
    %c256_28 = arith.constant 256 : index
    %41 = vector.load %arg9[%c0_27, %c256_28] : memref<16x896xbf16, #tpu.memory_space<vmem>>, vector<16x128xbf16>
    tpu.vector_store %arg9[%c0_27, %c256_28], %40 {strides = array<i32>} : memref<16x896xbf16, #tpu.memory_space<vmem>>, vector<16x128xbf16>,
    %42 = vector.extract_strided_slice %8 {offsets = [0, 768], sizes = [16, 512], strides = [1, 1]} : vector<16x2048xbf16> to vector<16x512xbf16>
    %c3 = arith.constant 3 : index
    %c0_29 = arith.constant 0 : index
    %c0_30 = arith.constant 0 : index
    %43 = vector.load %arg4[%c3, %c0_29, %c0_30] : memref<7x512x128xbf16, #tpu.memory_space<vmem>>, vector<1x512x128xbf16>
    %44 = vector.shape_cast %43 : vector<1x512x128xbf16> to vector<512x128xbf16>
    %cst_31 = arith.constant dense<0.000000e+00> : vector<16x128xf32>
    %45 = tpu.matmul %42, %44, %cst_31 {dimension_numbers = #tpu.dot_dimension_numbers<[1], [0], [0], [1], [0, 0, 1, 1], [], []>} : vector<16x512xbf16>, vector<512x128xbf16>, vector<16x128xf32> -> vector<16x128xf32>
    %c0_32 = arith.constant 0 : index
    %c384 = arith.constant 384 : index
    %46 = vector.load %arg5[%c0_32, %c384] : memref<1x896xf32, #tpu.memory_space<vmem>>, vector<1x128xf32>
    %47 = vector.broadcast %46 : vector<1x128xf32> to vector<16x128xf32>
    %48 = arith.addf %45, %47 : vector<16x128xf32>
    %cst_33 = arith.constant 0.000000e+00 : f32
    %49 = vector.broadcast %cst_33 : f32 to vector<16x128xf32>
    %50 = arith.maximumf %48, %49 : vector<16x128xf32>
    %51 = arith.truncf %50 : vector<16x128xf32> to vector<16x128xbf16>
    %c0_34 = arith.constant 0 : index
    %c384_35 = arith.constant 384 : index
    %52 = vector.load %arg9[%c0_34, %c384_35] : memref<16x896xbf16, #tpu.memory_space<vmem>>, vector<16x128xbf16>
    tpu.vector_store %arg9[%c0_34, %c384_35], %51 {strides = array<i32>} : memref<16x896xbf16, #tpu.memory_space<vmem>>, vector<16x128xbf16>,
    %53 = vector.extract_strided_slice %8 {offsets = [0, 1024], sizes = [16, 512], strides = [1, 1]} : vector<16x2048xbf16> to vector<16x512xbf16>
    %c4 = arith.constant 4 : index
    %c0_36 = arith.constant 0 : index
    %c0_37 = arith.constant 0 : index
    %54 = vector.load %arg4[%c4, %c0_36, %c0_37] : memref<7x512x128xbf16, #tpu.memory_space<vmem>>, vector<1x512x128xbf16>
    %55 = vector.shape_cast %54 : vector<1x512x128xbf16> to vector<512x128xbf16>
    %cst_38 = arith.constant dense<0.000000e+00> : vector<16x128xf32>
    %56 = tpu.matmul %53, %55, %cst_38 {dimension_numbers = #tpu.dot_dimension_numbers<[1], [0], [0], [1], [0, 0, 1, 1], [], []>} : vector<16x512xbf16>, vector<512x128xbf16>, vector<16x128xf32> -> vector<16x128xf32>
    %c0_39 = arith.constant 0 : index
    %c512 = arith.constant 512 : index
    %57 = vector.load %arg5[%c0_39, %c512] : memref<1x896xf32, #tpu.memory_space<vmem>>, vector<1x128xf32>
    %58 = vector.broadcast %57 : vector<1x128xf32> to vector<16x128xf32>
    %59 = arith.addf %56, %58 : vector<16x128xf32>
    %cst_40 = arith.constant 0.000000e+00 : f32
    %60 = vector.broadcast %cst_40 : f32 to vector<16x128xf32>
    %61 = arith.maximumf %59, %60 : vector<16x128xf32>
    %62 = arith.truncf %61 : vector<16x128xf32> to vector<16x128xbf16>
    %c0_41 = arith.constant 0 : index
    %c512_42 = arith.constant 512 : index
    %63 = vector.load %arg9[%c0_41, %c512_42] : memref<16x896xbf16, #tpu.memory_space<vmem>>, vector<16x128xbf16>
    tpu.vector_store %arg9[%c0_41, %c512_42], %62 {strides = array<i32>} : memref<16x896xbf16, #tpu.memory_space<vmem>>, vector<16x128xbf16>,
    %64 = vector.extract_strided_slice %8 {offsets = [0, 1280], sizes = [16, 512], strides = [1, 1]} : vector<16x2048xbf16> to vector<16x512xbf16>
    %c5 = arith.constant 5 : index
    %c0_43 = arith.constant 0 : index
    %c0_44 = arith.constant 0 : index
    %65 = vector.load %arg4[%c5, %c0_43, %c0_44] : memref<7x512x128xbf16, #tpu.memory_space<vmem>>, vector<1x512x128xbf16>
    %66 = vector.shape_cast %65 : vector<1x512x128xbf16> to vector<512x128xbf16>
    %cst_45 = arith.constant dense<0.000000e+00> : vector<16x128xf32>
    %67 = tpu.matmul %64, %66, %cst_45 {dimension_numbers = #tpu.dot_dimension_numbers<[1], [0], [0], [1], [0, 0, 1, 1], [], []>} : vector<16x512xbf16>, vector<512x128xbf16>, vector<16x128xf32> -> vector<16x128xf32>
    %c0_46 = arith.constant 0 : index
    %c640 = arith.constant 640 : index
    %68 = vector.load %arg5[%c0_46, %c640] : memref<1x896xf32, #tpu.memory_space<vmem>>, vector<1x128xf32>
    %69 = vector.broadcast %68 : vector<1x128xf32> to vector<16x128xf32>
    %70 = arith.addf %67, %69 : vector<16x128xf32>
    %cst_47 = arith.constant 0.000000e+00 : f32
    %71 = vector.broadcast %cst_47 : f32 to vector<16x128xf32>
    %72 = arith.maximumf %70, %71 : vector<16x128xf32>
    %73 = arith.truncf %72 : vector<16x128xf32> to vector<16x128xbf16>
    %c0_48 = arith.constant 0 : index
    %c640_49 = arith.constant 640 : index
    %74 = vector.load %arg9[%c0_48, %c640_49] : memref<16x896xbf16, #tpu.memory_space<vmem>>, vector<16x128xbf16>
    tpu.vector_store %arg9[%c0_48, %c640_49], %73 {strides = array<i32>} : memref<16x896xbf16, #tpu.memory_space<vmem>>, vector<16x128xbf16>,
    %75 = vector.extract_strided_slice %8 {offsets = [0, 1536], sizes = [16, 512], strides = [1, 1]} : vector<16x2048xbf16> to vector<16x512xbf16>
    %c6 = arith.constant 6 : index
    %c0_50 = arith.constant 0 : index
    %c0_51 = arith.constant 0 : index
    %76 = vector.load %arg4[%c6, %c0_50, %c0_51] : memref<7x512x128xbf16, #tpu.memory_space<vmem>>, vector<1x512x128xbf16>
    %77 = vector.shape_cast %76 : vector<1x512x128xbf16> to vector<512x128xbf16>
    %cst_52 = arith.constant dense<0.000000e+00> : vector<16x128xf32>
    %78 = tpu.matmul %75, %77, %cst_52 {dimension_numbers = #tpu.dot_dimension_numbers<[1], [0], [0], [1], [0, 0, 1, 1], [], []>} : vector<16x512xbf16>, vector<512x128xbf16>, vector<16x128xf32> -> vector<16x128xf32>
    %c0_53 = arith.constant 0 : index
    %c768 = arith.constant 768 : index
    %79 = vector.load %arg5[%c0_53, %c768] : memref<1x896xf32, #tpu.memory_space<vmem>>, vector<1x128xf32>
    %80 = vector.broadcast %79 : vector<1x128xf32> to vector<16x128xf32>
    %81 = arith.addf %78, %80 : vector<16x128xf32>
    %cst_54 = arith.constant 0.000000e+00 : f32
    %82 = vector.broadcast %cst_54 : f32 to vector<16x128xf32>
    %83 = arith.maximumf %81, %82 : vector<16x128xf32>
    %84 = arith.truncf %83 : vector<16x128xf32> to vector<16x128xbf16>
    %c0_55 = arith.constant 0 : index
    %c768_56 = arith.constant 768 : index
    %85 = vector.load %arg9[%c0_55, %c768_56] : memref<16x896xbf16, #tpu.memory_space<vmem>>, vector<16x128xbf16>
    tpu.vector_store %arg9[%c0_55, %c768_56], %84 {strides = array<i32>} : memref<16x896xbf16, #tpu.memory_space<vmem>>, vector<16x128xbf16>,
    %c0_57 = arith.constant 0 : index
    %c0_58 = arith.constant 0 : index
    %86 = vector.load %arg9[%c0_57, %c0_58] : memref<16x896xbf16, #tpu.memory_space<vmem>>, vector<16x896xbf16>
    %c0_59 = arith.constant 0 : index
    %c0_60 = arith.constant 0 : index
    %87 = vector.load %arg6[%c0_59, %c0_60] : memref<896x128xbf16, #tpu.memory_space<vmem>>, vector<896x128xbf16>
    %cst_61 = arith.constant dense<0.000000e+00> : vector<16x128xf32>
    %88 = tpu.matmul %86, %87, %cst_61 {dimension_numbers = #tpu.dot_dimension_numbers<[1], [0], [0], [1], [0, 0, 1, 1], [], []>} : vector<16x896xbf16>, vector<896x128xbf16>, vector<16x128xf32> -> vector<16x128xf32>
    %c0_62 = arith.constant 0 : index
    %c0_63 = arith.constant 0 : index
    %89 = vector.load %arg7[%c0_62, %c0_63] : memref<1x128xf32, #tpu.memory_space<vmem>>, vector<1x128xf32>
    %90 = vector.broadcast %89 : vector<1x128xf32> to vector<16x128xf32>
    %91 = arith.addf %88, %90 : vector<16x128xf32>
    %c0_64 = arith.constant 0 : index
    %c0_65 = arith.constant 0 : index
    %92 = vector.load %arg8[%c0_64, %c0_65] : memref<16x128xf32, #tpu.memory_space<vmem>>, vector<16x128xf32>
    tpu.vector_store %arg8[%c0_64, %c0_65], %91 {strides = array<i32>} : memref<16x128xf32, #tpu.memory_space<vmem>>, vector<16x128xf32>,
    return
  }
  func.func @transform_0(%arg0: i32) -> (i32, i32) {
    %c0_i32 = arith.constant 0 : i32
    %c0_i32_0 = arith.constant 0 : i32
    return %arg0, %c0_i32 : i32, i32
  }
  func.func @transform_1(%arg0: i32) -> (i32, i32) {
    %c0_i32 = arith.constant 0 : i32
    %c0_i32_0 = arith.constant 0 : i32
    %c0_i32_1 = arith.constant 0 : i32
    return %c0_i32, %c0_i32_0 : i32, i32
  }
  func.func @transform_2(%arg0: i32) -> (i32, i32) {
    %c0_i32 = arith.constant 0 : i32
    %c0_i32_0 = arith.constant 0 : i32
    %c0_i32_1 = arith.constant 0 : i32
    return %c0_i32, %c0_i32_0 : i32, i32
  }
  func.func @transform_3(%arg0: i32) -> (i32, i32, i32) {
    %c0_i32 = arith.constant 0 : i32
    %c0_i32_0 = arith.constant 0 : i32
    %c0_i32_1 = arith.constant 0 : i32
    %c0_i32_2 = arith.constant 0 : i32
    return %c0_i32, %c0_i32_0, %c0_i32_1 : i32, i32, i32
  }
  func.func @transform_4(%arg0: i32) -> (i32, i32) {
    %c0_i32 = arith.constant 0 : i32
    %c0_i32_0 = arith.constant 0 : i32
    %c0_i32_1 = arith.constant 0 : i32
    return %c0_i32, %c0_i32_0 : i32, i32
  }
  func.func @transform_5(%arg0: i32) -> (i32, i32) {
    %c0_i32 = arith.constant 0 : i32
    %c0_i32_0 = arith.constant 0 : i32
    %c0_i32_1 = arith.constant 0 : i32
    return %c0_i32, %c0_i32_0 : i32, i32
  }
  func.func @transform_6(%arg0: i32) -> (i32, i32) {
    %c0_i32 = arith.constant 0 : i32
    %c0_i32_0 = arith.constant 0 : i32
    %c0_i32_1 = arith.constant 0 : i32
    return %c0_i32, %c0_i32_0 : i32, i32
  }
  func.func @transform_7(%arg0: i32) -> (i32, i32) {
    %c0_i32 = arith.constant 0 : i32
    %c0_i32_0 = arith.constant 0 : i32
    return %arg0, %c0_i32 : i32, i32
  }
}

</mosaic_0001>

<llo_original>
// kernel: forward.1
$region0: #{forward.1}
  #allocation0 [shape = 'u32[]', space=smem, size = 0x4, offset = 0x4, fixed_abs, tag = 'smem constant byte address 0x4 - core index']
  #allocation1 [shape = 'u32[144,128]{1,0:T(1,128)}', space=vmem, size = 0x12000, scoped, tag = 'internal scratch']
  #allocation2 [shape = 'bf16[16,896]{1,0:T(8,128)(2,1)}', space=vmem, size = 0x7000, scoped, tag = 'scratch operand']
  %s0 = inlined_call_operand.vmem [shape: bf16[16,128], index: 0, kind: input, shape index: {}]
  %s1 = inlined_call_operand.hbm [shape: bf16[128,2048], index: 1, kind: input, shape index: {}]
  %s2 = inlined_call_operand.vmem [shape: f32[1,2048], index: 2, kind: input, shape index: {}]
  %s3 = inlined_call_operand.hbm [shape: bf16[7,512,128], index: 3, kind: input, shape index: {}]
  %s4 = inlined_call_operand.vmem [shape: f32[1,896], index: 4, kind: input, shape index: {}]
  %s5 = inlined_call_operand.hbm [shape: bf16[896,128], index: 5, kind: input, shape index: {}]
  %s6 = inlined_call_operand.vmem [shape: f32[1,128], index: 6, kind: input, shape index: {}]
  %s7 = inlined_call_operand.hbm [shape: f32[16,128], index: 7, kind: output, shape index: {}]
  %s8 = sld [smem:[#allocation0]]
  $region50: #{forward.1} parent=0
    _
  %s10 = ssub.s32 1, %s8
  %s11 = scalar_select 0, %s10, %s8
  $region1: #{forward.1} parent=0
    #allocation3 [shape = 'u8[524288]{0}', space=vmem, size = 0x80000, scoped, tag = 'input window, operand 1, single buffered']
    #allocation4 [shape = 's32[1]{0}', space=sflag, size = 0x4, scoped, tag = 'scoped memory for forward.1']
    #allocation5 [shape = 's32[1]{0}', space=sflag, size = 0x4, scoped, tag = 'scoped memory for forward.1']
    #allocation6 [shape = 'u8[917504]{0}', space=vmem, size = 0xe0000, scoped, tag = 'input window, operand 3, single buffered']
    #allocation7 [shape = 's32[1]{0}', space=sflag, size = 0x4, scoped, tag = 'scoped memory for forward.1']
    #allocation8 [shape = 'u8[229376]{0}', space=vmem, size = 0x38000, scoped, tag = 'input window, operand 5, single buffered']
    #allocation9 [shape = 'u8[8192]{0}', space=vmem, size = 0x2000, scoped, tag = 'output window, operand 0, single buffered']
    %12 = vsyncpa [#allocation4], 0
    %13 = vsyncpa [#allocation7], 0
    %14 = vsyncpa [#allocation5], 0
    // Predicated region
    $region2: #{forward.1} parent=1 // pred_check
      _
    $region3: #{forward.1} parent=1 // pred_check_branch
      %16 = sbr.rel (0) target = $region5
    $region4: #{forward.1} parent=1 // pred_region
      _
    $region5: #{forward.1} parent=1 // pred_fallthru
      _
    // Predicated region
    $region6: #{forward.1} parent=1 // pred_check
      _
    $region7: #{forward.1} parent=1 // pred_check_branch
      %18 = sbr.rel (0) target = $region9
    $region8: #{forward.1} parent=1 // pred_region
      %s20 = ssub.s32 16384, 16384
      %21 = vsyncadd [#allocation4], %s20
      %s22 = sshll.u32 [#allocation3], 4
      %s23 = int_to_ptr.vmem [resolvable:$true] %s22
      %28 = dma.hbm_to_vmem [thread:$0]  %s1, 16384, %s23, [#allocation4], 1024, 1024, 64
    $region9: #{forward.1} parent=1 // pred_fallthru
      _
    // Predicated region
    $region10: #{forward.1} parent=1 // pred_check
      _
    $region11: #{forward.1} parent=1 // pred_check_branch
      %30 = sbr.rel (0) target = $region13
    $region12: #{forward.1} parent=1 // pred_region
      _
    $region13: #{forward.1} parent=1 // pred_fallthru
      _
    // Predicated region
    $region14: #{forward.1} parent=1 // pred_check
      _
    $region15: #{forward.1} parent=1 // pred_check_branch
      %32 = sbr.rel (0) target = $region17
    $region16: #{forward.1} parent=1 // pred_region
      %s34 = ssub.s32 28672, 28672
      %35 = vsyncadd [#allocation7], %s34
      %s36 = sshll.u32 [#allocation6], 4
      %s37 = int_to_ptr.vmem [resolvable:$true] %s36
      %42 = dma.hbm_to_vmem [thread:$0]  %s3, 28672, %s37, [#allocation7], 64, 64, 4
    $region17: #{forward.1} parent=1 // pred_fallthru
      _
    // Predicated region
    $region18: #{forward.1} parent=1 // pred_check
      _
    $region19: #{forward.1} parent=1 // pred_check_branch
      %44 = sbr.rel (0) target = $region21
    $region20: #{forward.1} parent=1 // pred_region
      _
    $region21: #{forward.1} parent=1 // pred_fallthru
      _
    // Predicated region
    $region22: #{forward.1} parent=1 // pred_check
      _
    $region23: #{forward.1} parent=1 // pred_check_branch
      %46 = sbr.rel (0) target = $region25
    $region24: #{forward.1} parent=1 // pred_region
      %s48 = ssub.s32 7168, 7168
      %49 = vsyncadd [#allocation7], %s48
      %s50 = sshll.u32 [#allocation8], 4
      %s51 = int_to_ptr.vmem [resolvable:$true] %s50
      %56 = dma.hbm_to_vmem [thread:$0]  %s5, 7168, %s51, [#allocation7], 64, 64, 4
    $region25: #{forward.1} parent=1 // pred_fallthru
      _
    // Predicated region
    $region26: #{forward.1} parent=1 // pred_check
      _
    $region27: #{forward.1} parent=1 // pred_check_branch
      %58 = sbr.rel (0) target = $region29
    $region28: #{forward.1} parent=1 // pred_region
      _
    $region29: #{forward.1} parent=1 // pred_fallthru
      _
    // Predicated region
    $region30: #{forward.1} parent=1 // pred_check
      _
    $region31: #{forward.1} parent=1 // pred_check_branch
      %60 = sbr.rel (0) target = $region33
    $region32: #{forward.1} parent=1 // pred_region
      %61 = dma.done [#allocation4], 16384
    $region33: #{forward.1} parent=1 // pred_fallthru
      _
    // Predicated region
    $region34: #{forward.1} parent=1 // pred_check
      _
    $region35: #{forward.1} parent=1 // pred_check_branch
      %63 = sbr.rel (0) target = $region37
    $region36: #{forward.1} parent=1 // pred_region
      %64 = dma.done [#allocation7], 28672
    $region37: #{forward.1} parent=1 // pred_fallthru
      _
    // Predicated region
    $region38: #{forward.1} parent=1 // pred_check
      _
    $region39: #{forward.1} parent=1 // pred_check_branch
      %66 = sbr.rel (0) target = $region41
    $region40: #{forward.1} parent=1 // pred_region
      %67 = dma.done [#allocation7], 7168
    $region41: #{forward.1} parent=1 // pred_fallthru
      _
    %v69 = vld [vmem:[%s0] sm:$0xf]
    %v70 = vld [vmem:[%s0 + $0x4] sm:$0xf]
    %v71 = vld [vmem:[#allocation3] sm:$0xff]
    %v72 = vld [vmem:[#allocation3 + $0x8] sm:$0xff]
    %v73 = vld [vmem:[#allocation3 + $0x10] sm:$0xff]
    %v74 = vld [vmem:[#allocation3 + $0x18] sm:$0xff]
    %v75 = vld [vmem:[#allocation3 + $0x20] sm:$0xff]
    %v76 = vld [vmem:[#allocation3 + $0x28] sm:$0xff]
    %v77 = vld [vmem:[#allocation3 + $0x30] sm:$0xff]
    %v78 = vld [vmem:[#allocation3 + $0x38] sm:$0xff]
    %v79 = vld [vmem:[#allocation3 + $0x40] sm:$0xff]
    %v80 = vld [vmem:[#allocation3 + $0x48] sm:$0xff]
    %v81 = vld [vmem:[#allocation3 + $0x50] sm:$0xff]
    %v82 = vld [vmem:[#allocation3 + $0x58] sm:$0xff]
    %v83 = vld [vmem:[#allocation3 + $0x60] sm:$0xff]
    %v84 = vld [vmem:[#allocation3 + $0x68] sm:$0xff]
    %v85 = vld [vmem:[#allocation3 + $0x70] sm:$0xff]
    %v86 = vld [vmem:[#allocation3 + $0x78] sm:$0xff]
    %v87 = vld [vmem:[#allocation3 + $0x80] sm:$0xff]
    %v88 = vld [vmem:[#allocation3 + $0x88] sm:$0xff]
    %v89 = vld [vmem:[#allocation3 + $0x90] sm:$0xff]
    %v90 = vld [vmem:[#allocation3 + $0x98] sm:$0xff]
    %v91 = vld [vmem:[#allocation3 + $0xa0] sm:$0xff]
    %v92 = vld [vmem:[#allocation3 + $0xa8] sm:$0xff]
    %v93 = vld [vmem:[#allocation3 + $0xb0] sm:$0xff]
    %v94 = vld [vmem:[#allocation3 + $0xb8] sm:$0xff]
    %v95 = vld [vmem:[#allocation3 + $0xc0] sm:$0xff]
    %v96 = vld [vmem:[#allocation3 + $0xc8] sm:$0xff]
    %v97 = vld [vmem:[#allocation3 + $0xd0] sm:$0xff]
    %v98 = vld [vmem:[#allocation3 + $0xd8] sm:$0xff]
    %v99 = vld [vmem:[#allocation3 + $0xe0] sm:$0xff]
    %v100 = vld [vmem:[#allocation3 + $0xe8] sm:$0xff]
    %v101 = vld [vmem:[#allocation3 + $0xf0] sm:$0xff]
    %v102 = vld [vmem:[#allocation3 + $0xf8] sm:$0xff]
    %v103 = vld [vmem:[#allocation3 + $0x100] sm:$0xff]
    %v104 = vld [vmem:[#allocation3 + $0x108] sm:$0xff]
    %v105 = vld [vmem:[#allocation3 + $0x110] sm:$0xff]
    %v106 = vld [vmem:[#allocation3 + $0x118] sm:$0xff]
    %v107 = vld [vmem:[#allocation3 + $0x120] sm:$0xff]
    %v108 = vld [vmem:[#allocation3 + $0x128] sm:$0xff]
    %v109 = vld [vmem:[#allocation3 + $0x130] sm:$0xff]
    %v110 = vld [vmem:[#allocation3 + $0x138] sm:$0xff]
    %v111 = vld [vmem:[#allocation3 + $0x140] sm:$0xff]
    %v112 = vld [vmem:[#allocation3 + $0x148] sm:$0xff]
    %v113 = vld [vmem:[#allocation3 + $0x150] sm:$0xff]
    %v114 = vld [vmem:[#allocation3 + $0x158] sm:$0xff]
    %v115 = vld [vmem:[#allocation3 + $0x160] sm:$0xff]
    %v116 = vld [vmem:[#allocation3 + $0x168] sm:$0xff]
    %v117 = vld [vmem:[#allocation3 + $0x170] sm:$0xff]
    %v118 = vld [vmem:[#allocation3 + $0x178] sm:$0xff]
    %v119 = vld [vmem:[#allocation3 + $0x180] sm:$0xff]
    %v120 = vld [vmem:[#allocation3 + $0x188] sm:$0xff]
    %v121 = vld [vmem:[#allocation3 + $0x190] sm:$0xff]
    %v122 = vld [vmem:[#allocation3 + $0x198] sm:$0xff]
    %v123 = vld [vmem:[#allocation3 + $0x1a0] sm:$0xff]
    %v124 = vld [vmem:[#allocation3 + $0x1a8] sm:$0xff]
    %v125 = vld [vmem:[#allocation3 + $0x1b0] sm:$0xff]
    %v126 = vld [vmem:[#allocation3 + $0x1b8] sm:$0xff]
    %v127 = vld [vmem:[#allocation3 + $0x1c0] sm:$0xff]
    %v128 = vld [vmem:[#allocation3 + $0x1c8] sm:$0xff]
    %v129 = vld [vmem:[#allocation3 + $0x1d0] sm:$0xff]
    %v130 = vld [vmem:[#allocation3 + $0x1d8] sm:$0xff]
    %v131 = vld [vmem:[#allocation3 + $0x1e0] sm:$0xff]
    %v132 = vld [vmem:[#allocation3 + $0x1e8] sm:$0xff]
    %v133 = vld [vmem:[#allocation3 + $0x1f0] sm:$0xff]
    %v134 = vld [vmem:[#allocation3 + $0x1f8] sm:$0xff]
    %v135 = vld [vmem:[#allocation3 + $0x200] sm:$0xff]
    %v136 = vld [vmem:[#allocation3 + $0x208] sm:$0xff]
    %v137 = vld [vmem:[#allocation3 + $0x210] sm:$0xff]
    %v138 = vld [vmem:[#allocation3 + $0x218] sm:$0xff]
    %v139 = vld [vmem:[#allocation3 + $0x220] sm:$0xff]
    %v140 = vld [vmem:[#allocation3 + $0x228] sm:$0xff]
    %v141 = vld [vmem:[#allocation3 + $0x230] sm:$0xff]
    %v142 = vld [vmem:[#allocation3 + $0x238] sm:$0xff]
    %v143 = vld [vmem:[#allocation3 + $0x240] sm:$0xff]
    %v144 = vld [vmem:[#allocation3 + $0x248] sm:$0xff]
    %v145 = vld [vmem:[#allocation3 + $0x250] sm:$0xff]
    %v146 = vld [vmem:[#allocation3 + $0x258] sm:$0xff]
    %v147 = vld [vmem:[#allocation3 + $0x260] sm:$0xff]
    %v148 = vld [vmem:[#allocation3 + $0x268] sm:$0xff]
    %v149 = vld [vmem:[#allocation3 + $0x270] sm:$0xff]
    %v150 = vld [vmem:[#allocation3 + $0x278] sm:$0xff]
    %v151 = vld [vmem:[#allocation3 + $0x280] sm:$0xff]
    %v152 = vld [vmem:[#allocation3 + $0x288] sm:$0xff]
    %v153 = vld [vmem:[#allocation3 + $0x290] sm:$0xff]
    %v154 = vld [vmem:[#allocation3 + $0x298] sm:$0xff]
    %v155 = vld [vmem:[#allocation3 + $0x2a0] sm:$0xff]
    %v156 = vld [vmem:[#allocation3 + $0x2a8] sm:$0xff]
    %v157 = vld [vmem:[#allocation3 + $0x2b0] sm:$0xff]
    %v158 = vld [vmem:[#allocation3 + $0x2b8] sm:$0xff]
    %v159 = vld [vmem:[#allocation3 + $0x2c0] sm:$0xff]
    %v160 = vld [vmem:[#allocation3 + $0x2c8] sm:$0xff]
    %v161 = vld [vmem:[#allocation3 + $0x2d0] sm:$0xff]
    %v162 = vld [vmem:[#allocation3 + $0x2d8] sm:$0xff]
    %v163 = vld [vmem:[#allocation3 + $0x2e0] sm:$0xff]
    %v164 = vld [vmem:[#allocation3 + $0x2e8] sm:$0xff]
    %v165 = vld [vmem:[#allocation3 + $0x2f0] sm:$0xff]
    %v166 = vld [vmem:[#allocation3 + $0x2f8] sm:$0xff]
    %v167 = vld [vmem:[#allocation3 + $0x300] sm:$0xff]
    %v168 = vld [vmem:[#allocation3 + $0x308] sm:$0xff]
    %v169 = vld [vmem:[#allocation3 + $0x310] sm:$0xff]
    %v170 = vld [vmem:[#allocation3 + $0x318] sm:$0xff]
    %v171 = vld [vmem:[#allocation3 + $0x320] sm:$0xff]
    %v172 = vld [vmem:[#allocation3 + $0x328] sm:$0xff]
    %v173 = vld [vmem:[#allocation3 + $0x330] sm:$0xff]
    %v174 = vld [vmem:[#allocation3 + $0x338] sm:$0xff]
    %v175 = vld [vmem:[#allocation3 + $0x340] sm:$0xff]
    %v176 = vld [vmem:[#allocation3 + $0x348] sm:$0xff]
    %v177 = vld [vmem:[#allocation3 + $0x350] sm:$0xff]
    %v178 = vld [vmem:[#allocation3 + $0x358] sm:$0xff]
    %v179 = vld [vmem:[#allocation3 + $0x360] sm:$0xff]
    %v180 = vld [vmem:[#allocation3 + $0x368] sm:$0xff]
    %v181 = vld [vmem:[#allocation3 + $0x370] sm:$0xff]
    %v182 = vld [vmem:[#allocation3 + $0x378] sm:$0xff]
    %v183 = vld [vmem:[#allocation3 + $0x380] sm:$0xff]
    %v184 = vld [vmem:[#allocation3 + $0x388] sm:$0xff]
    %v185 = vld [vmem:[#allocation3 + $0x390] sm:$0xff]
    %v186 = vld [vmem:[#allocation3 + $0x398] sm:$0xff]
    %v187 = vld [vmem:[#allocation3 + $0x3a0] sm:$0xff]
    %v188 = vld [vmem:[#allocation3 + $0x3a8] sm:$0xff]
    %v189 = vld [vmem:[#allocation3 + $0x3b0] sm:$0xff]
    %v190 = vld [vmem:[#allocation3 + $0x3b8] sm:$0xff]
    %v191 = vld [vmem:[#allocation3 + $0x3c0] sm:$0xff]
    %v192 = vld [vmem:[#allocation3 + $0x3c8] sm:$0xff]
    %v193 = vld [vmem:[#allocation3 + $0x3d0] sm:$0xff]
    %v194 = vld [vmem:[#allocation3 + $0x3d8] sm:$0xff]
    %v195 = vld [vmem:[#allocation3 + $0x3e0] sm:$0xff]
    %v196 = vld [vmem:[#allocation3 + $0x3e8] sm:$0xff]
    %v197 = vld [vmem:[#allocation3 + $0x3f0] sm:$0xff]
    %v198 = vld [vmem:[#allocation3 + $0x3f8] sm:$0xff]
    %v199 = vld [vmem:[%s2] sm:$0xff]
    %v200 = vld [vmem:[%s2 + $0x8] sm:$0xff]
    %v203 = vlaneseq
    %v204 = vshrl.u32 %v203, 7
    %v205 = vsub.s32 0, %v204
    %v206 = vrot.slane %v199, %v205
    %v207 = vlaneseq
    %v208 = vshrl.u32 %v207, 7
    %v209 = vsub.s32 1, %v208
    %v210 = vrot.slane %v199, %v209
    %v211 = vlaneseq
    %v212 = vshrl.u32 %v211, 7
    %v213 = vsub.s32 2, %v212
    %v214 = vrot.slane %v199, %v213
    %v215 = vlaneseq
    %v216 = vshrl.u32 %v215, 7
    %v217 = vsub.s32 3, %v216
    %v218 = vrot.slane %v199, %v217
    %v219 = vlaneseq
    %v220 = vshrl.u32 %v219, 7
    %v221 = vsub.s32 4, %v220
    %v222 = vrot.slane %v199, %v221
    %v223 = vlaneseq
    %v224 = vshrl.u32 %v223, 7
    %v225 = vsub.s32 5, %v224
    %v226 = vrot.slane %v199, %v225
    %v227 = vlaneseq
    %v228 = vshrl.u32 %v227, 7
    %v229 = vsub.s32 6, %v228
    %v230 = vrot.slane %v199, %v229
    %v231 = vlaneseq
    %v232 = vshrl.u32 %v231, 7
    %v233 = vsub.s32 7, %v232
    %v234 = vrot.slane %v199, %v233
    %v235 = vlaneseq
    %v236 = vshrl.u32 %v235, 7
    %v237 = vsub.s32 0, %v236
    %v238 = vrot.slane %v200, %v237
    %v239 = vlaneseq
    %v240 = vshrl.u32 %v239, 7
    %v241 = vsub.s32 1, %v240
    %v242 = vrot.slane %v200, %v241
    %v243 = vlaneseq
    %v244 = vshrl.u32 %v243, 7
    %v245 = vsub.s32 2, %v244
    %v246 = vrot.slane %v200, %v245
    %v247 = vlaneseq
    %v248 = vshrl.u32 %v247, 7
    %v249 = vsub.s32 3, %v248
    %v250 = vrot.slane %v200, %v249
    %v251 = vlaneseq
    %v252 = vshrl.u32 %v251, 7
    %v253 = vsub.s32 4, %v252
    %v254 = vrot.slane %v200, %v253
    %v255 = vlaneseq
    %v256 = vshrl.u32 %v255, 7
    %v257 = vsub.s32 5, %v256
    %v258 = vrot.slane %v200, %v257
    %v259 = vlaneseq
    %v260 = vshrl.u32 %v259, 7
    %v261 = vsub.s32 6, %v260
    %v262 = vrot.slane %v200, %v261
    %v263 = vlaneseq
    %v264 = vshrl.u32 %v263, 7
    %v265 = vsub.s32 7, %v264
    %v266 = vrot.slane %v200, %v265
    %v285 = vunpack.c.l.b16 %v69
    %v286 = vunpack.c.l.b16 %v70
    %v287 = vpack.c.b16 %v286, %v285
    %v417 = vunpack.c.l.b16 %v71
    %v418 = vunpack.c.h.b16 %v71
    %v419 = vunpack.c.l.b16 %v72
    %v420 = vunpack.c.h.b16 %v72
    %v421 = vunpack.c.l.b16 %v73
    %v422 = vunpack.c.h.b16 %v73
    %v423 = vunpack.c.l.b16 %v74
    %v424 = vunpack.c.h.b16 %v74
    %v425 = vunpack.c.l.b16 %v75
    %v426 = vunpack.c.h.b16 %v75
    %v427 = vunpack.c.l.b16 %v76
    %v428 = vunpack.c.h.b16 %v76
    %v429 = vunpack.c.l.b16 %v77
    %v430 = vunpack.c.h.b16 %v77
    %v431 = vunpack.c.l.b16 %v78
    %v432 = vunpack.c.h.b16 %v78
    %v433 = vunpack.c.l.b16 %v79
    %v434 = vunpack.c.h.b16 %v79
    %v435 = vunpack.c.l.b16 %v80
    %v436 = vunpack.c.h.b16 %v80
    %v437 = vunpack.c.l.b16 %v81
    %v438 = vunpack.c.h.b16 %v81
    %v439 = vunpack.c.l.b16 %v82
    %v440 = vunpack.c.h.b16 %v82
    %v441 = vunpack.c.l.b16 %v83
    %v442 = vunpack.c.h.b16 %v83
    %v443 = vunpack.c.l.b16 %v84
    %v444 = vunpack.c.h.b16 %v84
    %v445 = vunpack.c.l.b16 %v85
    %v446 = vunpack.c.h.b16 %v85
    %v447 = vunpack.c.l.b16 %v86
    %v448 = vunpack.c.h.b16 %v86
    %v449 = vunpack.c.l.b16 %v87
    %v450 = vunpack.c.h.b16 %v87
    %v451 = vunpack.c.l.b16 %v88
    %v452 = vunpack.c.h.b16 %v88
    %v453 = vunpack.c.l.b16 %v89
    %v454 = vunpack.c.h.b16 %v89
    %v455 = vunpack.c.l.b16 %v90
    %v456 = vunpack.c.h.b16 %v90
    %v457 = vunpack.c.l.b16 %v91
    %v458 = vunpack.c.h.b16 %v91
    %v459 = vunpack.c.l.b16 %v92
    %v460 = vunpack.c.h.b16 %v92
    %v461 = vunpack.c.l.b16 %v93
    %v462 = vunpack.c.h.b16 %v93
    %v463 = vunpack.c.l.b16 %v94
    %v464 = vunpack.c.h.b16 %v94
    %v465 = vunpack.c.l.b16 %v95
    %v466 = vunpack.c.h.b16 %v95
    %v467 = vunpack.c.l.b16 %v96
    %v468 = vunpack.c.h.b16 %v96
    %v469 = vunpack.c.l.b16 %v97
    %v470 = vunpack.c.h.b16 %v97
    %v471 = vunpack.c.l.b16 %v98
    %v472 = vunpack.c.h.b16 %v98
    %v473 = vunpack.c.l.b16 %v99
    %v474 = vunpack.c.h.b16 %v99
    %v475 = vunpack.c.l.b16 %v100
    %v476 = vunpack.c.h.b16 %v100
    %v477 = vunpack.c.l.b16 %v101
    %v478 = vunpack.c.h.b16 %v101
    %v479 = vunpack.c.l.b16 %v102
    %v480 = vunpack.c.h.b16 %v102
    %v481 = vunpack.c.l.b16 %v103
    %v482 = vunpack.c.h.b16 %v103
    %v483 = vunpack.c.l.b16 %v104
    %v484 = vunpack.c.h.b16 %v104
    %v485 = vunpack.c.l.b16 %v105
    %v486 = vunpack.c.h.b16 %v105
    %v487 = vunpack.c.l.b16 %v106
    %v488 = vunpack.c.h.b16 %v106
    %v489 = vunpack.c.l.b16 %v107
    %v490 = vunpack.c.h.b16 %v107
    %v491 = vunpack.c.l.b16 %v108
    %v492 = vunpack.c.h.b16 %v108
    %v493 = vunpack.c.l.b16 %v109
    %v494 = vunpack.c.h.b16 %v109
    %v495 = vunpack.c.l.b16 %v110
    %v496 = vunpack.c.h.b16 %v110
    %v497 = vunpack.c.l.b16 %v111
    %v498 = vunpack.c.h.b16 %v111
    %v499 = vunpack.c.l.b16 %v112
    %v500 = vunpack.c.h.b16 %v112
    %v501 = vunpack.c.l.b16 %v113
    %v502 = vunpack.c.h.b16 %v113
    %v503 = vunpack.c.l.b16 %v114
    %v504 = vunpack.c.h.b16 %v114
    %v505 = vunpack.c.l.b16 %v115
    %v506 = vunpack.c.h.b16 %v115
    %v507 = vunpack.c.l.b16 %v116
    %v508 = vunpack.c.h.b16 %v116
    %v509 = vunpack.c.l.b16 %v117
    %v510 = vunpack.c.h.b16 %v117
    %v511 = vunpack.c.l.b16 %v118
    %v512 = vunpack.c.h.b16 %v118
    %v513 = vunpack.c.l.b16 %v119
    %v514 = vunpack.c.h.b16 %v119
    %v515 = vunpack.c.l.b16 %v120
    %v516 = vunpack.c.h.b16 %v120
    %v517 = vunpack.c.l.b16 %v121
    %v518 = vunpack.c.h.b16 %v121
    %v519 = vunpack.c.l.b16 %v122
    %v520 = vunpack.c.h.b16 %v122
    %v521 = vunpack.c.l.b16 %v123
    %v522 = vunpack.c.h.b16 %v123
    %v523 = vunpack.c.l.b16 %v124
    %v524 = vunpack.c.h.b16 %v124
    %v525 = vunpack.c.l.b16 %v125
    %v526 = vunpack.c.h.b16 %v125
    %v527 = vunpack.c.l.b16 %v126
    %v528 = vunpack.c.h.b16 %v126
    %v529 = vunpack.c.l.b16 %v127
    %v530 = vunpack.c.h.b16 %v127
    %v531 = vunpack.c.l.b16 %v128
    %v532 = vunpack.c.h.b16 %v128
    %v533 = vunpack.c.l.b16 %v129
    %v534 = vunpack.c.h.b16 %v129
    %v535 = vunpack.c.l.b16 %v130
    %v536 = vunpack.c.h.b16 %v130
    %v537 = vunpack.c.l.b16 %v131
    %v538 = vunpack.c.h.b16 %v131
    %v539 = vunpack.c.l.b16 %v132
    %v540 = vunpack.c.h.b16 %v132
    %v541 = vunpack.c.l.b16 %v133
    %v542 = vunpack.c.h.b16 %v133
    %v543 = vunpack.c.l.b16 %v134
    %v544 = vunpack.c.h.b16 %v134
    %v545 = vunpack.c.l.b16 %v135
    %v546 = vunpack.c.h.b16 %v135
    %v547 = vunpack.c.l.b16 %v136
    %v548 = vunpack.c.h.b16 %v136
    %v549 = vunpack.c.l.b16 %v137
    %v550 = vunpack.c.h.b16 %v137
    %v551 = vunpack.c.l.b16 %v138
    %v552 = vunpack.c.h.b16 %v138
    %v553 = vunpack.c.l.b16 %v139
    %v554 = vunpack.c.h.b16 %v139
    %v555 = vunpack.c.l.b16 %v140
    %v556 = vunpack.c.h.b16 %v140
    %v557 = vunpack.c.l.b16 %v141
    %v558 = vunpack.c.h.b16 %v141
    %v559 = vunpack.c.l.b16 %v142
    %v560 = vunpack.c.h.b16 %v142
    %v561 = vunpack.c.l.b16 %v143
    %v562 = vunpack.c.h.b16 %v143
    %v563 = vunpack.c.l.b16 %v144
    %v564 = vunpack.c.h.b16 %v144
    %v565 = vunpack.c.l.b16 %v145
    %v566 = vunpack.c.h.b16 %v145
    %v567 = vunpack.c.l.b16 %v146
    %v568 = vunpack.c.h.b16 %v146
    %v569 = vunpack.c.l.b16 %v147
    %v570 = vunpack.c.h.b16 %v147
    %v571 = vunpack.c.l.b16 %v148
    %v572 = vunpack.c.h.b16 %v148
    %v573 = vunpack.c.l.b16 %v149
    %v574 = vunpack.c.h.b16 %v149
    %v575 = vunpack.c.l.b16 %v150
    %v576 = vunpack.c.h.b16 %v150
    %v577 = vunpack.c.l.b16 %v151
    %v578 = vunpack.c.h.b16 %v151
    %v579 = vunpack.c.l.b16 %v152
    %v580 = vunpack.c.h.b16 %v152
    %v581 = vunpack.c.l.b16 %v153
    %v582 = vunpack.c.h.b16 %v153
    %v583 = vunpack.c.l.b16 %v154
    %v584 = vunpack.c.h.b16 %v154
    %v585 = vunpack.c.l.b16 %v155
    %v586 = vunpack.c.h.b16 %v155
    %v587 = vunpack.c.l.b16 %v156
    %v588 = vunpack.c.h.b16 %v156
    %v589 = vunpack.c.l.b16 %v157
    %v590 = vunpack.c.h.b16 %v157
    %v591 = vunpack.c.l.b16 %v158
    %v592 = vunpack.c.h.b16 %v158
    %v593 = vunpack.c.l.b16 %v159
    %v594 = vunpack.c.h.b16 %v159
    %v595 = vunpack.c.l.b16 %v160
    %v596 = vunpack.c.h.b16 %v160
    %v597 = vunpack.c.l.b16 %v161
    %v598 = vunpack.c.h.b16 %v161
    %v599 = vunpack.c.l.b16 %v162
    %v600 = vunpack.c.h.b16 %v162
    %v601 = vunpack.c.l.b16 %v163
    %v602 = vunpack.c.h.b16 %v163
    %v603 = vunpack.c.l.b16 %v164
    %v604 = vunpack.c.h.b16 %v164
    %v605 = vunpack.c.l.b16 %v165
    %v606 = vunpack.c.h.b16 %v165
    %v607 = vunpack.c.l.b16 %v166
    %v608 = vunpack.c.h.b16 %v166
    %v609 = vunpack.c.l.b16 %v167
    %v610 = vunpack.c.h.b16 %v167
    %v611 = vunpack.c.l.b16 %v168
    %v612 = vunpack.c.h.b16 %v168
    %v613 = vunpack.c.l.b16 %v169
    %v614 = vunpack.c.h.b16 %v169
    %v615 = vunpack.c.l.b16 %v170
    %v616 = vunpack.c.h.b16 %v170
    %v617 = vunpack.c.l.b16 %v171
    %v618 = vunpack.c.h.b16 %v171
    %v619 = vunpack.c.l.b16 %v172
    %v620 = vunpack.c.h.b16 %v172
    %v621 = vunpack.c.l.b16 %v173
    %v622 = vunpack.c.h.b16 %v173
    %v623 = vunpack.c.l.b16 %v174
    %v624 = vunpack.c.h.b16 %v174
    %v625 = vunpack.c.l.b16 %v175
    %v626 = vunpack.c.h.b16 %v175
    %v627 = vunpack.c.l.b16 %v176
    %v628 = vunpack.c.h.b16 %v176
    %v629 = vunpack.c.l.b16 %v177
    %v630 = vunpack.c.h.b16 %v177
    %v631 = vunpack.c.l.b16 %v178
    %v632 = vunpack.c.h.b16 %v178
    %v633 = vunpack.c.l.b16 %v179
    %v634 = vunpack.c.h.b16 %v179
    %v635 = vunpack.c.l.b16 %v180
    %v636 = vunpack.c.h.b16 %v180
    %v637 = vunpack.c.l.b16 %v181
    %v638 = vunpack.c.h.b16 %v181
    %v639 = vunpack.c.l.b16 %v182
    %v640 = vunpack.c.h.b16 %v182
    %v641 = vunpack.c.l.b16 %v183
    %v642 = vunpack.c.h.b16 %v183
    %v643 = vunpack.c.l.b16 %v184
    %v644 = vunpack.c.h.b16 %v184
    %v645 = vunpack.c.l.b16 %v185
    %v646 = vunpack.c.h.b16 %v185
    %v647 = vunpack.c.l.b16 %v186
    %v648 = vunpack.c.h.b16 %v186
    %v649 = vunpack.c.l.b16 %v187
    %v650 = vunpack.c.h.b16 %v187
    %v651 = vunpack.c.l.b16 %v188
    %v652 = vunpack.c.h.b16 %v188
    %v653 = vunpack.c.l.b16 %v189
    %v654 = vunpack.c.h.b16 %v189
    %v655 = vunpack.c.l.b16 %v190
    %v656 = vunpack.c.h.b16 %v190
    %v657 = vunpack.c.l.b16 %v191
    %v658 = vunpack.c.h.b16 %v191
    %v659 = vunpack.c.l.b16 %v192
    %v660 = vunpack.c.h.b16 %v192
    %v661 = vunpack.c.l.b16 %v193
    %v662 = vunpack.c.h.b16 %v193
    %v663 = vunpack.c.l.b16 %v194
    %v664 = vunpack.c.h.b16 %v194
    %v665 = vunpack.c.l.b16 %v195
    %v666 = vunpack.c.h.b16 %v195
    %v667 = vunpack.c.l.b16 %v196
    %v668 = vunpack.c.h.b16 %v196
    %v669 = vunpack.c.l.b16 %v197
    %v670 = vunpack.c.h.b16 %v197
    %v671 = vunpack.c.l.b16 %v198
    %v672 = vunpack.c.h.b16 %v198
    %v673 = vpack.c.b16 %v433, %v417
    %v674 = vpack.c.b16 %v434, %v418
    %v675 = vpack.c.b16 %v435, %v419
    %v676 = vpack.c.b16 %v436, %v420
    %v677 = vpack.c.b16 %v437, %v421
    %v678 = vpack.c.b16 %v438, %v422
    %v679 = vpack.c.b16 %v439, %v423
    %v680 = vpack.c.b16 %v440, %v424
    %v681 = vpack.c.b16 %v441, %v425
    %v682 = vpack.c.b16 %v442, %v426
    %v683 = vpack.c.b16 %v443, %v427
    %v684 = vpack.c.b16 %v444, %v428
    %v685 = vpack.c.b16 %v445, %v429
    %v686 = vpack.c.b16 %v446, %v430
    %v687 = vpack.c.b16 %v447, %v431
    %v688 = vpack.c.b16 %v448, %v432
    %v689 = vpack.c.b16 %v465, %v449
    %v690 = vpack.c.b16 %v466, %v450
    %v691 = vpack.c.b16 %v467, %v451
    %v692 = vpack.c.b16 %v468, %v452
    %v693 = vpack.c.b16 %v469, %v453
    %v694 = vpack.c.b16 %v470, %v454
    %v695 = vpack.c.b16 %v471, %v455
    %v696 = vpack.c.b16 %v472, %v456
    %v697 = vpack.c.b16 %v473, %v457
    %v698 = vpack.c.b16 %v474, %v458
    %v699 = vpack.c.b16 %v475, %v459
    %v700 = vpack.c.b16 %v476, %v460
    %v701 = vpack.c.b16 %v477, %v461
    %v702 = vpack.c.b16 %v478, %v462
    %v703 = vpack.c.b16 %v479, %v463
    %v704 = vpack.c.b16 %v480, %v464
    %v705 = vpack.c.b16 %v497, %v481
    %v706 = vpack.c.b16 %v498, %v482
    %v707 = vpack.c.b16 %v499, %v483
    %v708 = vpack.c.b16 %v500, %v484
    %v709 = vpack.c.b16 %v501, %v485
    %v710 = vpack.c.b16 %v502, %v486
    %v711 = vpack.c.b16 %v503, %v487
    %v712 = vpack.c.b16 %v504, %v488
    %v713 = vpack.c.b16 %v505, %v489
    %v714 = vpack.c.b16 %v506, %v490
    %v715 = vpack.c.b16 %v507, %v491
    %v716 = vpack.c.b16 %v508, %v492
    %v717 = vpack.c.b16 %v509, %v493
    %v718 = vpack.c.b16 %v510, %v494
    %v719 = vpack.c.b16 %v511, %v495
    %v720 = vpack.c.b16 %v512, %v496
    %v721 = vpack.c.b16 %v529, %v513
    %v722 = vpack.c.b16 %v530, %v514
    %v723 = vpack.c.b16 %v531, %v515
    %v724 = vpack.c.b16 %v532, %v516
    %v725 = vpack.c.b16 %v533, %v517
    %v726 = vpack.c.b16 %v534, %v518
    %v727 = vpack.c.b16 %v535, %v519
    %v728 = vpack.c.b16 %v536, %v520
    %v729 = vpack.c.b16 %v537, %v521
    %v730 = vpack.c.b16 %v538, %v522
    %v731 = vpack.c.b16 %v539, %v523
    %v732 = vpack.c.b16 %v540, %v524
    %v733 = vpack.c.b16 %v541, %v525
    %v734 = vpack.c.b16 %v542, %v526
    %v735 = vpack.c.b16 %v543, %v527
    %v736 = vpack.c.b16 %v544, %v528
    %v737 = vpack.c.b16 %v561, %v545
    %v738 = vpack.c.b16 %v562, %v546
    %v739 = vpack.c.b16 %v563, %v547
    %v740 = vpack.c.b16 %v564, %v548
    %v741 = vpack.c.b16 %v565, %v549
    %v742 = vpack.c.b16 %v566, %v550
    %v743 = vpack.c.b16 %v567, %v551
    %v744 = vpack.c.b16 %v568, %v552
    %v745 = vpack.c.b16 %v569, %v553
    %v746 = vpack.c.b16 %v570, %v554
    %v747 = vpack.c.b16 %v571, %v555
    %v748 = vpack.c.b16 %v572, %v556
    %v749 = vpack.c.b16 %v573, %v557
    %v750 = vpack.c.b16 %v574, %v558
    %v751 = vpack.c.b16 %v575, %v559
    %v752 = vpack.c.b16 %v576, %v560
    %v753 = vpack.c.b16 %v593, %v577
    %v754 = vpack.c.b16 %v594, %v578
    %v755 = vpack.c.b16 %v595, %v579
    %v756 = vpack.c.b16 %v596, %v580
    %v757 = vpack.c.b16 %v597, %v581
    %v758 = vpack.c.b16 %v598, %v582
    %v759 = vpack.c.b16 %v599, %v583
    %v760 = vpack.c.b16 %v600, %v584
    %v761 = vpack.c.b16 %v601, %v585
    %v762 = vpack.c.b16 %v602, %v586
    %v763 = vpack.c.b16 %v603, %v587
    %v764 = vpack.c.b16 %v604, %v588
    %v765 = vpack.c.b16 %v605, %v589
    %v766 = vpack.c.b16 %v606, %v590
    %v767 = vpack.c.b16 %v607, %v591
    %v768 = vpack.c.b16 %v608, %v592
    %v769 = vpack.c.b16 %v625, %v609
    %v770 = vpack.c.b16 %v626, %v610
    %v771 = vpack.c.b16 %v627, %v611
    %v772 = vpack.c.b16 %v628, %v612
    %v773 = vpack.c.b16 %v629, %v613
    %v774 = vpack.c.b16 %v630, %v614
    %v775 = vpack.c.b16 %v631, %v615
    %v776 = vpack.c.b16 %v632, %v616
    %v777 = vpack.c.b16 %v633, %v617
    %v778 = vpack.c.b16 %v634, %v618
    %v779 = vpack.c.b16 %v635, %v619
    %v780 = vpack.c.b16 %v636, %v620
    %v781 = vpack.c.b16 %v637, %v621
    %v782 = vpack.c.b16 %v638, %v622
    %v783 = vpack.c.b16 %v639, %v623
    %v784 = vpack.c.b16 %v640, %v624
    %v785 = vpack.c.b16 %v657, %v641
    %v786 = vpack.c.b16 %v658, %v642
    %v787 = vpack.c.b16 %v659, %v643
    %v788 = vpack.c.b16 %v660, %v644
    %v789 = vpack.c.b16 %v661, %v645
    %v790 = vpack.c.b16 %v662, %v646
    %v791 = vpack.c.b16 %v663, %v647
    %v792 = vpack.c.b16 %v664, %v648
    %v793 = vpack.c.b16 %v665, %v649
    %v794 = vpack.c.b16 %v666, %v650
    %v795 = vpack.c.b16 %v667, %v651
    %v796 = vpack.c.b16 %v668, %v652
    %v797 = vpack.c.b16 %v669, %v653
    %v798 = vpack.c.b16 %v670, %v654
    %v799 = vpack.c.b16 %v671, %v655
    %v800 = vpack.c.b16 %v672, %v656
    %929 = vmatprep.subr.bf16.mxu0 %v786
    %930 = vmatpush1.bf16.msra.mxu0 %v785
    %931 = vmatprep.subr.bf16.mxu0 %v770
    %932 = vmatpush1.bf16.msra.mxu0 %v769
    %933 = vmatprep.subr.bf16.mxu0 %v754
    %934 = vmatpush1.bf16.msra.mxu0 %v753
    %935 = vmatprep.subr.bf16.mxu0 %v738
    %936 = vmatpush1.bf16.msra.mxu0 %v737
    %937 = vmatprep.subr.bf16.mxu0 %v722
    %938 = vmatpush1.bf16.msra.mxu0 %v721
    %939 = vmatprep.subr.bf16.mxu0 %v706
    %940 = vmatpush1.bf16.msra.mxu0 %v705
    %941 = vmatprep.subr.bf16.mxu0 %v690
    %942 = vmatpush1.bf16.msra.mxu0 %v689
    %943 = vmatprep.subr.bf16.mxu0 %v674
    %944 = vmatpush1.bf16.msra.mxu0 %v673
    %945 = vmatprep.subr.bf16.mxu0 0
    %946 = vmatpush2.bf16.msra.mxu0 0
    %947 = vmatprep.subr.bf16.mxu0 0
    %948 = vmatpush2.bf16.msra.mxu0 0
    %949 = vmatprep.subr.bf16.mxu0 0
    %950 = vmatpush2.bf16.msra.mxu0 0
    %951 = vmatprep.subr.bf16.mxu0 0
    %952 = vmatpush2.bf16.msra.mxu0 0
    %953 = vmatprep.subr.bf16.mxu0 0
    %954 = vmatpush2.bf16.msra.mxu0 0
    %955 = vmatprep.subr.bf16.mxu0 0
    %956 = vmatpush2.bf16.msra.mxu0 0
    %957 = vmatprep.subr.bf16.mxu0 0
    %958 = vmatpush2.bf16.msra.mxu0 0
    %959 = vmatprep.subr.bf16.mxu0 0
    %960 = vmatpush2.bf16.msra.mxu0 0
    %961 = vmatprep.mubr.bf16.mxu0 0
    %962 = vmatmul.mubr.bf16.gmra.mxu0 %v287
    %v963 = vpop.f32.mrf.mxu0
    %v964 = vadd.f32 %v206, %v963
    %v965 = vpop.f32.mrf.mxu0
    %v966 = vadd.f32 %v210, %v965
    %v967 = vpop.f32.mrf.mxu0
    %v968 = vadd.f32 %v206, %v967
    %v969 = vpop.f32.mrf.mxu0
    %v970 = vadd.f32 %v210, %v969
    %971 = vdwg.mxu0
    %972 = vmatprep.subr.bf16.mxu0 %v788
    %973 = vmatpush1.bf16.msra.mxu0 %v787
    %974 = vmatprep.subr.bf16.mxu0 %v772
    %975 = vmatpush1.bf16.msra.mxu0 %v771
    %976 = vmatprep.subr.bf16.mxu0 %v756
    %977 = vmatpush1.bf16.msra.mxu0 %v755
    %978 = vmatprep.subr.bf16.mxu0 %v740
    %979 = vmatpush1.bf16.msra.mxu0 %v739
    %980 = vmatprep.subr.bf16.mxu0 %v724
    %981 = vmatpush1.bf16.msra.mxu0 %v723
    %982 = vmatprep.subr.bf16.mxu0 %v708
    %983 = vmatpush1.bf16.msra.mxu0 %v707
    %984 = vmatprep.subr.bf16.mxu0 %v692
    %985 = vmatpush1.bf16.msra.mxu0 %v691
    %986 = vmatprep.subr.bf16.mxu0 %v676
    %987 = vmatpush1.bf16.msra.mxu0 %v675
    %988 = vmatprep.subr.bf16.mxu0 0
    %989 = vmatpush2.bf16.msra.mxu0 0
    %990 = vmatprep.subr.bf16.mxu0 0
    %991 = vmatpush2.bf16.msra.mxu0 0
    %992 = vmatprep.subr.bf16.mxu0 0
    %993 = vmatpush2.bf16.msra.mxu0 0
    %994 = vmatprep.subr.bf16.mxu0 0
    %995 = vmatpush2.bf16.msra.mxu0 0
    %996 = vmatprep.subr.bf16.mxu0 0
    %997 = vmatpush2.bf16.msra.mxu0 0
    %998 = vmatprep.subr.bf16.mxu0 0
    %999 = vmatpush2.bf16.msra.mxu0 0
    %1000 = vmatprep.subr.bf16.mxu0 0
    %1001 = vmatpush2.bf16.msra.mxu0 0
    %1002 = vmatprep.subr.bf16.mxu0 0
    %1003 = vmatpush2.bf16.msra.mxu0 0
    %1004 = vmatprep.mubr.bf16.mxu0 0
    %1005 = vmatmul.mubr.bf16.gmra.mxu0 %v287
    %v1006 = vpop.f32.mrf.mxu0
    %v1007 = vadd.f32 %v214, %v1006
    %v1008 = vpop.f32.mrf.mxu0
    %v1009 = vadd.f32 %v218, %v1008
    %v1010 = vpop.f32.mrf.mxu0
    %v1011 = vadd.f32 %v214, %v1010
    %v1012 = vpop.f32.mrf.mxu0
    %v1013 = vadd.f32 %v218, %v1012
    %1014 = vdwg.mxu0
    %1015 = vmatprep.subr.bf16.mxu0 %v790
    %1016 = vmatpush1.bf16.msra.mxu0 %v789
    %1017 = vmatprep.subr.bf16.mxu0 %v774
    %1018 = vmatpush1.bf16.msra.mxu0 %v773
    %1019 = vmatprep.subr.bf16.mxu0 %v758
    %1020 = vmatpush1.bf16.msra.mxu0 %v757
    %1021 = vmatprep.subr.bf16.mxu0 %v742
    %1022 = vmatpush1.bf16.msra.mxu0 %v741
    %1023 = vmatprep.subr.bf16.mxu0 %v726
    %1024 = vmatpush1.bf16.msra.mxu0 %v725
    %1025 = vmatprep.subr.bf16.mxu0 %v710
    %1026 = vmatpush1.bf16.msra.mxu0 %v709
    %1027 = vmatprep.subr.bf16.mxu0 %v694
    %1028 = vmatpush1.bf16.msra.mxu0 %v693
    %1029 = vmatprep.subr.bf16.mxu0 %v678
    %1030 = vmatpush1.bf16.msra.mxu0 %v677
    %1031 = vmatprep.subr.bf16.mxu0 0
    %1032 = vmatpush2.bf16.msra.mxu0 0
    %1033 = vmatprep.subr.bf16.mxu0 0
    %1034 = vmatpush2.bf16.msra.mxu0 0
    %1035 = vmatprep.subr.bf16.mxu0 0
    %1036 = vmatpush2.bf16.msra.mxu0 0
    %1037 = vmatprep.subr.bf16.mxu0 0
    %1038 = vmatpush2.bf16.msra.mxu0 0
    %1039 = vmatprep.subr.bf16.mxu0 0
    %1040 = vmatpush2.bf16.msra.mxu0 0
    %1041 = vmatprep.subr.bf16.mxu0 0
    %1042 = vmatpush2.bf16.msra.mxu0 0
    %1043 = vmatprep.subr.bf16.mxu0 0
    %1044 = vmatpush2.bf16.msra.mxu0 0
    %1045 = vmatprep.subr.bf16.mxu0 0
    %1046 = vmatpush2.bf16.msra.mxu0 0
    %1047 = vmatprep.mubr.bf16.mxu0 0
    %1048 = vmatmul.mubr.bf16.gmra.mxu0 %v287
    %v1049 = vpop.f32.mrf.mxu0
    %v1050 = vadd.f32 %v222, %v1049
    %v1051 = vpop.f32.mrf.mxu0
    %v1052 = vadd.f32 %v226, %v1051
    %v1053 = vpop.f32.mrf.mxu0
    %v1054 = vadd.f32 %v222, %v1053
    %v1055 = vpop.f32.mrf.mxu0
    %v1056 = vadd.f32 %v226, %v1055
    %1057 = vdwg.mxu0
    %1058 = vmatprep.subr.bf16.mxu0 %v792
    %1059 = vmatpush1.bf16.msra.mxu0 %v791
    %1060 = vmatprep.subr.bf16.mxu0 %v776
    %1061 = vmatpush1.bf16.msra.mxu0 %v775
    %1062 = vmatprep.subr.bf16.mxu0 %v760
    %1063 = vmatpush1.bf16.msra.mxu0 %v759
    %1064 = vmatprep.subr.bf16.mxu0 %v744
    %1065 = vmatpush1.bf16.msra.mxu0 %v743
    %1066 = vmatprep.subr.bf16.mxu0 %v728
    %1067 = vmatpush1.bf16.msra.mxu0 %v727
    %1068 = vmatprep.subr.bf16.mxu0 %v712
    %1069 = vmatpush1.bf16.msra.mxu0 %v711
    %1070 = vmatprep.subr.bf16.mxu0 %v696
    %1071 = vmatpush1.bf16.msra.mxu0 %v695
    %1072 = vmatprep.subr.bf16.mxu0 %v680
    %1073 = vmatpush1.bf16.msra.mxu0 %v679
    %1074 = vmatprep.subr.bf16.mxu0 0
    %1075 = vmatpush2.bf16.msra.mxu0 0
    %1076 = vmatprep.subr.bf16.mxu0 0
    %1077 = vmatpush2.bf16.msra.mxu0 0
    %1078 = vmatprep.subr.bf16.mxu0 0
    %1079 = vmatpush2.bf16.msra.mxu0 0
    %1080 = vmatprep.subr.bf16.mxu0 0
    %1081 = vmatpush2.bf16.msra.mxu0 0
    %1082 = vmatprep.subr.bf16.mxu0 0
    %1083 = vmatpush2.bf16.msra.mxu0 0
    %1084 = vmatprep.subr.bf16.mxu0 0
    %1085 = vmatpush2.bf16.msra.mxu0 0
    %1086 = vmatprep.subr.bf16.mxu0 0
    %1087 = vmatpush2.bf16.msra.mxu0 0
    %1088 = vmatprep.subr.bf16.mxu0 0
    %1089 = vmatpush2.bf16.msra.mxu0 0
    %1090 = vmatprep.mubr.bf16.mxu0 0
    %1091 = vmatmul.mubr.bf16.gmra.mxu0 %v287
    %v1092 = vpop.f32.mrf.mxu0
    %v1093 = vadd.f32 %v230, %v1092
    %v1094 = vpop.f32.mrf.mxu0
    %v1095 = vadd.f32 %v234, %v1094
    %v1096 = vpop.f32.mrf.mxu0
    %v1097 = vadd.f32 %v230, %v1096
    %v1098 = vpop.f32.mrf.mxu0
    %v1099 = vadd.f32 %v234, %v1098
    %1100 = vdwg.mxu0
    %1101 = vmatprep.subr.bf16.mxu0 %v794
    %1102 = vmatpush1.bf16.msra.mxu0 %v793
    %1103 = vmatprep.subr.bf16.mxu0 %v778
    %1104 = vmatpush1.bf16.msra.mxu0 %v777
    %1105 = vmatprep.subr.bf16.mxu0 %v762
    %1106 = vmatpush1.bf16.msra.mxu0 %v761
    %1107 = vmatprep.subr.bf16.mxu0 %v746
    %1108 = vmatpush1.bf16.msra.mxu0 %v745
    %1109 = vmatprep.subr.bf16.mxu0 %v730
    %1110 = vmatpush1.bf16.msra.mxu0 %v729
    %1111 = vmatprep.subr.bf16.mxu0 %v714
    %1112 = vmatpush1.bf16.msra.mxu0 %v713
    %1113 = vmatprep.subr.bf16.mxu0 %v698
    %1114 = vmatpush1.bf16.msra.mxu0 %v697
    %1115 = vmatprep.subr.bf16.mxu0 %v682
    %1116 = vmatpush1.bf16.msra.mxu0 %v681
    %1117 = vmatprep.subr.bf16.mxu0 0
    %1118 = vmatpush2.bf16.msra.mxu0 0
    %1119 = vmatprep.subr.bf16.mxu0 0
    %1120 = vmatpush2.bf16.msra.mxu0 0
    %1121 = vmatprep.subr.bf16.mxu0 0
    %1122 = vmatpush2.bf16.msra.mxu0 0
    %1123 = vmatprep.subr.bf16.mxu0 0
    %1124 = vmatpush2.bf16.msra.mxu0 0
    %1125 = vmatprep.subr.bf16.mxu0 0
    %1126 = vmatpush2.bf16.msra.mxu0 0
    %1127 = vmatprep.subr.bf16.mxu0 0
    %1128 = vmatpush2.bf16.msra.mxu0 0
    %1129 = vmatprep.subr.bf16.mxu0 0
    %1130 = vmatpush2.bf16.msra.mxu0 0
    %1131 = vmatprep.subr.bf16.mxu0 0
    %1132 = vmatpush2.bf16.msra.mxu0 0
    %1133 = vmatprep.mubr.bf16.mxu0 0
    %1134 = vmatmul.mubr.bf16.gmra.mxu0 %v287
    %v1135 = vpop.f32.mrf.mxu0
    %v1136 = vadd.f32 %v238, %v1135
    %v1137 = vpop.f32.mrf.mxu0
    %v1138 = vadd.f32 %v242, %v1137
    %v1139 = vpop.f32.mrf.mxu0
    %v1140 = vadd.f32 %v238, %v1139
    %v1141 = vpop.f32.mrf.mxu0
    %v1142 = vadd.f32 %v242, %v1141
    %1143 = vdwg.mxu0
    %1144 = vmatprep.subr.bf16.mxu0 %v796
    %1145 = vmatpush1.bf16.msra.mxu0 %v795
    %1146 = vmatprep.subr.bf16.mxu0 %v780
    %1147 = vmatpush1.bf16.msra.mxu0 %v779
    %1148 = vmatprep.subr.bf16.mxu0 %v764
    %1149 = vmatpush1.bf16.msra.mxu0 %v763
    %1150 = vmatprep.subr.bf16.mxu0 %v748
    %1151 = vmatpush1.bf16.msra.mxu0 %v747
    %1152 = vmatprep.subr.bf16.mxu0 %v732
    %1153 = vmatpush1.bf16.msra.mxu0 %v731
    %1154 = vmatprep.subr.bf16.mxu0 %v716
    %1155 = vmatpush1.bf16.msra.mxu0 %v715
    %1156 = vmatprep.subr.bf16.mxu0 %v700
    %1157 = vmatpush1.bf16.msra.mxu0 %v699
    %1158 = vmatprep.subr.bf16.mxu0 %v684
    %1159 = vmatpush1.bf16.msra.mxu0 %v683
    %1160 = vmatprep.subr.bf16.mxu0 0
    %1161 = vmatpush2.bf16.msra.mxu0 0
    %1162 = vmatprep.subr.bf16.mxu0 0
    %1163 = vmatpush2.bf16.msra.mxu0 0
    %1164 = vmatprep.subr.bf16.mxu0 0
    %1165 = vmatpush2.bf16.msra.mxu0 0
    %1166 = vmatprep.subr.bf16.mxu0 0
    %1167 = vmatpush2.bf16.msra.mxu0 0
    %1168 = vmatprep.subr.bf16.mxu0 0
    %1169 = vmatpush2.bf16.msra.mxu0 0
    %1170 = vmatprep.subr.bf16.mxu0 0
    %1171 = vmatpush2.bf16.msra.mxu0 0
    %1172 = vmatprep.subr.bf16.mxu0 0
    %1173 = vmatpush2.bf16.msra.mxu0 0
    %1174 = vmatprep.subr.bf16.mxu0 0
    %1175 = vmatpush2.bf16.msra.mxu0 0
    %1176 = vmatprep.mubr.bf16.mxu0 0
    %1177 = vmatmul.mubr.bf16.gmra.mxu0 %v287
    %v1178 = vpop.f32.mrf.mxu0
    %v1179 = vadd.f32 %v246, %v1178
    %v1180 = vpop.f32.mrf.mxu0
    %v1181 = vadd.f32 %v250, %v1180
    %v1182 = vpop.f32.mrf.mxu0
    %v1183 = vadd.f32 %v246, %v1182
    %v1184 = vpop.f32.mrf.mxu0
    %v1185 = vadd.f32 %v250, %v1184
    %1186 = vdwg.mxu0
    %1187 = vmatprep.subr.bf16.mxu0 %v798
    %1188 = vmatpush1.bf16.msra.mxu0 %v797
    %1189 = vmatprep.subr.bf16.mxu0 %v782
    %1190 = vmatpush1.bf16.msra.mxu0 %v781
    %1191 = vmatprep.subr.bf16.mxu0 %v766
    %1192 = vmatpush1.bf16.msra.mxu0 %v765
    %1193 = vmatprep.subr.bf16.mxu0 %v750
    %1194 = vmatpush1.bf16.msra.mxu0 %v749
    %1195 = vmatprep.subr.bf16.mxu0 %v734
    %1196 = vmatpush1.bf16.msra.mxu0 %v733
    %1197 = vmatprep.subr.bf16.mxu0 %v718
    %1198 = vmatpush1.bf16.msra.mxu0 %v717
    %1199 = vmatprep.subr.bf16.mxu0 %v702
    %1200 = vmatpush1.bf16.msra.mxu0 %v701
    %1201 = vmatprep.subr.bf16.mxu0 %v686
    %1202 = vmatpush1.bf16.msra.mxu0 %v685
    %1203 = vmatprep.subr.bf16.mxu0 0
    %1204 = vmatpush2.bf16.msra.mxu0 0
    %1205 = vmatprep.subr.bf16.mxu0 0
    %1206 = vmatpush2.bf16.msra.mxu0 0
    %1207 = vmatprep.subr.bf16.mxu0 0
    %1208 = vmatpush2.bf16.msra.mxu0 0
    %1209 = vmatprep.subr.bf16.mxu0 0
    %1210 = vmatpush2.bf16.msra.mxu0 0
    %1211 = vmatprep.subr.bf16.mxu0 0
    %1212 = vmatpush2.bf16.msra.mxu0 0
    %1213 = vmatprep.subr.bf16.mxu0 0
    %1214 = vmatpush2.bf16.msra.mxu0 0
    %1215 = vmatprep.subr.bf16.mxu0 0
    %1216 = vmatpush2.bf16.msra.mxu0 0
    %1217 = vmatprep.subr.bf16.mxu0 0
    %1218 = vmatpush2.bf16.msra.mxu0 0
    %1219 = vmatprep.mubr.bf16.mxu0 0
    %1220 = vmatmul.mubr.bf16.gmra.mxu0 %v287
    %v1221 = vpop.f32.mrf.mxu0
    %v1222 = vadd.f32 %v254, %v1221
    %v1223 = vpop.f32.mrf.mxu0
    %v1224 = vadd.f32 %v258, %v1223
    %v1225 = vpop.f32.mrf.mxu0
    %v1226 = vadd.f32 %v254, %v1225
    %v1227 = vpop.f32.mrf.mxu0
    %v1228 = vadd.f32 %v258, %v1227
    %1229 = vdwg.mxu0
    %1230 = vmatprep.subr.bf16.mxu0 %v800
    %1231 = vmatpush1.bf16.msra.mxu0 %v799
    %1232 = vmatprep.subr.bf16.mxu0 %v784
    %1233 = vmatpush1.bf16.msra.mxu0 %v783
    %1234 = vmatprep.subr.bf16.mxu0 %v768
    %1235 = vmatpush1.bf16.msra.mxu0 %v767
    %1236 = vmatprep.subr.bf16.mxu0 %v752
    %1237 = vmatpush1.bf16.msra.mxu0 %v751
    %1238 = vmatprep.subr.bf16.mxu0 %v736
    %1239 = vmatpush1.bf16.msra.mxu0 %v735
    %1240 = vmatprep.subr.bf16.mxu0 %v720
    %1241 = vmatpush1.bf16.msra.mxu0 %v719
    %1242 = vmatprep.subr.bf16.mxu0 %v704
    %1243 = vmatpush1.bf16.msra.mxu0 %v703
    %1244 = vmatprep.subr.bf16.mxu0 %v688
    %1245 = vmatpush1.bf16.msra.mxu0 %v687
    %1246 = vmatprep.subr.bf16.mxu0 0
    %1247 = vmatpush2.bf16.msra.mxu0 0
    %1248 = vmatprep.subr.bf16.mxu0 0
    %1249 = vmatpush2.bf16.msra.mxu0 0
    %1250 = vmatprep.subr.bf16.mxu0 0
    %1251 = vmatpush2.bf16.msra.mxu0 0
    %1252 = vmatprep.subr.bf16.mxu0 0
    %1253 = vmatpush2.bf16.msra.mxu0 0
    %1254 = vmatprep.subr.bf16.mxu0 0
    %1255 = vmatpush2.bf16.msra.mxu0 0
    %1256 = vmatprep.subr.bf16.mxu0 0
    %1257 = vmatpush2.bf16.msra.mxu0 0
    %1258 = vmatprep.subr.bf16.mxu0 0
    %1259 = vmatpush2.bf16.msra.mxu0 0
    %1260 = vmatprep.subr.bf16.mxu0 0
    %1261 = vmatpush2.bf16.msra.mxu0 0
    %1262 = vmatprep.mubr.bf16.mxu0 0
    %1263 = vmatmul.mubr.bf16.gmra.mxu0 %v287
    %v1264 = vpop.f32.mrf.mxu0
    %v1265 = vadd.f32 %v262, %v1264
    %v1266 = vpop.f32.mrf.mxu0
    %v1267 = vadd.f32 %v266, %v1266
    %v1268 = vpop.f32.mrf.mxu0
    %v1269 = vadd.f32 %v262, %v1268
    %v1270 = vpop.f32.mrf.mxu0
    %v1271 = vadd.f32 %v266, %v1270
    %1272 = vdwg.mxu0
    %v1273 = vmax.f32 %v964, 0.0
    %v1274 = vmax.f32 %v966, 0.0
    %v1275 = vmax.f32 %v1007, 0.0
    %v1276 = vmax.f32 %v1009, 0.0
    %v1277 = vmax.f32 %v1050, 0.0
    %v1278 = vmax.f32 %v1052, 0.0
    %v1279 = vmax.f32 %v1093, 0.0
    %v1280 = vmax.f32 %v1095, 0.0
    %v1281 = vmax.f32 %v1136, 0.0
    %v1282 = vmax.f32 %v1138, 0.0
    %v1283 = vmax.f32 %v1179, 0.0
    %v1284 = vmax.f32 %v1181, 0.0
    %v1285 = vmax.f32 %v1222, 0.0
    %v1286 = vmax.f32 %v1224, 0.0
    %v1287 = vmax.f32 %v1265, 0.0
    %v1288 = vmax.f32 %v1267, 0.0
    %v1289 = vmax.f32 %v968, 0.0
    %v1290 = vmax.f32 %v970, 0.0
    %v1291 = vmax.f32 %v1011, 0.0
    %v1292 = vmax.f32 %v1013, 0.0
    %v1293 = vmax.f32 %v1054, 0.0
    %v1294 = vmax.f32 %v1056, 0.0
    %v1295 = vmax.f32 %v1097, 0.0
    %v1296 = vmax.f32 %v1099, 0.0
    %v1297 = vmax.f32 %v1140, 0.0
    %v1298 = vmax.f32 %v1142, 0.0
    %v1299 = vmax.f32 %v1183, 0.0
    %v1300 = vmax.f32 %v1185, 0.0
    %v1301 = vmax.f32 %v1226, 0.0
    %v1302 = vmax.f32 %v1228, 0.0
    %v1303 = vmax.f32 %v1269, 0.0
    %v1304 = vmax.f32 %v1271, 0.0
    %v1305 = vpack.c.bf16 %v1289, %v1273
    %v1306 = vpack.c.bf16 %v1290, %v1274
    %v1307 = vpack.c.bf16 %v1291, %v1275
    %v1308 = vpack.c.bf16 %v1292, %v1276
    %v1309 = vpack.c.bf16 %v1293, %v1277
    %v1310 = vpack.c.bf16 %v1294, %v1278
    %v1311 = vpack.c.bf16 %v1295, %v1279
    %v1312 = vpack.c.bf16 %v1296, %v1280
    %v1313 = vpack.c.bf16 %v1297, %v1281
    %v1314 = vpack.c.bf16 %v1298, %v1282
    %v1315 = vpack.c.bf16 %v1299, %v1283
    %v1316 = vpack.c.bf16 %v1300, %v1284
    %v1317 = vpack.c.bf16 %v1301, %v1285
    %v1318 = vpack.c.bf16 %v1302, %v1286
    %v1319 = vpack.c.bf16 %v1303, %v1287
    %v1320 = vpack.c.bf16 %v1304, %v1288
    %v1321 = vld [vmem:[#allocation6] sm:$0xf]
    %v1322 = vld [vmem:[#allocation6 + $0x4] sm:$0xf]
    %v1323 = vld [vmem:[#allocation6 + $0x8] sm:$0xf]
    %v1324 = vld [vmem:[#allocation6 + $0xc] sm:$0xf]
    %v1325 = vld [vmem:[#allocation6 + $0x10] sm:$0xf]
    %v1326 = vld [vmem:[#allocation6 + $0x14] sm:$0xf]
    %v1327 = vld [vmem:[#allocation6 + $0x18] sm:$0xf]
    %v1328 = vld [vmem:[#allocation6 + $0x1c] sm:$0xf]
    %v1329 = vld [vmem:[#allocation6 + $0x20] sm:$0xf]
    %v1330 = vld [vmem:[#allocation6 + $0x24] sm:$0xf]
    %v1331 = vld [vmem:[#allocation6 + $0x28] sm:$0xf]
    %v1332 = vld [vmem:[#allocation6 + $0x2c] sm:$0xf]
    %v1333 = vld [vmem:[#allocation6 + $0x30] sm:$0xf]
    %v1334 = vld [vmem:[#allocation6 + $0x34] sm:$0xf]
    %v1335 = vld [vmem:[#allocation6 + $0x38] sm:$0xf]
    %v1336 = vld [vmem:[#allocation6 + $0x3c] sm:$0xf]
    %v1337 = vld [vmem:[#allocation6 + $0x40] sm:$0xf]
    %v1338 = vld [vmem:[#allocation6 + $0x44] sm:$0xf]
    %v1339 = vld [vmem:[#allocation6 + $0x48] sm:$0xf]
    %v1340 = vld [vmem:[#allocation6 + $0x4c] sm:$0xf]
    %v1341 = vld [vmem:[#allocation6 + $0x50] sm:$0xf]
    %v1342 = vld [vmem:[#allocation6 + $0x54] sm:$0xf]
    %v1343 = vld [vmem:[#allocation6 + $0x58] sm:$0xf]
    %v1344 = vld [vmem:[#allocation6 + $0x5c] sm:$0xf]
    %v1345 = vld [vmem:[#allocation6 + $0x60] sm:$0xf]
    %v1346 = vld [vmem:[#allocation6 + $0x64] sm:$0xf]
    %v1347 = vld [vmem:[#allocation6 + $0x68] sm:$0xf]
    %v1348 = vld [vmem:[#allocation6 + $0x6c] sm:$0xf]
    %v1349 = vld [vmem:[#allocation6 + $0x70] sm:$0xf]
    %v1350 = vld [vmem:[#allocation6 + $0x74] sm:$0xf]
    %v1351 = vld [vmem:[#allocation6 + $0x78] sm:$0xf]
    %v1352 = vld [vmem:[#allocation6 + $0x7c] sm:$0xf]
    %v1353 = vld [vmem:[#allocation6 + $0x80] sm:$0xf]
    %v1354 = vld [vmem:[#allocation6 + $0x84] sm:$0xf]
    %v1355 = vld [vmem:[#allocation6 + $0x88] sm:$0xf]
    %v1356 = vld [vmem:[#allocation6 + $0x8c] sm:$0xf]
    %v1357 = vld [vmem:[#allocation6 + $0x90] sm:$0xf]
    %v1358 = vld [vmem:[#allocation6 + $0x94] sm:$0xf]
    %v1359 = vld [vmem:[#allocation6 + $0x98] sm:$0xf]
    %v1360 = vld [vmem:[#allocation6 + $0x9c] sm:$0xf]
    %v1361 = vld [vmem:[#allocation6 + $0xa0] sm:$0xf]
    %v1362 = vld [vmem:[#allocation6 + $0xa4] sm:$0xf]
    %v1363 = vld [vmem:[#allocation6 + $0xa8] sm:$0xf]
    %v1364 = vld [vmem:[#allocation6 + $0xac] sm:$0xf]
    %v1365 = vld [vmem:[#allocation6 + $0xb0] sm:$0xf]
    %v1366 = vld [vmem:[#allocation6 + $0xb4] sm:$0xf]
    %v1367 = vld [vmem:[#allocation6 + $0xb8] sm:$0xf]
    %v1368 = vld [vmem:[#allocation6 + $0xbc] sm:$0xf]
    %v1369 = vld [vmem:[#allocation6 + $0xc0] sm:$0xf]
    %v1370 = vld [vmem:[#allocation6 + $0xc4] sm:$0xf]
    %v1371 = vld [vmem:[#allocation6 + $0xc8] sm:$0xf]
    %v1372 = vld [vmem:[#allocation6 + $0xcc] sm:$0xf]
    %v1373 = vld [vmem:[#allocation6 + $0xd0] sm:$0xf]
    %v1374 = vld [vmem:[#allocation6 + $0xd4] sm:$0xf]
    %v1375 = vld [vmem:[#allocation6 + $0xd8] sm:$0xf]
    %v1376 = vld [vmem:[#allocation6 + $0xdc] sm:$0xf]
    %v1377 = vld [vmem:[#allocation6 + $0xe0] sm:$0xf]
    %v1378 = vld [vmem:[#allocation6 + $0xe4] sm:$0xf]
    %v1379 = vld [vmem:[#allocation6 + $0xe8] sm:$0xf]
    %v1380 = vld [vmem:[#allocation6 + $0xec] sm:$0xf]
    %v1381 = vld [vmem:[#allocation6 + $0xf0] sm:$0xf]
    %v1382 = vld [vmem:[#allocation6 + $0xf4] sm:$0xf]
    %v1383 = vld [vmem:[#allocation6 + $0xf8] sm:$0xf]
    %v1384 = vld [vmem:[#allocation6 + $0xfc] sm:$0xf]
    %v1385 = vld [vmem:[%s4] sm:$0x1]
    %v1387 = vlaneseq
    %v1388 = vshrl.u32 %v1387, 7
    %v1389 = vsub.s32 0, %v1388
    %v1390 = vrot.slane %v1385, %v1389
    %v1456 = vunpack.c.l.b16 %v1321
    %v1457 = vunpack.c.l.b16 %v1322
    %v1458 = vunpack.c.l.b16 %v1323
    %v1459 = vunpack.c.l.b16 %v1324
    %v1460 = vunpack.c.l.b16 %v1325
    %v1461 = vunpack.c.l.b16 %v1326
    %v1462 = vunpack.c.l.b16 %v1327
    %v1463 = vunpack.c.l.b16 %v1328
    %v1464 = vunpack.c.l.b16 %v1329
    %v1465 = vunpack.c.l.b16 %v1330
    %v1466 = vunpack.c.l.b16 %v1331
    %v1467 = vunpack.c.l.b16 %v1332
    %v1468 = vunpack.c.l.b16 %v1333
    %v1469 = vunpack.c.l.b16 %v1334
    %v1470 = vunpack.c.l.b16 %v1335
    %v1471 = vunpack.c.l.b16 %v1336
    %v1472 = vunpack.c.l.b16 %v1337
    %v1473 = vunpack.c.l.b16 %v1338
    %v1474 = vunpack.c.l.b16 %v1339
    %v1475 = vunpack.c.l.b16 %v1340
    %v1476 = vunpack.c.l.b16 %v1341
    %v1477 = vunpack.c.l.b16 %v1342
    %v1478 = vunpack.c.l.b16 %v1343
    %v1479 = vunpack.c.l.b16 %v1344
    %v1480 = vunpack.c.l.b16 %v1345
    %v1481 = vunpack.c.l.b16 %v1346
    %v1482 = vunpack.c.l.b16 %v1347
    %v1483 = vunpack.c.l.b16 %v1348
    %v1484 = vunpack.c.l.b16 %v1349
    %v1485 = vunpack.c.l.b16 %v1350
    %v1486 = vunpack.c.l.b16 %v1351
    %v1487 = vunpack.c.l.b16 %v1352
    %v1488 = vunpack.c.l.b16 %v1353
    %v1489 = vunpack.c.l.b16 %v1354
    %v1490 = vunpack.c.l.b16 %v1355
    %v1491 = vunpack.c.l.b16 %v1356
    %v1492 = vunpack.c.l.b16 %v1357
    %v1493 = vunpack.c.l.b16 %v1358
    %v1494 = vunpack.c.l.b16 %v1359
    %v1495 = vunpack.c.l.b16 %v1360
    %v1496 = vunpack.c.l.b16 %v1361
    %v1497 = vunpack.c.l.b16 %v1362
    %v1498 = vunpack.c.l.b16 %v1363
    %v1499 = vunpack.c.l.b16 %v1364
    %v1500 = vunpack.c.l.b16 %v1365
    %v1501 = vunpack.c.l.b16 %v1366
    %v1502 = vunpack.c.l.b16 %v1367
    %v1503 = vunpack.c.l.b16 %v1368
    %v1504 = vunpack.c.l.b16 %v1369
    %v1505 = vunpack.c.l.b16 %v1370
    %v1506 = vunpack.c.l.b16 %v1371
    %v1507 = vunpack.c.l.b16 %v1372
    %v1508 = vunpack.c.l.b16 %v1373
    %v1509 = vunpack.c.l.b16 %v1374
    %v1510 = vunpack.c.l.b16 %v1375
    %v1511 = vunpack.c.l.b16 %v1376
    %v1512 = vunpack.c.l.b16 %v1377
    %v1513 = vunpack.c.l.b16 %v1378
    %v1514 = vunpack.c.l.b16 %v1379
    %v1515 = vunpack.c.l.b16 %v1380
    %v1516 = vunpack.c.l.b16 %v1381
    %v1517 = vunpack.c.l.b16 %v1382
    %v1518 = vunpack.c.l.b16 %v1383
    %v1519 = vunpack.c.l.b16 %v1384
    %v1520 = vpack.c.b16 %v1457, %v1456
    %v1521 = vpack.c.b16 %v1459, %v1458
    %v1522 = vpack.c.b16 %v1461, %v1460
    %v1523 = vpack.c.b16 %v1463, %v1462
    %v1524 = vpack.c.b16 %v1465, %v1464
    %v1525 = vpack.c.b16 %v1467, %v1466
    %v1526 = vpack.c.b16 %v1469, %v1468
    %v1527 = vpack.c.b16 %v1471, %v1470
    %v1528 = vpack.c.b16 %v1473, %v1472
    %v1529 = vpack.c.b16 %v1475, %v1474
    %v1530 = vpack.c.b16 %v1477, %v1476
    %v1531 = vpack.c.b16 %v1479, %v1478
    %v1532 = vpack.c.b16 %v1481, %v1480
    %v1533 = vpack.c.b16 %v1483, %v1482
    %v1534 = vpack.c.b16 %v1485, %v1484
    %v1535 = vpack.c.b16 %v1487, %v1486
    %v1536 = vpack.c.b16 %v1489, %v1488
    %v1537 = vpack.c.b16 %v1491, %v1490
    %v1538 = vpack.c.b16 %v1493, %v1492
    %v1539 = vpack.c.b16 %v1495, %v1494
    %v1540 = vpack.c.b16 %v1497, %v1496
    %v1541 = vpack.c.b16 %v1499, %v1498
    %v1542 = vpack.c.b16 %v1501, %v1500
    %v1543 = vpack.c.b16 %v1503, %v1502
    %v1544 = vpack.c.b16 %v1505, %v1504
    %v1545 = vpack.c.b16 %v1507, %v1506
    %v1546 = vpack.c.b16 %v1509, %v1508
    %v1547 = vpack.c.b16 %v1511, %v1510
    %v1548 = vpack.c.b16 %v1513, %v1512
    %v1549 = vpack.c.b16 %v1515, %v1514
    %v1550 = vpack.c.b16 %v1517, %v1516
    %v1551 = vpack.c.b16 %v1519, %v1518
    %1584 = vmatprep.subr.bf16.mxu0 0
    %1585 = vmatpush1.bf16.msra.mxu0 %v1527
    %1586 = vmatprep.subr.bf16.mxu0 0
    %1587 = vmatpush1.bf16.msra.mxu0 %v1526
    %1588 = vmatprep.subr.bf16.mxu0 0
    %1589 = vmatpush1.bf16.msra.mxu0 %v1525
    %1590 = vmatprep.subr.bf16.mxu0 0
    %1591 = vmatpush1.bf16.msra.mxu0 %v1524
    %1592 = vmatprep.subr.bf16.mxu0 0
    %1593 = vmatpush1.bf16.msra.mxu0 %v1523
    %1594 = vmatprep.subr.bf16.mxu0 0
    %1595 = vmatpush1.bf16.msra.mxu0 %v1522
    %1596 = vmatprep.subr.bf16.mxu0 0
    %1597 = vmatpush1.bf16.msra.mxu0 %v1521
    %1598 = vmatprep.subr.bf16.mxu0 0
    %1599 = vmatpush1.bf16.msra.mxu0 %v1520
    %1600 = vmatprep.subr.bf16.mxu0 0
    %1601 = vmatpush2.bf16.msra.mxu0 %v1535
    %1602 = vmatprep.subr.bf16.mxu0 0
    %1603 = vmatpush2.bf16.msra.mxu0 %v1534
    %1604 = vmatprep.subr.bf16.mxu0 0
    %1605 = vmatpush2.bf16.msra.mxu0 %v1533
    %1606 = vmatprep.subr.bf16.mxu0 0
    %1607 = vmatpush2.bf16.msra.mxu0 %v1532
    %1608 = vmatprep.subr.bf16.mxu0 0
    %1609 = vmatpush2.bf16.msra.mxu0 %v1531
    %1610 = vmatprep.subr.bf16.mxu0 0
    %1611 = vmatpush2.bf16.msra.mxu0 %v1530
    %1612 = vmatprep.subr.bf16.mxu0 0
    %1613 = vmatpush2.bf16.msra.mxu0 %v1529
    %1614 = vmatprep.subr.bf16.mxu0 0
    %1615 = vmatpush2.bf16.msra.mxu0 %v1528
    %1616 = vmatprep.mubr.bf16.mxu0 %v1306
    %1617 = vmatmul.mubr.bf16.gmra.mxu0 %v1305
    %v1618 = vpop.f32.mrf.mxu0
    %v1619 = vadd.f32 %v1390, %v1618
    %v1620 = vpop.f32.mrf.mxu0
    %v1621 = vpop.f32.mrf.mxu0
    %v1622 = vadd.f32 %v1390, %v1621
    %v1623 = vpop.f32.mrf.mxu0
    %1624 = vdwg.mxu0
    %1625 = vmatprep.subr.bf16.mxu0 0
    %1626 = vmatpush1.bf16.msra.mxu0 %v1543
    %1627 = vmatprep.subr.bf16.mxu0 0
    %1628 = vmatpush1.bf16.msra.mxu0 %v1542
    %1629 = vmatprep.subr.bf16.mxu0 0
    %1630 = vmatpush1.bf16.msra.mxu0 %v1541
    %1631 = vmatprep.subr.bf16.mxu0 0
    %1632 = vmatpush1.bf16.msra.mxu0 %v1540
    %1633 = vmatprep.subr.bf16.mxu0 0
    %1634 = vmatpush1.bf16.msra.mxu0 %v1539
    %1635 = vmatprep.subr.bf16.mxu0 0
    %1636 = vmatpush1.bf16.msra.mxu0 %v1538
    %1637 = vmatprep.subr.bf16.mxu0 0
    %1638 = vmatpush1.bf16.msra.mxu0 %v1537
    %1639 = vmatprep.subr.bf16.mxu0 0
    %1640 = vmatpush1.bf16.msra.mxu0 %v1536
    %1641 = vmatprep.subr.bf16.mxu0 0
    %1642 = vmatpush2.bf16.msra.mxu0 %v1551
    %1643 = vmatprep.subr.bf16.mxu0 0
    %1644 = vmatpush2.bf16.msra.mxu0 %v1550
    %1645 = vmatprep.subr.bf16.mxu0 0
    %1646 = vmatpush2.bf16.msra.mxu0 %v1549
    %1647 = vmatprep.subr.bf16.mxu0 0
    %1648 = vmatpush2.bf16.msra.mxu0 %v1548
    %1649 = vmatprep.subr.bf16.mxu0 0
    %1650 = vmatpush2.bf16.msra.mxu0 %v1547
    %1651 = vmatprep.subr.bf16.mxu0 0
    %1652 = vmatpush2.bf16.msra.mxu0 %v1546
    %1653 = vmatprep.subr.bf16.mxu0 0
    %1654 = vmatpush2.bf16.msra.mxu0 %v1545
    %1655 = vmatprep.subr.bf16.mxu0 0
    %1656 = vmatpush2.bf16.msra.mxu0 %v1544
    %1657 = vmatprep.mubr.bf16.mxu0 %v1308
    %1658 = vmatmul.mubr.bf16.gmra.mxu0 %v1307
    %v1659 = vpop.f32.mrf.mxu0
    %v1660 = vadd.f32 %v1619, %v1659
    %v1661 = vpop.f32.mrf.mxu0
    %v1662 = vpop.f32.mrf.mxu0
    %v1663 = vadd.f32 %v1622, %v1662
    %v1664 = vpop.f32.mrf.mxu0
    %1665 = vdwg.mxu0
    %v1666 = vmax.f32 %v1660, 0.0
    %v1667 = vmax.f32 %v1663, 0.0
    %v1668 = vpack.c.bf16 %v1667, %v1666
    %v1670 = vunpack.c.l.b16 %v1668
    %v1671 = vunpack.c.h.b16 %v1668
    %v1672 = vpack.c.b16 %v1670, %v1670
    %v1673 = vpack.c.b16 %v1671, %v1671
    %1676 = vst [vmem:[#allocation2] sm:$0xf] %v1672
    %1677 = vst [vmem:[#allocation2 + $0x1c] sm:$0xf] %v1673
    %s1678 = scalar_lea.vmem [#allocation6], 256
    %v1679 = vld [vmem:[%s1678] sm:$0xf]
    %v1680 = vld [vmem:[%s1678 + $0x4] sm:$0xf]
    %v1681 = vld [vmem:[%s1678 + $0x8] sm:$0xf]
    %v1682 = vld [vmem:[%s1678 + $0xc] sm:$0xf]
    %v1683 = vld [vmem:[%s1678 + $0x10] sm:$0xf]
    %v1684 = vld [vmem:[%s1678 + $0x14] sm:$0xf]
    %v1685 = vld [vmem:[%s1678 + $0x18] sm:$0xf]
    %v1686 = vld [vmem:[%s1678 + $0x1c] sm:$0xf]
    %v1687 = vld [vmem:[%s1678 + $0x20] sm:$0xf]
    %v1688 = vld [vmem:[%s1678 + $0x24] sm:$0xf]
    %v1689 = vld [vmem:[%s1678 + $0x28] sm:$0xf]
    %v1690 = vld [vmem:[%s1678 + $0x2c] sm:$0xf]
    %v1691 = vld [vmem:[%s1678 + $0x30] sm:$0xf]
    %v1692 = vld [vmem:[%s1678 + $0x34] sm:$0xf]
    %v1693 = vld [vmem:[%s1678 + $0x38] sm:$0xf]
    %v1694 = vld [vmem:[%s1678 + $0x3c] sm:$0xf]
    %v1695 = vld [vmem:[%s1678 + $0x40] sm:$0xf]
    %v1696 = vld [vmem:[%s1678 + $0x44] sm:$0xf]
    %v1697 = vld [vmem:[%s1678 + $0x48] sm:$0xf]
    %v1698 = vld [vmem:[%s1678 + $0x4c] sm:$0xf]
    %v1699 = vld [vmem:[%s1678 + $0x50] sm:$0xf]
    %v1700 = vld [vmem:[%s1678 + $0x54] sm:$0xf]
    %v1701 = vld [vmem:[%s1678 + $0x58] sm:$0xf]
    %v1702 = vld [vmem:[%s1678 + $0x5c] sm:$0xf]
    %v1703 = vld [vmem:[%s1678 + $0x60] sm:$0xf]
    %v1704 = vld [vmem:[%s1678 + $0x64] sm:$0xf]
    %v1705 = vld [vmem:[%s1678 + $0x68] sm:$0xf]
    %v1706 = vld [vmem:[%s1678 + $0x6c] sm:$0xf]
    %v1707 = vld [vmem:[%s1678 + $0x70] sm:$0xf]
    %v1708 = vld [vmem:[%s1678 + $0x74] sm:$0xf]
    %v1709 = vld [vmem:[%s1678 + $0x78] sm:$0xf]
    %v1710 = vld [vmem:[%s1678 + $0x7c] sm:$0xf]
    %v1711 = vld [vmem:[%s1678 + $0x80] sm:$0xf]
    %v1712 = vld [vmem:[%s1678 + $0x84] sm:$0xf]
    %v1713 = vld [vmem:[%s1678 + $0x88] sm:$0xf]
    %v1714 = vld [vmem:[%s1678 + $0x8c] sm:$0xf]
    %v1715 = vld [vmem:[%s1678 + $0x90] sm:$0xf]
    %v1716 = vld [vmem:[%s1678 + $0x94] sm:$0xf]
    %v1717 = vld [vmem:[%s1678 + $0x98] sm:$0xf]
    %v1718 = vld [vmem:[%s1678 + $0x9c] sm:$0xf]
    %v1719 = vld [vmem:[%s1678 + $0xa0] sm:$0xf]
    %v1720 = vld [vmem:[%s1678 + $0xa4] sm:$0xf]
    %v1721 = vld [vmem:[%s1678 + $0xa8] sm:$0xf]
    %v1722 = vld [vmem:[%s1678 + $0xac] sm:$0xf]
    %v1723 = vld [vmem:[%s1678 + $0xb0] sm:$0xf]
    %v1724 = vld [vmem:[%s1678 + $0xb4] sm:$0xf]
    %v1725 = vld [vmem:[%s1678 + $0xb8] sm:$0xf]
    %v1726 = vld [vmem:[%s1678 + $0xbc] sm:$0xf]
    %v1727 = vld [vmem:[%s1678 + $0xc0] sm:$0xf]
    %v1728 = vld [vmem:[%s1678 + $0xc4] sm:$0xf]
    %v1729 = vld [vmem:[%s1678 + $0xc8] sm:$0xf]
    %v1730 = vld [vmem:[%s1678 + $0xcc] sm:$0xf]
    %v1731 = vld [vmem:[%s1678 + $0xd0] sm:$0xf]
    %v1732 = vld [vmem:[%s1678 + $0xd4] sm:$0xf]
    %v1733 = vld [vmem:[%s1678 + $0xd8] sm:$0xf]
    %v1734 = vld [vmem:[%s1678 + $0xdc] sm:$0xf]
    %v1735 = vld [vmem:[%s1678 + $0xe0] sm:$0xf]
    %v1736 = vld [vmem:[%s1678 + $0xe4] sm:$0xf]
    %v1737 = vld [vmem:[%s1678 + $0xe8] sm:$0xf]
    %v1738 = vld [vmem:[%s1678 + $0xec] sm:$0xf]
    %v1739 = vld [vmem:[%s1678 + $0xf0] sm:$0xf]
    %v1740 = vld [vmem:[%s1678 + $0xf4] sm:$0xf]
    %v1741 = vld [vmem:[%s1678 + $0xf8] sm:$0xf]
    %v1742 = vld [vmem:[%s1678 + $0xfc] sm:$0xf]
    %v1743 = vld [vmem:[%s4 + $0x1] sm:$0x1]
    %v1745 = vlaneseq
    %v1746 = vshrl.u32 %v1745, 7
    %v1747 = vsub.s32 0, %v1746
    %v1748 = vrot.slane %v1743, %v1747
    %v1814 = vunpack.c.l.b16 %v1679
    %v1815 = vunpack.c.l.b16 %v1680
    %v1816 = vunpack.c.l.b16 %v1681
    %v1817 = vunpack.c.l.b16 %v1682
    %v1818 = vunpack.c.l.b16 %v1683
    %v1819 = vunpack.c.l.b16 %v1684
    %v1820 = vunpack.c.l.b16 %v1685
    %v1821 = vunpack.c.l.b16 %v1686
    %v1822 = vunpack.c.l.b16 %v1687
    %v1823 = vunpack.c.l.b16 %v1688
    %v1824 = vunpack.c.l.b16 %v1689
    %v1825 = vunpack.c.l.b16 %v1690
    %v1826 = vunpack.c.l.b16 %v1691
    %v1827 = vunpack.c.l.b16 %v1692
    %v1828 = vunpack.c.l.b16 %v1693
    %v1829 = vunpack.c.l.b16 %v1694
    %v1830 = vunpack.c.l.b16 %v1695
    %v1831 = vunpack.c.l.b16 %v1696
    %v1832 = vunpack.c.l.b16 %v1697
    %v1833 = vunpack.c.l.b16 %v1698
    %v1834 = vunpack.c.l.b16 %v1699
    %v1835 = vunpack.c.l.b16 %v1700
    %v1836 = vunpack.c.l.b16 %v1701
    %v1837 = vunpack.c.l.b16 %v1702
    %v1838 = vunpack.c.l.b16 %v1703
    %v1839 = vunpack.c.l.b16 %v1704
    %v1840 = vunpack.c.l.b16 %v1705
    %v1841 = vunpack.c.l.b16 %v1706
    %v1842 = vunpack.c.l.b16 %v1707
    %v1843 = vunpack.c.l.b16 %v1708
    %v1844 = vunpack.c.l.b16 %v1709
    %v1845 = vunpack.c.l.b16 %v1710
    %v1846 = vunpack.c.l.b16 %v1711
    %v1847 = vunpack.c.l.b16 %v1712
    %v1848 = vunpack.c.l.b16 %v1713
    %v1849 = vunpack.c.l.b16 %v1714
    %v1850 = vunpack.c.l.b16 %v1715
    %v1851 = vunpack.c.l.b16 %v1716
    %v1852 = vunpack.c.l.b16 %v1717
    %v1853 = vunpack.c.l.b16 %v1718
    %v1854 = vunpack.c.l.b16 %v1719
    %v1855 = vunpack.c.l.b16 %v1720
    %v1856 = vunpack.c.l.b16 %v1721
    %v1857 = vunpack.c.l.b16 %v1722
    %v1858 = vunpack.c.l.b16 %v1723
    %v1859 = vunpack.c.l.b16 %v1724
    %v1860 = vunpack.c.l.b16 %v1725
    %v1861 = vunpack.c.l.b16 %v1726
    %v1862 = vunpack.c.l.b16 %v1727
    %v1863 = vunpack.c.l.b16 %v1728
    %v1864 = vunpack.c.l.b16 %v1729
    %v1865 = vunpack.c.l.b16 %v1730
    %v1866 = vunpack.c.l.b16 %v1731
    %v1867 = vunpack.c.l.b16 %v1732
    %v1868 = vunpack.c.l.b16 %v1733
    %v1869 = vunpack.c.l.b16 %v1734
    %v1870 = vunpack.c.l.b16 %v1735
    %v1871 = vunpack.c.l.b16 %v1736
    %v1872 = vunpack.c.l.b16 %v1737
    %v1873 = vunpack.c.l.b16 %v1738
    %v1874 = vunpack.c.l.b16 %v1739
    %v1875 = vunpack.c.l.b16 %v1740
    %v1876 = vunpack.c.l.b16 %v1741
    %v1877 = vunpack.c.l.b16 %v1742
    %v1878 = vpack.c.b16 %v1815, %v1814
    %v1879 = vpack.c.b16 %v1817, %v1816
    %v1880 = vpack.c.b16 %v1819, %v1818
    %v1881 = vpack.c.b16 %v1821, %v1820
    %v1882 = vpack.c.b16 %v1823, %v1822
    %v1883 = vpack.c.b16 %v1825, %v1824
    %v1884 = vpack.c.b16 %v1827, %v1826
    %v1885 = vpack.c.b16 %v1829, %v1828
    %v1886 = vpack.c.b16 %v1831, %v1830
    %v1887 = vpack.c.b16 %v1833, %v1832
    %v1888 = vpack.c.b16 %v1835, %v1834
    %v1889 = vpack.c.b16 %v1837, %v1836
    %v1890 = vpack.c.b16 %v1839, %v1838
    %v1891 = vpack.c.b16 %v1841, %v1840
    %v1892 = vpack.c.b16 %v1843, %v1842
    %v1893 = vpack.c.b16 %v1845, %v1844
    %v1894 = vpack.c.b16 %v1847, %v1846
    %v1895 = vpack.c.b16 %v1849, %v1848
    %v1896 = vpack.c.b16 %v1851, %v1850
    %v1897 = vpack.c.b16 %v1853, %v1852
    %v1898 = vpack.c.b16 %v1855, %v1854
    %v1899 = vpack.c.b16 %v1857, %v1856
    %v1900 = vpack.c.b16 %v1859, %v1858
    %v1901 = vpack.c.b16 %v1861, %v1860
    %v1902 = vpack.c.b16 %v1863, %v1862
    %v1903 = vpack.c.b16 %v1865, %v1864
    %v1904 = vpack.c.b16 %v1867, %v1866
    %v1905 = vpack.c.b16 %v1869, %v1868
    %v1906 = vpack.c.b16 %v1871, %v1870
    %v1907 = vpack.c.b16 %v1873, %v1872
    %v1908 = vpack.c.b16 %v1875, %v1874
    %v1909 = vpack.c.b16 %v1877, %v1876
    %1942 = vmatprep.subr.bf16.mxu0 0
    %1943 = vmatpush1.bf16.msra.mxu0 %v1885
    %1944 = vmatprep.subr.bf16.mxu0 0
    %1945 = vmatpush1.bf16.msra.mxu0 %v1884
    %1946 = vmatprep.subr.bf16.mxu0 0
    %1947 = vmatpush1.bf16.msra.mxu0 %v1883
    %1948 = vmatprep.subr.bf16.mxu0 0
    %1949 = vmatpush1.bf16.msra.mxu0 %v1882
    %1950 = vmatprep.subr.bf16.mxu0 0
    %1951 = vmatpush1.bf16.msra.mxu0 %v1881
    %1952 = vmatprep.subr.bf16.mxu0 0
    %1953 = vmatpush1.bf16.msra.mxu0 %v1880
    %1954 = vmatprep.subr.bf16.mxu0 0
    %1955 = vmatpush1.bf16.msra.mxu0 %v1879
    %1956 = vmatprep.subr.bf16.mxu0 0
    %1957 = vmatpush1.bf16.msra.mxu0 %v1878
    %1958 = vmatprep.subr.bf16.mxu0 0
    %1959 = vmatpush2.bf16.msra.mxu0 %v1893
    %1960 = vmatprep.subr.bf16.mxu0 0
    %1961 = vmatpush2.bf16.msra.mxu0 %v1892
    %1962 = vmatprep.subr.bf16.mxu0 0
    %1963 = vmatpush2.bf16.msra.mxu0 %v1891
    %1964 = vmatprep.subr.bf16.mxu0 0
    %1965 = vmatpush2.bf16.msra.mxu0 %v1890
    %1966 = vmatprep.subr.bf16.mxu0 0
    %1967 = vmatpush2.bf16.msra.mxu0 %v1889
    %1968 = vmatprep.subr.bf16.mxu0 0
    %1969 = vmatpush2.bf16.msra.mxu0 %v1888
    %1970 = vmatprep.subr.bf16.mxu0 0
    %1971 = vmatpush2.bf16.msra.mxu0 %v1887
    %1972 = vmatprep.subr.bf16.mxu0 0
    %1973 = vmatpush2.bf16.msra.mxu0 %v1886
    %1974 = vmatprep.mubr.bf16.mxu0 %v1308
    %1975 = vmatmul.mubr.bf16.gmra.mxu0 %v1307
    %v1976 = vpop.f32.mrf.mxu0
    %v1977 = vadd.f32 %v1748, %v1976
    %v1978 = vpop.f32.mrf.mxu0
    %v1979 = vpop.f32.mrf.mxu0
    %v1980 = vadd.f32 %v1748, %v1979
    %v1981 = vpop.f32.mrf.mxu0
    %1982 = vdwg.mxu0
    %1983 = vmatprep.subr.bf16.mxu0 0
    %1984 = vmatpush1.bf16.msra.mxu0 %v1901
    %1985 = vmatprep.subr.bf16.mxu0 0
    %1986 = vmatpush1.bf16.msra.mxu0 %v1900
    %1987 = vmatprep.subr.bf16.mxu0 0
    %1988 = vmatpush1.bf16.msra.mxu0 %v1899
    %1989 = vmatprep.subr.bf16.mxu0 0
    %1990 = vmatpush1.bf16.msra.mxu0 %v1898
    %1991 = vmatprep.subr.bf16.mxu0 0
    %1992 = vmatpush1.bf16.msra.mxu0 %v1897
    %1993 = vmatprep.subr.bf16.mxu0 0
    %1994 = vmatpush1.bf16.msra.mxu0 %v1896
    %1995 = vmatprep.subr.bf16.mxu0 0
    %1996 = vmatpush1.bf16.msra.mxu0 %v1895
    %1997 = vmatprep.subr.bf16.mxu0 0
    %1998 = vmatpush1.bf16.msra.mxu0 %v1894
    %1999 = vmatprep.subr.bf16.mxu0 0
    %2000 = vmatpush2.bf16.msra.mxu0 %v1909
    %2001 = vmatprep.subr.bf16.mxu0 0
    %2002 = vmatpush2.bf16.msra.mxu0 %v1908
    %2003 = vmatprep.subr.bf16.mxu0 0
    %2004 = vmatpush2.bf16.msra.mxu0 %v1907
    %2005 = vmatprep.subr.bf16.mxu0 0
    %2006 = vmatpush2.bf16.msra.mxu0 %v1906
    %2007 = vmatprep.subr.bf16.mxu0 0
    %2008 = vmatpush2.bf16.msra.mxu0 %v1905
    %2009 = vmatprep.subr.bf16.mxu0 0
    %2010 = vmatpush2.bf16.msra.mxu0 %v1904
    %2011 = vmatprep.subr.bf16.mxu0 0
    %2012 = vmatpush2.bf16.msra.mxu0 %v1903
    %2013 = vmatprep.subr.bf16.mxu0 0
    %2014 = vmatpush2.bf16.msra.mxu0 %v1902
    %2015 = vmatprep.mubr.bf16.mxu0 %v1310
    %2016 = vmatmul.mubr.bf16.gmra.mxu0 %v1309
    %v2017 = vpop.f32.mrf.mxu0
    %v2018 = vadd.f32 %v1977, %v2017
    %v2019 = vpop.f32.mrf.mxu0
    %v2020 = vpop.f32.mrf.mxu0
    %v2021 = vadd.f32 %v1980, %v2020
    %v2022 = vpop.f32.mrf.mxu0
    %2023 = vdwg.mxu0
    %v2024 = vmax.f32 %v2018, 0.0
    %v2025 = vmax.f32 %v2021, 0.0
    %v2026 = vpack.c.bf16 %v2025, %v2024
    %v2028 = vunpack.c.l.b16 %v2026
    %v2029 = vunpack.c.h.b16 %v2026
    %v2030 = vpack.c.b16 %v2028, %v2028
    %v2031 = vpack.c.b16 %v2029, %v2029
    %2034 = vst [vmem:[#allocation2 + $0x4] sm:$0xf] %v2030
    %2035 = vst [vmem:[#allocation2 + $0x20] sm:$0xf] %v2031
    %s2036 = scalar_lea.vmem [#allocation6], 512
    %v2037 = vld [vmem:[%s2036] sm:$0xf]
    %v2038 = vld [vmem:[%s2036 + $0x4] sm:$0xf]
    %v2039 = vld [vmem:[%s2036 + $0x8] sm:$0xf]
    %v2040 = vld [vmem:[%s2036 + $0xc] sm:$0xf]
    %v2041 = vld [vmem:[%s2036 + $0x10] sm:$0xf]
    %v2042 = vld [vmem:[%s2036 + $0x14] sm:$0xf]
    %v2043 = vld [vmem:[%s2036 + $0x18] sm:$0xf]
    %v2044 = vld [vmem:[%s2036 + $0x1c] sm:$0xf]
    %v2045 = vld [vmem:[%s2036 + $0x20] sm:$0xf]
    %v2046 = vld [vmem:[%s2036 + $0x24] sm:$0xf]
    %v2047 = vld [vmem:[%s2036 + $0x28] sm:$0xf]
    %v2048 = vld [vmem:[%s2036 + $0x2c] sm:$0xf]
    %v2049 = vld [vmem:[%s2036 + $0x30] sm:$0xf]
    %v2050 = vld [vmem:[%s2036 + $0x34] sm:$0xf]
    %v2051 = vld [vmem:[%s2036 + $0x38] sm:$0xf]
    %v2052 = vld [vmem:[%s2036 + $0x3c] sm:$0xf]
    %v2053 = vld [vmem:[%s2036 + $0x40] sm:$0xf]
    %v2054 = vld [vmem:[%s2036 + $0x44] sm:$0xf]
    %v2055 = vld [vmem:[%s2036 + $0x48] sm:$0xf]
    %v2056 = vld [vmem:[%s2036 + $0x4c] sm:$0xf]
    %v2057 = vld [vmem:[%s2036 + $0x50] sm:$0xf]
    %v2058 = vld [vmem:[%s2036 + $0x54] sm:$0xf]
    %v2059 = vld [vmem:[%s2036 + $0x58] sm:$0xf]
    %v2060 = vld [vmem:[%s2036 + $0x5c] sm:$0xf]
    %v2061 = vld [vmem:[%s2036 + $0x60] sm:$0xf]
    %v2062 = vld [vmem:[%s2036 + $0x64] sm:$0xf]
    %v2063 = vld [vmem:[%s2036 + $0x68] sm:$0xf]
    %v2064 = vld [vmem:[%s2036 + $0x6c] sm:$0xf]
    %v2065 = vld [vmem:[%s2036 + $0x70] sm:$0xf]
    %v2066 = vld [vmem:[%s2036 + $0x74] sm:$0xf]
    %v2067 = vld [vmem:[%s2036 + $0x78] sm:$0xf]
    %v2068 = vld [vmem:[%s2036 + $0x7c] sm:$0xf]
    %v2069 = vld [vmem:[%s2036 + $0x80] sm:$0xf]
    %v2070 = vld [vmem:[%s2036 + $0x84] sm:$0xf]
    %v2071 = vld [vmem:[%s2036 + $0x88] sm:$0xf]
    %v2072 = vld [vmem:[%s2036 + $0x8c] sm:$0xf]
    %v2073 = vld [vmem:[%s2036 + $0x90] sm:$0xf]
    %v2074 = vld [vmem:[%s2036 + $0x94] sm:$0xf]
    %v2075 = vld [vmem:[%s2036 + $0x98] sm:$0xf]
    %v2076 = vld [vmem:[%s2036 + $0x9c] sm:$0xf]
    %v2077 = vld [vmem:[%s2036 + $0xa0] sm:$0xf]
    %v2078 = vld [vmem:[%s2036 + $0xa4] sm:$0xf]
    %v2079 = vld [vmem:[%s2036 + $0xa8] sm:$0xf]
    %v2080 = vld [vmem:[%s2036 + $0xac] sm:$0xf]
    %v2081 = vld [vmem:[%s2036 + $0xb0] sm:$0xf]
    %v2082 = vld [vmem:[%s2036 + $0xb4] sm:$0xf]
    %v2083 = vld [vmem:[%s2036 + $0xb8] sm:$0xf]
    %v2084 = vld [vmem:[%s2036 + $0xbc] sm:$0xf]
    %v2085 = vld [vmem:[%s2036 + $0xc0] sm:$0xf]
    %v2086 = vld [vmem:[%s2036 + $0xc4] sm:$0xf]
    %v2087 = vld [vmem:[%s2036 + $0xc8] sm:$0xf]
    %v2088 = vld [vmem:[%s2036 + $0xcc] sm:$0xf]
    %v2089 = vld [vmem:[%s2036 + $0xd0] sm:$0xf]
    %v2090 = vld [vmem:[%s2036 + $0xd4] sm:$0xf]
    %v2091 = vld [vmem:[%s2036 + $0xd8] sm:$0xf]
    %v2092 = vld [vmem:[%s2036 + $0xdc] sm:$0xf]
    %v2093 = vld [vmem:[%s2036 + $0xe0] sm:$0xf]
    %v2094 = vld [vmem:[%s2036 + $0xe4] sm:$0xf]
    %v2095 = vld [vmem:[%s2036 + $0xe8] sm:$0xf]
    %v2096 = vld [vmem:[%s2036 + $0xec] sm:$0xf]
    %v2097 = vld [vmem:[%s2036 + $0xf0] sm:$0xf]
    %v2098 = vld [vmem:[%s2036 + $0xf4] sm:$0xf]
    %v2099 = vld [vmem:[%s2036 + $0xf8] sm:$0xf]
    %v2100 = vld [vmem:[%s2036 + $0xfc] sm:$0xf]
    %v2101 = vld [vmem:[%s4 + $0x2] sm:$0x1]
    %v2103 = vlaneseq
    %v2104 = vshrl.u32 %v2103, 7
    %v2105 = vsub.s32 0, %v2104
    %v2106 = vrot.slane %v2101, %v2105
    %v2172 = vunpack.c.l.b16 %v2037
    %v2173 = vunpack.c.l.b16 %v2038
    %v2174 = vunpack.c.l.b16 %v2039
    %v2175 = vunpack.c.l.b16 %v2040
    %v2176 = vunpack.c.l.b16 %v2041
    %v2177 = vunpack.c.l.b16 %v2042
    %v2178 = vunpack.c.l.b16 %v2043
    %v2179 = vunpack.c.l.b16 %v2044
    %v2180 = vunpack.c.l.b16 %v2045
    %v2181 = vunpack.c.l.b16 %v2046
    %v2182 = vunpack.c.l.b16 %v2047
    %v2183 = vunpack.c.l.b16 %v2048
    %v2184 = vunpack.c.l.b16 %v2049
    %v2185 = vunpack.c.l.b16 %v2050
    %v2186 = vunpack.c.l.b16 %v2051
    %v2187 = vunpack.c.l.b16 %v2052
    %v2188 = vunpack.c.l.b16 %v2053
    %v2189 = vunpack.c.l.b16 %v2054
    %v2190 = vunpack.c.l.b16 %v2055
    %v2191 = vunpack.c.l.b16 %v2056
    %v2192 = vunpack.c.l.b16 %v2057
    %v2193 = vunpack.c.l.b16 %v2058
    %v2194 = vunpack.c.l.b16 %v2059
    %v2195 = vunpack.c.l.b16 %v2060
    %v2196 = vunpack.c.l.b16 %v2061
    %v2197 = vunpack.c.l.b16 %v2062
    %v2198 = vunpack.c.l.b16 %v2063
    %v2199 = vunpack.c.l.b16 %v2064
    %v2200 = vunpack.c.l.b16 %v2065
    %v2201 = vunpack.c.l.b16 %v2066
    %v2202 = vunpack.c.l.b16 %v2067
    %v2203 = vunpack.c.l.b16 %v2068
    %v2204 = vunpack.c.l.b16 %v2069
    %v2205 = vunpack.c.l.b16 %v2070
    %v2206 = vunpack.c.l.b16 %v2071
    %v2207 = vunpack.c.l.b16 %v2072
    %v2208 = vunpack.c.l.b16 %v2073
    %v2209 = vunpack.c.l.b16 %v2074
    %v2210 = vunpack.c.l.b16 %v2075
    %v2211 = vunpack.c.l.b16 %v2076
    %v2212 = vunpack.c.l.b16 %v2077
    %v2213 = vunpack.c.l.b16 %v2078
    %v2214 = vunpack.c.l.b16 %v2079
    %v2215 = vunpack.c.l.b16 %v2080
    %v2216 = vunpack.c.l.b16 %v2081
    %v2217 = vunpack.c.l.b16 %v2082
    %v2218 = vunpack.c.l.b16 %v2083
    %v2219 = vunpack.c.l.b16 %v2084
    %v2220 = vunpack.c.l.b16 %v2085
    %v2221 = vunpack.c.l.b16 %v2086
    %v2222 = vunpack.c.l.b16 %v2087
    %v2223 = vunpack.c.l.b16 %v2088
    %v2224 = vunpack.c.l.b16 %v2089
    %v2225 = vunpack.c.l.b16 %v2090
    %v2226 = vunpack.c.l.b16 %v2091
    %v2227 = vunpack.c.l.b16 %v2092
    %v2228 = vunpack.c.l.b16 %v2093
    %v2229 = vunpack.c.l.b16 %v2094
    %v2230 = vunpack.c.l.b16 %v2095
    %v2231 = vunpack.c.l.b16 %v2096
    %v2232 = vunpack.c.l.b16 %v2097
    %v2233 = vunpack.c.l.b16 %v2098
    %v2234 = vunpack.c.l.b16 %v2099
    %v2235 = vunpack.c.l.b16 %v2100
    %v2236 = vpack.c.b16 %v2173, %v2172
    %v2237 = vpack.c.b16 %v2175, %v2174
    %v2238 = vpack.c.b16 %v2177, %v2176
    %v2239 = vpack.c.b16 %v2179, %v2178
    %v2240 = vpack.c.b16 %v2181, %v2180
    %v2241 = vpack.c.b16 %v2183, %v2182
    %v2242 = vpack.c.b16 %v2185, %v2184
    %v2243 = vpack.c.b16 %v2187, %v2186
    %v2244 = vpack.c.b16 %v2189, %v2188
    %v2245 = vpack.c.b16 %v2191, %v2190
    %v2246 = vpack.c.b16 %v2193, %v2192
    %v2247 = vpack.c.b16 %v2195, %v2194
    %v2248 = vpack.c.b16 %v2197, %v2196
    %v2249 = vpack.c.b16 %v2199, %v2198
    %v2250 = vpack.c.b16 %v2201, %v2200
    %v2251 = vpack.c.b16 %v2203, %v2202
    %v2252 = vpack.c.b16 %v2205, %v2204
    %v2253 = vpack.c.b16 %v2207, %v2206
    %v2254 = vpack.c.b16 %v2209, %v2208
    %v2255 = vpack.c.b16 %v2211, %v2210
    %v2256 = vpack.c.b16 %v2213, %v2212
    %v2257 = vpack.c.b16 %v2215, %v2214
    %v2258 = vpack.c.b16 %v2217, %v2216
    %v2259 = vpack.c.b16 %v2219, %v2218
    %v2260 = vpack.c.b16 %v2221, %v2220
    %v2261 = vpack.c.b16 %v2223, %v2222
    %v2262 = vpack.c.b16 %v2225, %v2224
    %v2263 = vpack.c.b16 %v2227, %v2226
    %v2264 = vpack.c.b16 %v2229, %v2228
    %v2265 = vpack.c.b16 %v2231, %v2230
    %v2266 = vpack.c.b16 %v2233, %v2232
    %v2267 = vpack.c.b16 %v2235, %v2234
    %2300 = vmatprep.subr.bf16.mxu0 0
    %2301 = vmatpush1.bf16.msra.mxu0 %v2243
    %2302 = vmatprep.subr.bf16.mxu0 0
    %2303 = vmatpush1.bf16.msra.mxu0 %v2242
    %2304 = vmatprep.subr.bf16.mxu0 0
    %2305 = vmatpush1.bf16.msra.mxu0 %v2241
    %2306 = vmatprep.subr.bf16.mxu0 0
    %2307 = vmatpush1.bf16.msra.mxu0 %v2240
    %2308 = vmatprep.subr.bf16.mxu0 0
    %2309 = vmatpush1.bf16.msra.mxu0 %v2239
    %2310 = vmatprep.subr.bf16.mxu0 0
    %2311 = vmatpush1.bf16.msra.mxu0 %v2238
    %2312 = vmatprep.subr.bf16.mxu0 0
    %2313 = vmatpush1.bf16.msra.mxu0 %v2237
    %2314 = vmatprep.subr.bf16.mxu0 0
    %2315 = vmatpush1.bf16.msra.mxu0 %v2236
    %2316 = vmatprep.subr.bf16.mxu0 0
    %2317 = vmatpush2.bf16.msra.mxu0 %v2251
    %2318 = vmatprep.subr.bf16.mxu0 0
    %2319 = vmatpush2.bf16.msra.mxu0 %v2250
    %2320 = vmatprep.subr.bf16.mxu0 0
    %2321 = vmatpush2.bf16.msra.mxu0 %v2249
    %2322 = vmatprep.subr.bf16.mxu0 0
    %2323 = vmatpush2.bf16.msra.mxu0 %v2248
    %2324 = vmatprep.subr.bf16.mxu0 0
    %2325 = vmatpush2.bf16.msra.mxu0 %v2247
    %2326 = vmatprep.subr.bf16.mxu0 0
    %2327 = vmatpush2.bf16.msra.mxu0 %v2246
    %2328 = vmatprep.subr.bf16.mxu0 0
    %2329 = vmatpush2.bf16.msra.mxu0 %v2245
    %2330 = vmatprep.subr.bf16.mxu0 0
    %2331 = vmatpush2.bf16.msra.mxu0 %v2244
    %2332 = vmatprep.mubr.bf16.mxu0 %v1310
    %2333 = vmatmul.mubr.bf16.gmra.mxu0 %v1309
    %v2334 = vpop.f32.mrf.mxu0
    %v2335 = vadd.f32 %v2106, %v2334
    %v2336 = vpop.f32.mrf.mxu0
    %v2337 = vpop.f32.mrf.mxu0
    %v2338 = vadd.f32 %v2106, %v2337
    %v2339 = vpop.f32.mrf.mxu0
    %2340 = vdwg.mxu0
    %2341 = vmatprep.subr.bf16.mxu0 0
    %2342 = vmatpush1.bf16.msra.mxu0 %v2259
    %2343 = vmatprep.subr.bf16.mxu0 0
    %2344 = vmatpush1.bf16.msra.mxu0 %v2258
    %2345 = vmatprep.subr.bf16.mxu0 0
    %2346 = vmatpush1.bf16.msra.mxu0 %v2257
    %2347 = vmatprep.subr.bf16.mxu0 0
    %2348 = vmatpush1.bf16.msra.mxu0 %v2256
    %2349 = vmatprep.subr.bf16.mxu0 0
    %2350 = vmatpush1.bf16.msra.mxu0 %v2255
    %2351 = vmatprep.subr.bf16.mxu0 0
    %2352 = vmatpush1.bf16.msra.mxu0 %v2254
    %2353 = vmatprep.subr.bf16.mxu0 0
    %2354 = vmatpush1.bf16.msra.mxu0 %v2253
    %2355 = vmatprep.subr.bf16.mxu0 0
    %2356 = vmatpush1.bf16.msra.mxu0 %v2252
    %2357 = vmatprep.subr.bf16.mxu0 0
    %2358 = vmatpush2.bf16.msra.mxu0 %v2267
    %2359 = vmatprep.subr.bf16.mxu0 0
    %2360 = vmatpush2.bf16.msra.mxu0 %v2266
    %2361 = vmatprep.subr.bf16.mxu0 0
    %2362 = vmatpush2.bf16.msra.mxu0 %v2265
    %2363 = vmatprep.subr.bf16.mxu0 0
    %2364 = vmatpush2.bf16.msra.mxu0 %v2264
    %2365 = vmatprep.subr.bf16.mxu0 0
    %2366 = vmatpush2.bf16.msra.mxu0 %v2263
    %2367 = vmatprep.subr.bf16.mxu0 0
    %2368 = vmatpush2.bf16.msra.mxu0 %v2262
    %2369 = vmatprep.subr.bf16.mxu0 0
    %2370 = vmatpush2.bf16.msra.mxu0 %v2261
    %2371 = vmatprep.subr.bf16.mxu0 0
    %2372 = vmatpush2.bf16.msra.mxu0 %v2260
    %2373 = vmatprep.mubr.bf16.mxu0 %v1312
    %2374 = vmatmul.mubr.bf16.gmra.mxu0 %v1311
    %v2375 = vpop.f32.mrf.mxu0
    %v2376 = vadd.f32 %v2335, %v2375
    %v2377 = vpop.f32.mrf.mxu0
    %v2378 = vpop.f32.mrf.mxu0
    %v2379 = vadd.f32 %v2338, %v2378
    %v2380 = vpop.f32.mrf.mxu0
    %2381 = vdwg.mxu0
    %v2382 = vmax.f32 %v2376, 0.0
    %v2383 = vmax.f32 %v2379, 0.0
    %v2384 = vpack.c.bf16 %v2383, %v2382
    %v2386 = vunpack.c.l.b16 %v2384
    %v2387 = vunpack.c.h.b16 %v2384
    %v2388 = vpack.c.b16 %v2386, %v2386
    %v2389 = vpack.c.b16 %v2387, %v2387
    %2392 = vst [vmem:[#allocation2 + $0x8] sm:$0xf] %v2388
    %2393 = vst [vmem:[#allocation2 + $0x24] sm:$0xf] %v2389
    %s2394 = scalar_lea.vmem [#allocation6], 768
    %v2395 = vld [vmem:[%s2394] sm:$0xf]
    %v2396 = vld [vmem:[%s2394 + $0x4] sm:$0xf]
    %v2397 = vld [vmem:[%s2394 + $0x8] sm:$0xf]
    %v2398 = vld [vmem:[%s2394 + $0xc] sm:$0xf]
    %v2399 = vld [vmem:[%s2394 + $0x10] sm:$0xf]
    %v2400 = vld [vmem:[%s2394 + $0x14] sm:$0xf]
    %v2401 = vld [vmem:[%s2394 + $0x18] sm:$0xf]
    %v2402 = vld [vmem:[%s2394 + $0x1c] sm:$0xf]
    %v2403 = vld [vmem:[%s2394 + $0x20] sm:$0xf]
    %v2404 = vld [vmem:[%s2394 + $0x24] sm:$0xf]
    %v2405 = vld [vmem:[%s2394 + $0x28] sm:$0xf]
    %v2406 = vld [vmem:[%s2394 + $0x2c] sm:$0xf]
    %v2407 = vld [vmem:[%s2394 + $0x30] sm:$0xf]
    %v2408 = vld [vmem:[%s2394 + $0x34] sm:$0xf]
    %v2409 = vld [vmem:[%s2394 + $0x38] sm:$0xf]
    %v2410 = vld [vmem:[%s2394 + $0x3c] sm:$0xf]
    %v2411 = vld [vmem:[%s2394 + $0x40] sm:$0xf]
    %v2412 = vld [vmem:[%s2394 + $0x44] sm:$0xf]
    %v2413 = vld [vmem:[%s2394 + $0x48] sm:$0xf]
    %v2414 = vld [vmem:[%s2394 + $0x4c] sm:$0xf]
    %v2415 = vld [vmem:[%s2394 + $0x50] sm:$0xf]
    %v2416 = vld [vmem:[%s2394 + $0x54] sm:$0xf]
    %v2417 = vld [vmem:[%s2394 + $0x58] sm:$0xf]
    %v2418 = vld [vmem:[%s2394 + $0x5c] sm:$0xf]
    %v2419 = vld [vmem:[%s2394 + $0x60] sm:$0xf]
    %v2420 = vld [vmem:[%s2394 + $0x64] sm:$0xf]
    %v2421 = vld [vmem:[%s2394 + $0x68] sm:$0xf]
    %v2422 = vld [vmem:[%s2394 + $0x6c] sm:$0xf]
    %v2423 = vld [vmem:[%s2394 + $0x70] sm:$0xf]
    %v2424 = vld [vmem:[%s2394 + $0x74] sm:$0xf]
    %v2425 = vld [vmem:[%s2394 + $0x78] sm:$0xf]
    %v2426 = vld [vmem:[%s2394 + $0x7c] sm:$0xf]
    %v2427 = vld [vmem:[%s2394 + $0x80] sm:$0xf]
    %v2428 = vld [vmem:[%s2394 + $0x84] sm:$0xf]
    %v2429 = vld [vmem:[%s2394 + $0x88] sm:$0xf]
    %v2430 = vld [vmem:[%s2394 + $0x8c] sm:$0xf]
    %v2431 = vld [vmem:[%s2394 + $0x90] sm:$0xf]
    %v2432 = vld [vmem:[%s2394 + $0x94] sm:$0xf]
    %v2433 = vld [vmem:[%s2394 + $0x98] sm:$0xf]
    %v2434 = vld [vmem:[%s2394 + $0x9c] sm:$0xf]
    %v2435 = vld [vmem:[%s2394 + $0xa0] sm:$0xf]
    %v2436 = vld [vmem:[%s2394 + $0xa4] sm:$0xf]
    %v2437 = vld [vmem:[%s2394 + $0xa8] sm:$0xf]
    %v2438 = vld [vmem:[%s2394 + $0xac] sm:$0xf]
    %v2439 = vld [vmem:[%s2394 + $0xb0] sm:$0xf]
    %v2440 = vld [vmem:[%s2394 + $0xb4] sm:$0xf]
    %v2441 = vld [vmem:[%s2394 + $0xb8] sm:$0xf]
    %v2442 = vld [vmem:[%s2394 + $0xbc] sm:$0xf]
    %v2443 = vld [vmem:[%s2394 + $0xc0] sm:$0xf]
    %v2444 = vld [vmem:[%s2394 + $0xc4] sm:$0xf]
    %v2445 = vld [vmem:[%s2394 + $0xc8] sm:$0xf]
    %v2446 = vld [vmem:[%s2394 + $0xcc] sm:$0xf]
    %v2447 = vld [vmem:[%s2394 + $0xd0] sm:$0xf]
    %v2448 = vld [vmem:[%s2394 + $0xd4] sm:$0xf]
    %v2449 = vld [vmem:[%s2394 + $0xd8] sm:$0xf]
    %v2450 = vld [vmem:[%s2394 + $0xdc] sm:$0xf]
    %v2451 = vld [vmem:[%s2394 + $0xe0] sm:$0xf]
    %v2452 = vld [vmem:[%s2394 + $0xe4] sm:$0xf]
    %v2453 = vld [vmem:[%s2394 + $0xe8] sm:$0xf]
    %v2454 = vld [vmem:[%s2394 + $0xec] sm:$0xf]
    %v2455 = vld [vmem:[%s2394 + $0xf0] sm:$0xf]
    %v2456 = vld [vmem:[%s2394 + $0xf4] sm:$0xf]
    %v2457 = vld [vmem:[%s2394 + $0xf8] sm:$0xf]
    %v2458 = vld [vmem:[%s2394 + $0xfc] sm:$0xf]
    %v2459 = vld [vmem:[%s4 + $0x3] sm:$0x1]
    %v2461 = vlaneseq
    %v2462 = vshrl.u32 %v2461, 7
    %v2463 = vsub.s32 0, %v2462
    %v2464 = vrot.slane %v2459, %v2463
    %v2530 = vunpack.c.l.b16 %v2395
    %v2531 = vunpack.c.l.b16 %v2396
    %v2532 = vunpack.c.l.b16 %v2397
    %v2533 = vunpack.c.l.b16 %v2398
    %v2534 = vunpack.c.l.b16 %v2399
    %v2535 = vunpack.c.l.b16 %v2400
    %v2536 = vunpack.c.l.b16 %v2401
    %v2537 = vunpack.c.l.b16 %v2402
    %v2538 = vunpack.c.l.b16 %v2403
    %v2539 = vunpack.c.l.b16 %v2404
    %v2540 = vunpack.c.l.b16 %v2405
    %v2541 = vunpack.c.l.b16 %v2406
    %v2542 = vunpack.c.l.b16 %v2407
    %v2543 = vunpack.c.l.b16 %v2408
    %v2544 = vunpack.c.l.b16 %v2409
    %v2545 = vunpack.c.l.b16 %v2410
    %v2546 = vunpack.c.l.b16 %v2411
    %v2547 = vunpack.c.l.b16 %v2412
    %v2548 = vunpack.c.l.b16 %v2413
    %v2549 = vunpack.c.l.b16 %v2414
    %v2550 = vunpack.c.l.b16 %v2415
    %v2551 = vunpack.c.l.b16 %v2416
    %v2552 = vunpack.c.l.b16 %v2417
    %v2553 = vunpack.c.l.b16 %v2418
    %v2554 = vunpack.c.l.b16 %v2419
    %v2555 = vunpack.c.l.b16 %v2420
    %v2556 = vunpack.c.l.b16 %v2421
    %v2557 = vunpack.c.l.b16 %v2422
    %v2558 = vunpack.c.l.b16 %v2423
    %v2559 = vunpack.c.l.b16 %v2424
    %v2560 = vunpack.c.l.b16 %v2425
    %v2561 = vunpack.c.l.b16 %v2426
    %v2562 = vunpack.c.l.b16 %v2427
    %v2563 = vunpack.c.l.b16 %v2428
    %v2564 = vunpack.c.l.b16 %v2429
    %v2565 = vunpack.c.l.b16 %v2430
    %v2566 = vunpack.c.l.b16 %v2431
    %v2567 = vunpack.c.l.b16 %v2432
    %v2568 = vunpack.c.l.b16 %v2433
    %v2569 = vunpack.c.l.b16 %v2434
    %v2570 = vunpack.c.l.b16 %v2435
    %v2571 = vunpack.c.l.b16 %v2436
    %v2572 = vunpack.c.l.b16 %v2437
    %v2573 = vunpack.c.l.b16 %v2438
    %v2574 = vunpack.c.l.b16 %v2439
    %v2575 = vunpack.c.l.b16 %v2440
    %v2576 = vunpack.c.l.b16 %v2441
    %v2577 = vunpack.c.l.b16 %v2442
    %v2578 = vunpack.c.l.b16 %v2443
    %v2579 = vunpack.c.l.b16 %v2444
    %v2580 = vunpack.c.l.b16 %v2445
    %v2581 = vunpack.c.l.b16 %v2446
    %v2582 = vunpack.c.l.b16 %v2447
    %v2583 = vunpack.c.l.b16 %v2448
    %v2584 = vunpack.c.l.b16 %v2449
    %v2585 = vunpack.c.l.b16 %v2450
    %v2586 = vunpack.c.l.b16 %v2451
    %v2587 = vunpack.c.l.b16 %v2452
    %v2588 = vunpack.c.l.b16 %v2453
    %v2589 = vunpack.c.l.b16 %v2454
    %v2590 = vunpack.c.l.b16 %v2455
    %v2591 = vunpack.c.l.b16 %v2456
    %v2592 = vunpack.c.l.b16 %v2457
    %v2593 = vunpack.c.l.b16 %v2458
    %v2594 = vpack.c.b16 %v2531, %v2530
    %v2595 = vpack.c.b16 %v2533, %v2532
    %v2596 = vpack.c.b16 %v2535, %v2534
    %v2597 = vpack.c.b16 %v2537, %v2536
    %v2598 = vpack.c.b16 %v2539, %v2538
    %v2599 = vpack.c.b16 %v2541, %v2540
    %v2600 = vpack.c.b16 %v2543, %v2542
    %v2601 = vpack.c.b16 %v2545, %v2544
    %v2602 = vpack.c.b16 %v2547, %v2546
    %v2603 = vpack.c.b16 %v2549, %v2548
    %v2604 = vpack.c.b16 %v2551, %v2550
    %v2605 = vpack.c.b16 %v2553, %v2552
    %v2606 = vpack.c.b16 %v2555, %v2554
    %v2607 = vpack.c.b16 %v2557, %v2556
    %v2608 = vpack.c.b16 %v2559, %v2558
    %v2609 = vpack.c.b16 %v2561, %v2560
    %v2610 = vpack.c.b16 %v2563, %v2562
    %v2611 = vpack.c.b16 %v2565, %v2564
    %v2612 = vpack.c.b16 %v2567, %v2566
    %v2613 = vpack.c.b16 %v2569, %v2568
    %v2614 = vpack.c.b16 %v2571, %v2570
    %v2615 = vpack.c.b16 %v2573, %v2572
    %v2616 = vpack.c.b16 %v2575, %v2574
    %v2617 = vpack.c.b16 %v2577, %v2576
    %v2618 = vpack.c.b16 %v2579, %v2578
    %v2619 = vpack.c.b16 %v2581, %v2580
    %v2620 = vpack.c.b16 %v2583, %v2582
    %v2621 = vpack.c.b16 %v2585, %v2584
    %v2622 = vpack.c.b16 %v2587, %v2586
    %v2623 = vpack.c.b16 %v2589, %v2588
    %v2624 = vpack.c.b16 %v2591, %v2590
    %v2625 = vpack.c.b16 %v2593, %v2592
    %2658 = vmatprep.subr.bf16.mxu0 0
    %2659 = vmatpush1.bf16.msra.mxu0 %v2601
    %2660 = vmatprep.subr.bf16.mxu0 0
    %2661 = vmatpush1.bf16.msra.mxu0 %v2600
    %2662 = vmatprep.subr.bf16.mxu0 0
    %2663 = vmatpush1.bf16.msra.mxu0 %v2599
    %2664 = vmatprep.subr.bf16.mxu0 0
    %2665 = vmatpush1.bf16.msra.mxu0 %v2598
    %2666 = vmatprep.subr.bf16.mxu0 0
    %2667 = vmatpush1.bf16.msra.mxu0 %v2597
    %2668 = vmatprep.subr.bf16.mxu0 0
    %2669 = vmatpush1.bf16.msra.mxu0 %v2596
    %2670 = vmatprep.subr.bf16.mxu0 0
    %2671 = vmatpush1.bf16.msra.mxu0 %v2595
    %2672 = vmatprep.subr.bf16.mxu0 0
    %2673 = vmatpush1.bf16.msra.mxu0 %v2594
    %2674 = vmatprep.subr.bf16.mxu0 0
    %2675 = vmatpush2.bf16.msra.mxu0 %v2609
    %2676 = vmatprep.subr.bf16.mxu0 0
    %2677 = vmatpush2.bf16.msra.mxu0 %v2608
    %2678 = vmatprep.subr.bf16.mxu0 0
    %2679 = vmatpush2.bf16.msra.mxu0 %v2607
    %2680 = vmatprep.subr.bf16.mxu0 0
    %2681 = vmatpush2.bf16.msra.mxu0 %v2606
    %2682 = vmatprep.subr.bf16.mxu0 0
    %2683 = vmatpush2.bf16.msra.mxu0 %v2605
    %2684 = vmatprep.subr.bf16.mxu0 0
    %2685 = vmatpush2.bf16.msra.mxu0 %v2604
    %2686 = vmatprep.subr.bf16.mxu0 0
    %2687 = vmatpush2.bf16.msra.mxu0 %v2603
    %2688 = vmatprep.subr.bf16.mxu0 0
    %2689 = vmatpush2.bf16.msra.mxu0 %v2602
    %2690 = vmatprep.mubr.bf16.mxu0 %v1312
    %2691 = vmatmul.mubr.bf16.gmra.mxu0 %v1311
    %v2692 = vpop.f32.mrf.mxu0
    %v2693 = vadd.f32 %v2464, %v2692
    %v2694 = vpop.f32.mrf.mxu0
    %v2695 = vpop.f32.mrf.mxu0
    %v2696 = vadd.f32 %v2464, %v2695
    %v2697 = vpop.f32.mrf.mxu0
    %2698 = vdwg.mxu0
    %2699 = vmatprep.subr.bf16.mxu0 0
    %2700 = vmatpush1.bf16.msra.mxu0 %v2617
    %2701 = vmatprep.subr.bf16.mxu0 0
    %2702 = vmatpush1.bf16.msra.mxu0 %v2616
    %2703 = vmatprep.subr.bf16.mxu0 0
    %2704 = vmatpush1.bf16.msra.mxu0 %v2615
    %2705 = vmatprep.subr.bf16.mxu0 0
    %2706 = vmatpush1.bf16.msra.mxu0 %v2614
    %2707 = vmatprep.subr.bf16.mxu0 0
    %2708 = vmatpush1.bf16.msra.mxu0 %v2613
    %2709 = vmatprep.subr.bf16.mxu0 0
    %2710 = vmatpush1.bf16.msra.mxu0 %v2612
    %2711 = vmatprep.subr.bf16.mxu0 0
    %2712 = vmatpush1.bf16.msra.mxu0 %v2611
    %2713 = vmatprep.subr.bf16.mxu0 0
    %2714 = vmatpush1.bf16.msra.mxu0 %v2610
    %2715 = vmatprep.subr.bf16.mxu0 0
    %2716 = vmatpush2.bf16.msra.mxu0 %v2625
    %2717 = vmatprep.subr.bf16.mxu0 0
    %2718 = vmatpush2.bf16.msra.mxu0 %v2624
    %2719 = vmatprep.subr.bf16.mxu0 0
    %2720 = vmatpush2.bf16.msra.mxu0 %v2623
    %2721 = vmatprep.subr.bf16.mxu0 0
    %2722 = vmatpush2.bf16.msra.mxu0 %v2622
    %2723 = vmatprep.subr.bf16.mxu0 0
    %2724 = vmatpush2.bf16.msra.mxu0 %v2621
    %2725 = vmatprep.subr.bf16.mxu0 0
    %2726 = vmatpush2.bf16.msra.mxu0 %v2620
    %2727 = vmatprep.subr.bf16.mxu0 0
    %2728 = vmatpush2.bf16.msra.mxu0 %v2619
    %2729 = vmatprep.subr.bf16.mxu0 0
    %2730 = vmatpush2.bf16.msra.mxu0 %v2618
    %2731 = vmatprep.mubr.bf16.mxu0 %v1314
    %2732 = vmatmul.mubr.bf16.gmra.mxu0 %v1313
    %v2733 = vpop.f32.mrf.mxu0
    %v2734 = vadd.f32 %v2693, %v2733
    %v2735 = vpop.f32.mrf.mxu0
    %v2736 = vpop.f32.mrf.mxu0
    %v2737 = vadd.f32 %v2696, %v2736
    %v2738 = vpop.f32.mrf.mxu0
    %2739 = vdwg.mxu0
    %v2740 = vmax.f32 %v2734, 0.0
    %v2741 = vmax.f32 %v2737, 0.0
    %v2742 = vpack.c.bf16 %v2741, %v2740
    %v2744 = vunpack.c.l.b16 %v2742
    %v2745 = vunpack.c.h.b16 %v2742
    %v2746 = vpack.c.b16 %v2744, %v2744
    %v2747 = vpack.c.b16 %v2745, %v2745
    %2750 = vst [vmem:[#allocation2 + $0xc] sm:$0xf] %v2746
    %2751 = vst [vmem:[#allocation2 + $0x28] sm:$0xf] %v2747
    %s2752 = scalar_lea.vmem [#allocation6], 1024
    %v2753 = vld [vmem:[%s2752] sm:$0xf]
    %v2754 = vld [vmem:[%s2752 + $0x4] sm:$0xf]
    %v2755 = vld [vmem:[%s2752 + $0x8] sm:$0xf]
    %v2756 = vld [vmem:[%s2752 + $0xc] sm:$0xf]
    %v2757 = vld [vmem:[%s2752 + $0x10] sm:$0xf]
    %v2758 = vld [vmem:[%s2752 + $0x14] sm:$0xf]
    %v2759 = vld [vmem:[%s2752 + $0x18] sm:$0xf]
    %v2760 = vld [vmem:[%s2752 + $0x1c] sm:$0xf]
    %v2761 = vld [vmem:[%s2752 + $0x20] sm:$0xf]
    %v2762 = vld [vmem:[%s2752 + $0x24] sm:$0xf]
    %v2763 = vld [vmem:[%s2752 + $0x28] sm:$0xf]
    %v2764 = vld [vmem:[%s2752 + $0x2c] sm:$0xf]
    %v2765 = vld [vmem:[%s2752 + $0x30] sm:$0xf]
    %v2766 = vld [vmem:[%s2752 + $0x34] sm:$0xf]
    %v2767 = vld [vmem:[%s2752 + $0x38] sm:$0xf]
    %v2768 = vld [vmem:[%s2752 + $0x3c] sm:$0xf]
    %v2769 = vld [vmem:[%s2752 + $0x40] sm:$0xf]
    %v2770 = vld [vmem:[%s2752 + $0x44] sm:$0xf]
    %v2771 = vld [vmem:[%s2752 + $0x48] sm:$0xf]
    %v2772 = vld [vmem:[%s2752 + $0x4c] sm:$0xf]
    %v2773 = vld [vmem:[%s2752 + $0x50] sm:$0xf]
    %v2774 = vld [vmem:[%s2752 + $0x54] sm:$0xf]
    %v2775 = vld [vmem:[%s2752 + $0x58] sm:$0xf]
    %v2776 = vld [vmem:[%s2752 + $0x5c] sm:$0xf]
    %v2777 = vld [vmem:[%s2752 + $0x60] sm:$0xf]
    %v2778 = vld [vmem:[%s2752 + $0x64] sm:$0xf]
    %v2779 = vld [vmem:[%s2752 + $0x68] sm:$0xf]
    %v2780 = vld [vmem:[%s2752 + $0x6c] sm:$0xf]
    %v2781 = vld [vmem:[%s2752 + $0x70] sm:$0xf]
    %v2782 = vld [vmem:[%s2752 + $0x74] sm:$0xf]
    %v2783 = vld [vmem:[%s2752 + $0x78] sm:$0xf]
    %v2784 = vld [vmem:[%s2752 + $0x7c] sm:$0xf]
    %v2785 = vld [vmem:[%s2752 + $0x80] sm:$0xf]
    %v2786 = vld [vmem:[%s2752 + $0x84] sm:$0xf]
    %v2787 = vld [vmem:[%s2752 + $0x88] sm:$0xf]
    %v2788 = vld [vmem:[%s2752 + $0x8c] sm:$0xf]
    %v2789 = vld [vmem:[%s2752 + $0x90] sm:$0xf]
    %v2790 = vld [vmem:[%s2752 + $0x94] sm:$0xf]
    %v2791 = vld [vmem:[%s2752 + $0x98] sm:$0xf]
    %v2792 = vld [vmem:[%s2752 + $0x9c] sm:$0xf]
    %v2793 = vld [vmem:[%s2752 + $0xa0] sm:$0xf]
    %v2794 = vld [vmem:[%s2752 + $0xa4] sm:$0xf]
    %v2795 = vld [vmem:[%s2752 + $0xa8] sm:$0xf]
    %v2796 = vld [vmem:[%s2752 + $0xac] sm:$0xf]
    %v2797 = vld [vmem:[%s2752 + $0xb0] sm:$0xf]
    %v2798 = vld [vmem:[%s2752 + $0xb4] sm:$0xf]
    %v2799 = vld [vmem:[%s2752 + $0xb8] sm:$0xf]
    %v2800 = vld [vmem:[%s2752 + $0xbc] sm:$0xf]
    %v2801 = vld [vmem:[%s2752 + $0xc0] sm:$0xf]
    %v2802 = vld [vmem:[%s2752 + $0xc4] sm:$0xf]
    %v2803 = vld [vmem:[%s2752 + $0xc8] sm:$0xf]
    %v2804 = vld [vmem:[%s2752 + $0xcc] sm:$0xf]
    %v2805 = vld [vmem:[%s2752 + $0xd0] sm:$0xf]
    %v2806 = vld [vmem:[%s2752 + $0xd4] sm:$0xf]
    %v2807 = vld [vmem:[%s2752 + $0xd8] sm:$0xf]
    %v2808 = vld [vmem:[%s2752 + $0xdc] sm:$0xf]
    %v2809 = vld [vmem:[%s2752 + $0xe0] sm:$0xf]
    %v2810 = vld [vmem:[%s2752 + $0xe4] sm:$0xf]
    %v2811 = vld [vmem:[%s2752 + $0xe8] sm:$0xf]
    %v2812 = vld [vmem:[%s2752 + $0xec] sm:$0xf]
    %v2813 = vld [vmem:[%s2752 + $0xf0] sm:$0xf]
    %v2814 = vld [vmem:[%s2752 + $0xf4] sm:$0xf]
    %v2815 = vld [vmem:[%s2752 + $0xf8] sm:$0xf]
    %v2816 = vld [vmem:[%s2752 + $0xfc] sm:$0xf]
    %v2817 = vld [vmem:[%s4 + $0x4] sm:$0x1]
    %v2819 = vlaneseq
    %v2820 = vshrl.u32 %v2819, 7
    %v2821 = vsub.s32 0, %v2820
    %v2822 = vrot.slane %v2817, %v2821
    %v2888 = vunpack.c.l.b16 %v2753
    %v2889 = vunpack.c.l.b16 %v2754
    %v2890 = vunpack.c.l.b16 %v2755
    %v2891 = vunpack.c.l.b16 %v2756
    %v2892 = vunpack.c.l.b16 %v2757
    %v2893 = vunpack.c.l.b16 %v2758
    %v2894 = vunpack.c.l.b16 %v2759
    %v2895 = vunpack.c.l.b16 %v2760
    %v2896 = vunpack.c.l.b16 %v2761
    %v2897 = vunpack.c.l.b16 %v2762
    %v2898 = vunpack.c.l.b16 %v2763
    %v2899 = vunpack.c.l.b16 %v2764
    %v2900 = vunpack.c.l.b16 %v2765
    %v2901 = vunpack.c.l.b16 %v2766
    %v2902 = vunpack.c.l.b16 %v2767
    %v2903 = vunpack.c.l.b16 %v2768
    %v2904 = vunpack.c.l.b16 %v2769
    %v2905 = vunpack.c.l.b16 %v2770
    %v2906 = vunpack.c.l.b16 %v2771
    %v2907 = vunpack.c.l.b16 %v2772
    %v2908 = vunpack.c.l.b16 %v2773
    %v2909 = vunpack.c.l.b16 %v2774
    %v2910 = vunpack.c.l.b16 %v2775
    %v2911 = vunpack.c.l.b16 %v2776
    %v2912 = vunpack.c.l.b16 %v2777
    %v2913 = vunpack.c.l.b16 %v2778
    %v2914 = vunpack.c.l.b16 %v2779
    %v2915 = vunpack.c.l.b16 %v2780
    %v2916 = vunpack.c.l.b16 %v2781
    %v2917 = vunpack.c.l.b16 %v2782
    %v2918 = vunpack.c.l.b16 %v2783
    %v2919 = vunpack.c.l.b16 %v2784
    %v2920 = vunpack.c.l.b16 %v2785
    %v2921 = vunpack.c.l.b16 %v2786
    %v2922 = vunpack.c.l.b16 %v2787
    %v2923 = vunpack.c.l.b16 %v2788
    %v2924 = vunpack.c.l.b16 %v2789
    %v2925 = vunpack.c.l.b16 %v2790
    %v2926 = vunpack.c.l.b16 %v2791
    %v2927 = vunpack.c.l.b16 %v2792
    %v2928 = vunpack.c.l.b16 %v2793
    %v2929 = vunpack.c.l.b16 %v2794
    %v2930 = vunpack.c.l.b16 %v2795
    %v2931 = vunpack.c.l.b16 %v2796
    %v2932 = vunpack.c.l.b16 %v2797
    %v2933 = vunpack.c.l.b16 %v2798
    %v2934 = vunpack.c.l.b16 %v2799
    %v2935 = vunpack.c.l.b16 %v2800
    %v2936 = vunpack.c.l.b16 %v2801
    %v2937 = vunpack.c.l.b16 %v2802
    %v2938 = vunpack.c.l.b16 %v2803
    %v2939 = vunpack.c.l.b16 %v2804
    %v2940 = vunpack.c.l.b16 %v2805
    %v2941 = vunpack.c.l.b16 %v2806
    %v2942 = vunpack.c.l.b16 %v2807
    %v2943 = vunpack.c.l.b16 %v2808
    %v2944 = vunpack.c.l.b16 %v2809
    %v2945 = vunpack.c.l.b16 %v2810
    %v2946 = vunpack.c.l.b16 %v2811
    %v2947 = vunpack.c.l.b16 %v2812
    %v2948 = vunpack.c.l.b16 %v2813
    %v2949 = vunpack.c.l.b16 %v2814
    %v2950 = vunpack.c.l.b16 %v2815
    %v2951 = vunpack.c.l.b16 %v2816
    %v2952 = vpack.c.b16 %v2889, %v2888
    %v2953 = vpack.c.b16 %v2891, %v2890
    %v2954 = vpack.c.b16 %v2893, %v2892
    %v2955 = vpack.c.b16 %v2895, %v2894
    %v2956 = vpack.c.b16 %v2897, %v2896
    %v2957 = vpack.c.b16 %v2899, %v2898
    %v2958 = vpack.c.b16 %v2901, %v2900
    %v2959 = vpack.c.b16 %v2903, %v2902
    %v2960 = vpack.c.b16 %v2905, %v2904
    %v2961 = vpack.c.b16 %v2907, %v2906
    %v2962 = vpack.c.b16 %v2909, %v2908
    %v2963 = vpack.c.b16 %v2911, %v2910
    %v2964 = vpack.c.b16 %v2913, %v2912
    %v2965 = vpack.c.b16 %v2915, %v2914
    %v2966 = vpack.c.b16 %v2917, %v2916
    %v2967 = vpack.c.b16 %v2919, %v2918
    %v2968 = vpack.c.b16 %v2921, %v2920
    %v2969 = vpack.c.b16 %v2923, %v2922
    %v2970 = vpack.c.b16 %v2925, %v2924
    %v2971 = vpack.c.b16 %v2927, %v2926
    %v2972 = vpack.c.b16 %v2929, %v2928
    %v2973 = vpack.c.b16 %v2931, %v2930
    %v2974 = vpack.c.b16 %v2933, %v2932
    %v2975 = vpack.c.b16 %v2935, %v2934
    %v2976 = vpack.c.b16 %v2937, %v2936
    %v2977 = vpack.c.b16 %v2939, %v2938
    %v2978 = vpack.c.b16 %v2941, %v2940
    %v2979 = vpack.c.b16 %v2943, %v2942
    %v2980 = vpack.c.b16 %v2945, %v2944
    %v2981 = vpack.c.b16 %v2947, %v2946
    %v2982 = vpack.c.b16 %v2949, %v2948
    %v2983 = vpack.c.b16 %v2951, %v2950
    %3016 = vmatprep.subr.bf16.mxu0 0
    %3017 = vmatpush1.bf16.msra.mxu0 %v2959
    %3018 = vmatprep.subr.bf16.mxu0 0
    %3019 = vmatpush1.bf16.msra.mxu0 %v2958
    %3020 = vmatprep.subr.bf16.mxu0 0
    %3021 = vmatpush1.bf16.msra.mxu0 %v2957
    %3022 = vmatprep.subr.bf16.mxu0 0
    %3023 = vmatpush1.bf16.msra.mxu0 %v2956
    %3024 = vmatprep.subr.bf16.mxu0 0
    %3025 = vmatpush1.bf16.msra.mxu0 %v2955
    %3026 = vmatprep.subr.bf16.mxu0 0
    %3027 = vmatpush1.bf16.msra.mxu0 %v2954
    %3028 = vmatprep.subr.bf16.mxu0 0
    %3029 = vmatpush1.bf16.msra.mxu0 %v2953
    %3030 = vmatprep.subr.bf16.mxu0 0
    %3031 = vmatpush1.bf16.msra.mxu0 %v2952
    %3032 = vmatprep.subr.bf16.mxu0 0
    %3033 = vmatpush2.bf16.msra.mxu0 %v2967
    %3034 = vmatprep.subr.bf16.mxu0 0
    %3035 = vmatpush2.bf16.msra.mxu0 %v2966
    %3036 = vmatprep.subr.bf16.mxu0 0
    %3037 = vmatpush2.bf16.msra.mxu0 %v2965
    %3038 = vmatprep.subr.bf16.mxu0 0
    %3039 = vmatpush2.bf16.msra.mxu0 %v2964
    %3040 = vmatprep.subr.bf16.mxu0 0
    %3041 = vmatpush2.bf16.msra.mxu0 %v2963
    %3042 = vmatprep.subr.bf16.mxu0 0
    %3043 = vmatpush2.bf16.msra.mxu0 %v2962
    %3044 = vmatprep.subr.bf16.mxu0 0
    %3045 = vmatpush2.bf16.msra.mxu0 %v2961
    %3046 = vmatprep.subr.bf16.mxu0 0
    %3047 = vmatpush2.bf16.msra.mxu0 %v2960
    %3048 = vmatprep.mubr.bf16.mxu0 %v1314
    %3049 = vmatmul.mubr.bf16.gmra.mxu0 %v1313
    %v3050 = vpop.f32.mrf.mxu0
    %v3051 = vadd.f32 %v2822, %v3050
    %v3052 = vpop.f32.mrf.mxu0
    %v3053 = vpop.f32.mrf.mxu0
    %v3054 = vadd.f32 %v2822, %v3053
    %v3055 = vpop.f32.mrf.mxu0
    %3056 = vdwg.mxu0
    %3057 = vmatprep.subr.bf16.mxu0 0
    %3058 = vmatpush1.bf16.msra.mxu0 %v2975
    %3059 = vmatprep.subr.bf16.mxu0 0
    %3060 = vmatpush1.bf16.msra.mxu0 %v2974
    %3061 = vmatprep.subr.bf16.mxu0 0
    %3062 = vmatpush1.bf16.msra.mxu0 %v2973
    %3063 = vmatprep.subr.bf16.mxu0 0
    %3064 = vmatpush1.bf16.msra.mxu0 %v2972
    %3065 = vmatprep.subr.bf16.mxu0 0
    %3066 = vmatpush1.bf16.msra.mxu0 %v2971
    %3067 = vmatprep.subr.bf16.mxu0 0
    %3068 = vmatpush1.bf16.msra.mxu0 %v2970
    %3069 = vmatprep.subr.bf16.mxu0 0
    %3070 = vmatpush1.bf16.msra.mxu0 %v2969
    %3071 = vmatprep.subr.bf16.mxu0 0
    %3072 = vmatpush1.bf16.msra.mxu0 %v2968
    %3073 = vmatprep.subr.bf16.mxu0 0
    %3074 = vmatpush2.bf16.msra.mxu0 %v2983
    %3075 = vmatprep.subr.bf16.mxu0 0
    %3076 = vmatpush2.bf16.msra.mxu0 %v2982
    %3077 = vmatprep.subr.bf16.mxu0 0
    %3078 = vmatpush2.bf16.msra.mxu0 %v2981
    %3079 = vmatprep.subr.bf16.mxu0 0
    %3080 = vmatpush2.bf16.msra.mxu0 %v2980
    %3081 = vmatprep.subr.bf16.mxu0 0
    %3082 = vmatpush2.bf16.msra.mxu0 %v2979
    %3083 = vmatprep.subr.bf16.mxu0 0
    %3084 = vmatpush2.bf16.msra.mxu0 %v2978
    %3085 = vmatprep.subr.bf16.mxu0 0
    %3086 = vmatpush2.bf16.msra.mxu0 %v2977
    %3087 = vmatprep.subr.bf16.mxu0 0
    %3088 = vmatpush2.bf16.msra.mxu0 %v2976
    %3089 = vmatprep.mubr.bf16.mxu0 %v1316
    %3090 = vmatmul.mubr.bf16.gmra.mxu0 %v1315
    %v3091 = vpop.f32.mrf.mxu0
    %v3092 = vadd.f32 %v3051, %v3091
    %v3093 = vpop.f32.mrf.mxu0
    %v3094 = vpop.f32.mrf.mxu0
    %v3095 = vadd.f32 %v3054, %v3094
    %v3096 = vpop.f32.mrf.mxu0
    %3097 = vdwg.mxu0
    %v3098 = vmax.f32 %v3092, 0.0
    %v3099 = vmax.f32 %v3095, 0.0
    %v3100 = vpack.c.bf16 %v3099, %v3098
    %v3102 = vunpack.c.l.b16 %v3100
    %v3103 = vunpack.c.h.b16 %v3100
    %v3104 = vpack.c.b16 %v3102, %v3102
    %v3105 = vpack.c.b16 %v3103, %v3103
    %3108 = vst [vmem:[#allocation2 + $0x10] sm:$0xf] %v3104
    %3109 = vst [vmem:[#allocation2 + $0x2c] sm:$0xf] %v3105
    %s3110 = scalar_lea.vmem [#allocation6], 1280
    %v3111 = vld [vmem:[%s3110] sm:$0xf]
    %v3112 = vld [vmem:[%s3110 + $0x4] sm:$0xf]
    %v3113 = vld [vmem:[%s3110 + $0x8] sm:$0xf]
    %v3114 = vld [vmem:[%s3110 + $0xc] sm:$0xf]
    %v3115 = vld [vmem:[%s3110 + $0x10] sm:$0xf]
    %v3116 = vld [vmem:[%s3110 + $0x14] sm:$0xf]
    %v3117 = vld [vmem:[%s3110 + $0x18] sm:$0xf]
    %v3118 = vld [vmem:[%s3110 + $0x1c] sm:$0xf]
    %v3119 = vld [vmem:[%s3110 + $0x20] sm:$0xf]
    %v3120 = vld [vmem:[%s3110 + $0x24] sm:$0xf]
    %v3121 = vld [vmem:[%s3110 + $0x28] sm:$0xf]
    %v3122 = vld [vmem:[%s3110 + $0x2c] sm:$0xf]
    %v3123 = vld [vmem:[%s3110 + $0x30] sm:$0xf]
    %v3124 = vld [vmem:[%s3110 + $0x34] sm:$0xf]
    %v3125 = vld [vmem:[%s3110 + $0x38] sm:$0xf]
    %v3126 = vld [vmem:[%s3110 + $0x3c] sm:$0xf]
    %v3127 = vld [vmem:[%s3110 + $0x40] sm:$0xf]
    %v3128 = vld [vmem:[%s3110 + $0x44] sm:$0xf]
    %v3129 = vld [vmem:[%s3110 + $0x48] sm:$0xf]
    %v3130 = vld [vmem:[%s3110 + $0x4c] sm:$0xf]
    %v3131 = vld [vmem:[%s3110 + $0x50] sm:$0xf]
    %v3132 = vld [vmem:[%s3110 + $0x54] sm:$0xf]
    %v3133 = vld [vmem:[%s3110 + $0x58] sm:$0xf]
    %v3134 = vld [vmem:[%s3110 + $0x5c] sm:$0xf]
    %v3135 = vld [vmem:[%s3110 + $0x60] sm:$0xf]
    %v3136 = vld [vmem:[%s3110 + $0x64] sm:$0xf]
    %v3137 = vld [vmem:[%s3110 + $0x68] sm:$0xf]
    %v3138 = vld [vmem:[%s3110 + $0x6c] sm:$0xf]
    %v3139 = vld [vmem:[%s3110 + $0x70] sm:$0xf]
    %v3140 = vld [vmem:[%s3110 + $0x74] sm:$0xf]
    %v3141 = vld [vmem:[%s3110 + $0x78] sm:$0xf]
    %v3142 = vld [vmem:[%s3110 + $0x7c] sm:$0xf]
    %v3143 = vld [vmem:[%s3110 + $0x80] sm:$0xf]
    %v3144 = vld [vmem:[%s3110 + $0x84] sm:$0xf]
    %v3145 = vld [vmem:[%s3110 + $0x88] sm:$0xf]
    %v3146 = vld [vmem:[%s3110 + $0x8c] sm:$0xf]
    %v3147 = vld [vmem:[%s3110 + $0x90] sm:$0xf]
    %v3148 = vld [vmem:[%s3110 + $0x94] sm:$0xf]
    %v3149 = vld [vmem:[%s3110 + $0x98] sm:$0xf]
    %v3150 = vld [vmem:[%s3110 + $0x9c] sm:$0xf]
    %v3151 = vld [vmem:[%s3110 + $0xa0] sm:$0xf]
    %v3152 = vld [vmem:[%s3110 + $0xa4] sm:$0xf]
    %v3153 = vld [vmem:[%s3110 + $0xa8] sm:$0xf]
    %v3154 = vld [vmem:[%s3110 + $0xac] sm:$0xf]
    %v3155 = vld [vmem:[%s3110 + $0xb0] sm:$0xf]
    %v3156 = vld [vmem:[%s3110 + $0xb4] sm:$0xf]
    %v3157 = vld [vmem:[%s3110 + $0xb8] sm:$0xf]
    %v3158 = vld [vmem:[%s3110 + $0xbc] sm:$0xf]
    %v3159 = vld [vmem:[%s3110 + $0xc0] sm:$0xf]
    %v3160 = vld [vmem:[%s3110 + $0xc4] sm:$0xf]
    %v3161 = vld [vmem:[%s3110 + $0xc8] sm:$0xf]
    %v3162 = vld [vmem:[%s3110 + $0xcc] sm:$0xf]
    %v3163 = vld [vmem:[%s3110 + $0xd0] sm:$0xf]
    %v3164 = vld [vmem:[%s3110 + $0xd4] sm:$0xf]
    %v3165 = vld [vmem:[%s3110 + $0xd8] sm:$0xf]
    %v3166 = vld [vmem:[%s3110 + $0xdc] sm:$0xf]
    %v3167 = vld [vmem:[%s3110 + $0xe0] sm:$0xf]
    %v3168 = vld [vmem:[%s3110 + $0xe4] sm:$0xf]
    %v3169 = vld [vmem:[%s3110 + $0xe8] sm:$0xf]
    %v3170 = vld [vmem:[%s3110 + $0xec] sm:$0xf]
    %v3171 = vld [vmem:[%s3110 + $0xf0] sm:$0xf]
    %v3172 = vld [vmem:[%s3110 + $0xf4] sm:$0xf]
    %v3173 = vld [vmem:[%s3110 + $0xf8] sm:$0xf]
    %v3174 = vld [vmem:[%s3110 + $0xfc] sm:$0xf]
    %v3175 = vld [vmem:[%s4 + $0x5] sm:$0x1]
    %v3177 = vlaneseq
    %v3178 = vshrl.u32 %v3177, 7
    %v3179 = vsub.s32 0, %v3178
    %v3180 = vrot.slane %v3175, %v3179
    %v3246 = vunpack.c.l.b16 %v3111
    %v3247 = vunpack.c.l.b16 %v3112
    %v3248 = vunpack.c.l.b16 %v3113
    %v3249 = vunpack.c.l.b16 %v3114
    %v3250 = vunpack.c.l.b16 %v3115
    %v3251 = vunpack.c.l.b16 %v3116
    %v3252 = vunpack.c.l.b16 %v3117
    %v3253 = vunpack.c.l.b16 %v3118
    %v3254 = vunpack.c.l.b16 %v3119
    %v3255 = vunpack.c.l.b16 %v3120
    %v3256 = vunpack.c.l.b16 %v3121
    %v3257 = vunpack.c.l.b16 %v3122
    %v3258 = vunpack.c.l.b16 %v3123
    %v3259 = vunpack.c.l.b16 %v3124
    %v3260 = vunpack.c.l.b16 %v3125
    %v3261 = vunpack.c.l.b16 %v3126
    %v3262 = vunpack.c.l.b16 %v3127
    %v3263 = vunpack.c.l.b16 %v3128
    %v3264 = vunpack.c.l.b16 %v3129
    %v3265 = vunpack.c.l.b16 %v3130
    %v3266 = vunpack.c.l.b16 %v3131
    %v3267 = vunpack.c.l.b16 %v3132
    %v3268 = vunpack.c.l.b16 %v3133
    %v3269 = vunpack.c.l.b16 %v3134
    %v3270 = vunpack.c.l.b16 %v3135
    %v3271 = vunpack.c.l.b16 %v3136
    %v3272 = vunpack.c.l.b16 %v3137
    %v3273 = vunpack.c.l.b16 %v3138
    %v3274 = vunpack.c.l.b16 %v3139
    %v3275 = vunpack.c.l.b16 %v3140
    %v3276 = vunpack.c.l.b16 %v3141
    %v3277 = vunpack.c.l.b16 %v3142
    %v3278 = vunpack.c.l.b16 %v3143
    %v3279 = vunpack.c.l.b16 %v3144
    %v3280 = vunpack.c.l.b16 %v3145
    %v3281 = vunpack.c.l.b16 %v3146
    %v3282 = vunpack.c.l.b16 %v3147
    %v3283 = vunpack.c.l.b16 %v3148
    %v3284 = vunpack.c.l.b16 %v3149
    %v3285 = vunpack.c.l.b16 %v3150
    %v3286 = vunpack.c.l.b16 %v3151
    %v3287 = vunpack.c.l.b16 %v3152
    %v3288 = vunpack.c.l.b16 %v3153
    %v3289 = vunpack.c.l.b16 %v3154
    %v3290 = vunpack.c.l.b16 %v3155
    %v3291 = vunpack.c.l.b16 %v3156
    %v3292 = vunpack.c.l.b16 %v3157
    %v3293 = vunpack.c.l.b16 %v3158
    %v3294 = vunpack.c.l.b16 %v3159
    %v3295 = vunpack.c.l.b16 %v3160
    %v3296 = vunpack.c.l.b16 %v3161
    %v3297 = vunpack.c.l.b16 %v3162
    %v3298 = vunpack.c.l.b16 %v3163
    %v3299 = vunpack.c.l.b16 %v3164
    %v3300 = vunpack.c.l.b16 %v3165
    %v3301 = vunpack.c.l.b16 %v3166
    %v3302 = vunpack.c.l.b16 %v3167
    %v3303 = vunpack.c.l.b16 %v3168
    %v3304 = vunpack.c.l.b16 %v3169
    %v3305 = vunpack.c.l.b16 %v3170
    %v3306 = vunpack.c.l.b16 %v3171
    %v3307 = vunpack.c.l.b16 %v3172
    %v3308 = vunpack.c.l.b16 %v3173
    %v3309 = vunpack.c.l.b16 %v3174
    %v3310 = vpack.c.b16 %v3247, %v3246
    %v3311 = vpack.c.b16 %v3249, %v3248
    %v3312 = vpack.c.b16 %v3251, %v3250
    %v3313 = vpack.c.b16 %v3253, %v3252
    %v3314 = vpack.c.b16 %v3255, %v3254
    %v3315 = vpack.c.b16 %v3257, %v3256
    %v3316 = vpack.c.b16 %v3259, %v3258
    %v3317 = vpack.c.b16 %v3261, %v3260
    %v3318 = vpack.c.b16 %v3263, %v3262
    %v3319 = vpack.c.b16 %v3265, %v3264
    %v3320 = vpack.c.b16 %v3267, %v3266
    %v3321 = vpack.c.b16 %v3269, %v3268
    %v3322 = vpack.c.b16 %v3271, %v3270
    %v3323 = vpack.c.b16 %v3273, %v3272
    %v3324 = vpack.c.b16 %v3275, %v3274
    %v3325 = vpack.c.b16 %v3277, %v3276
    %v3326 = vpack.c.b16 %v3279, %v3278
    %v3327 = vpack.c.b16 %v3281, %v3280
    %v3328 = vpack.c.b16 %v3283, %v3282
    %v3329 = vpack.c.b16 %v3285, %v3284
    %v3330 = vpack.c.b16 %v3287, %v3286
    %v3331 = vpack.c.b16 %v3289, %v3288
    %v3332 = vpack.c.b16 %v3291, %v3290
    %v3333 = vpack.c.b16 %v3293, %v3292
    %v3334 = vpack.c.b16 %v3295, %v3294
    %v3335 = vpack.c.b16 %v3297, %v3296
    %v3336 = vpack.c.b16 %v3299, %v3298
    %v3337 = vpack.c.b16 %v3301, %v3300
    %v3338 = vpack.c.b16 %v3303, %v3302
    %v3339 = vpack.c.b16 %v3305, %v3304
    %v3340 = vpack.c.b16 %v3307, %v3306
    %v3341 = vpack.c.b16 %v3309, %v3308
    %3374 = vmatprep.subr.bf16.mxu0 0
    %3375 = vmatpush1.bf16.msra.mxu0 %v3317
    %3376 = vmatprep.subr.bf16.mxu0 0
    %3377 = vmatpush1.bf16.msra.mxu0 %v3316
    %3378 = vmatprep.subr.bf16.mxu0 0
    %3379 = vmatpush1.bf16.msra.mxu0 %v3315
    %3380 = vmatprep.subr.bf16.mxu0 0
    %3381 = vmatpush1.bf16.msra.mxu0 %v3314
    %3382 = vmatprep.subr.bf16.mxu0 0
    %3383 = vmatpush1.bf16.msra.mxu0 %v3313
    %3384 = vmatprep.subr.bf16.mxu0 0
    %3385 = vmatpush1.bf16.msra.mxu0 %v3312
    %3386 = vmatprep.subr.bf16.mxu0 0
    %3387 = vmatpush1.bf16.msra.mxu0 %v3311
    %3388 = vmatprep.subr.bf16.mxu0 0
    %3389 = vmatpush1.bf16.msra.mxu0 %v3310
    %3390 = vmatprep.subr.bf16.mxu0 0
    %3391 = vmatpush2.bf16.msra.mxu0 %v3325
    %3392 = vmatprep.subr.bf16.mxu0 0
    %3393 = vmatpush2.bf16.msra.mxu0 %v3324
    %3394 = vmatprep.subr.bf16.mxu0 0
    %3395 = vmatpush2.bf16.msra.mxu0 %v3323
    %3396 = vmatprep.subr.bf16.mxu0 0
    %3397 = vmatpush2.bf16.msra.mxu0 %v3322
    %3398 = vmatprep.subr.bf16.mxu0 0
    %3399 = vmatpush2.bf16.msra.mxu0 %v3321
    %3400 = vmatprep.subr.bf16.mxu0 0
    %3401 = vmatpush2.bf16.msra.mxu0 %v3320
    %3402 = vmatprep.subr.bf16.mxu0 0
    %3403 = vmatpush2.bf16.msra.mxu0 %v3319
    %3404 = vmatprep.subr.bf16.mxu0 0
    %3405 = vmatpush2.bf16.msra.mxu0 %v3318
    %3406 = vmatprep.mubr.bf16.mxu0 %v1316
    %3407 = vmatmul.mubr.bf16.gmra.mxu0 %v1315
    %v3408 = vpop.f32.mrf.mxu0
    %v3409 = vadd.f32 %v3180, %v3408
    %v3410 = vpop.f32.mrf.mxu0
    %v3411 = vpop.f32.mrf.mxu0
    %v3412 = vadd.f32 %v3180, %v3411
    %v3413 = vpop.f32.mrf.mxu0
    %3414 = vdwg.mxu0
    %3415 = vmatprep.subr.bf16.mxu0 0
    %3416 = vmatpush1.bf16.msra.mxu0 %v3333
    %3417 = vmatprep.subr.bf16.mxu0 0
    %3418 = vmatpush1.bf16.msra.mxu0 %v3332
    %3419 = vmatprep.subr.bf16.mxu0 0
    %3420 = vmatpush1.bf16.msra.mxu0 %v3331
    %3421 = vmatprep.subr.bf16.mxu0 0
    %3422 = vmatpush1.bf16.msra.mxu0 %v3330
    %3423 = vmatprep.subr.bf16.mxu0 0
    %3424 = vmatpush1.bf16.msra.mxu0 %v3329
    %3425 = vmatprep.subr.bf16.mxu0 0
    %3426 = vmatpush1.bf16.msra.mxu0 %v3328
    %3427 = vmatprep.subr.bf16.mxu0 0
    %3428 = vmatpush1.bf16.msra.mxu0 %v3327
    %3429 = vmatprep.subr.bf16.mxu0 0
    %3430 = vmatpush1.bf16.msra.mxu0 %v3326
    %3431 = vmatprep.subr.bf16.mxu0 0
    %3432 = vmatpush2.bf16.msra.mxu0 %v3341
    %3433 = vmatprep.subr.bf16.mxu0 0
    %3434 = vmatpush2.bf16.msra.mxu0 %v3340
    %3435 = vmatprep.subr.bf16.mxu0 0
    %3436 = vmatpush2.bf16.msra.mxu0 %v3339
    %3437 = vmatprep.subr.bf16.mxu0 0
    %3438 = vmatpush2.bf16.msra.mxu0 %v3338
    %3439 = vmatprep.subr.bf16.mxu0 0
    %3440 = vmatpush2.bf16.msra.mxu0 %v3337
    %3441 = vmatprep.subr.bf16.mxu0 0
    %3442 = vmatpush2.bf16.msra.mxu0 %v3336
    %3443 = vmatprep.subr.bf16.mxu0 0
    %3444 = vmatpush2.bf16.msra.mxu0 %v3335
    %3445 = vmatprep.subr.bf16.mxu0 0
    %3446 = vmatpush2.bf16.msra.mxu0 %v3334
    %3447 = vmatprep.mubr.bf16.mxu0 %v1318
    %3448 = vmatmul.mubr.bf16.gmra.mxu0 %v1317
    %v3449 = vpop.f32.mrf.mxu0
    %v3450 = vadd.f32 %v3409, %v3449
    %v3451 = vpop.f32.mrf.mxu0
    %v3452 = vpop.f32.mrf.mxu0
    %v3453 = vadd.f32 %v3412, %v3452
    %v3454 = vpop.f32.mrf.mxu0
    %3455 = vdwg.mxu0
    %v3456 = vmax.f32 %v3450, 0.0
    %v3457 = vmax.f32 %v3453, 0.0
    %v3458 = vpack.c.bf16 %v3457, %v3456
    %v3460 = vunpack.c.l.b16 %v3458
    %v3461 = vunpack.c.h.b16 %v3458
    %v3462 = vpack.c.b16 %v3460, %v3460
    %v3463 = vpack.c.b16 %v3461, %v3461
    %3466 = vst [vmem:[#allocation2 + $0x14] sm:$0xf] %v3462
    %3467 = vst [vmem:[#allocation2 + $0x30] sm:$0xf] %v3463
    %s3468 = scalar_lea.vmem [#allocation6], 1536
    %v3469 = vld [vmem:[%s3468] sm:$0xf]
    %v3470 = vld [vmem:[%s3468 + $0x4] sm:$0xf]
    %v3471 = vld [vmem:[%s3468 + $0x8] sm:$0xf]
    %v3472 = vld [vmem:[%s3468 + $0xc] sm:$0xf]
    %v3473 = vld [vmem:[%s3468 + $0x10] sm:$0xf]
    %v3474 = vld [vmem:[%s3468 + $0x14] sm:$0xf]
    %v3475 = vld [vmem:[%s3468 + $0x18] sm:$0xf]
    %v3476 = vld [vmem:[%s3468 + $0x1c] sm:$0xf]
    %v3477 = vld [vmem:[%s3468 + $0x20] sm:$0xf]
    %v3478 = vld [vmem:[%s3468 + $0x24] sm:$0xf]
    %v3479 = vld [vmem:[%s3468 + $0x28] sm:$0xf]
    %v3480 = vld [vmem:[%s3468 + $0x2c] sm:$0xf]
    %v3481 = vld [vmem:[%s3468 + $0x30] sm:$0xf]
    %v3482 = vld [vmem:[%s3468 + $0x34] sm:$0xf]
    %v3483 = vld [vmem:[%s3468 + $0x38] sm:$0xf]
    %v3484 = vld [vmem:[%s3468 + $0x3c] sm:$0xf]
    %v3485 = vld [vmem:[%s3468 + $0x40] sm:$0xf]
    %v3486 = vld [vmem:[%s3468 + $0x44] sm:$0xf]
    %v3487 = vld [vmem:[%s3468 + $0x48] sm:$0xf]
    %v3488 = vld [vmem:[%s3468 + $0x4c] sm:$0xf]
    %v3489 = vld [vmem:[%s3468 + $0x50] sm:$0xf]
    %v3490 = vld [vmem:[%s3468 + $0x54] sm:$0xf]
    %v3491 = vld [vmem:[%s3468 + $0x58] sm:$0xf]
    %v3492 = vld [vmem:[%s3468 + $0x5c] sm:$0xf]
    %v3493 = vld [vmem:[%s3468 + $0x60] sm:$0xf]
    %v3494 = vld [vmem:[%s3468 + $0x64] sm:$0xf]
    %v3495 = vld [vmem:[%s3468 + $0x68] sm:$0xf]
    %v3496 = vld [vmem:[%s3468 + $0x6c] sm:$0xf]
    %v3497 = vld [vmem:[%s3468 + $0x70] sm:$0xf]
    %v3498 = vld [vmem:[%s3468 + $0x74] sm:$0xf]
    %v3499 = vld [vmem:[%s3468 + $0x78] sm:$0xf]
    %v3500 = vld [vmem:[%s3468 + $0x7c] sm:$0xf]
    %v3501 = vld [vmem:[%s3468 + $0x80] sm:$0xf]
    %v3502 = vld [vmem:[%s3468 + $0x84] sm:$0xf]
    %v3503 = vld [vmem:[%s3468 + $0x88] sm:$0xf]
    %v3504 = vld [vmem:[%s3468 + $0x8c] sm:$0xf]
    %v3505 = vld [vmem:[%s3468 + $0x90] sm:$0xf]
    %v3506 = vld [vmem:[%s3468 + $0x94] sm:$0xf]
    %v3507 = vld [vmem:[%s3468 + $0x98] sm:$0xf]
    %v3508 = vld [vmem:[%s3468 + $0x9c] sm:$0xf]
    %v3509 = vld [vmem:[%s3468 + $0xa0] sm:$0xf]
    %v3510 = vld [vmem:[%s3468 + $0xa4] sm:$0xf]
    %v3511 = vld [vmem:[%s3468 + $0xa8] sm:$0xf]
    %v3512 = vld [vmem:[%s3468 + $0xac] sm:$0xf]
    %v3513 = vld [vmem:[%s3468 + $0xb0] sm:$0xf]
    %v3514 = vld [vmem:[%s3468 + $0xb4] sm:$0xf]
    %v3515 = vld [vmem:[%s3468 + $0xb8] sm:$0xf]
    %v3516 = vld [vmem:[%s3468 + $0xbc] sm:$0xf]
    %v3517 = vld [vmem:[%s3468 + $0xc0] sm:$0xf]
    %v3518 = vld [vmem:[%s3468 + $0xc4] sm:$0xf]
    %v3519 = vld [vmem:[%s3468 + $0xc8] sm:$0xf]
    %v3520 = vld [vmem:[%s3468 + $0xcc] sm:$0xf]
    %v3521 = vld [vmem:[%s3468 + $0xd0] sm:$0xf]
    %v3522 = vld [vmem:[%s3468 + $0xd4] sm:$0xf]
    %v3523 = vld [vmem:[%s3468 + $0xd8] sm:$0xf]
    %v3524 = vld [vmem:[%s3468 + $0xdc] sm:$0xf]
    %v3525 = vld [vmem:[%s3468 + $0xe0] sm:$0xf]
    %v3526 = vld [vmem:[%s3468 + $0xe4] sm:$0xf]
    %v3527 = vld [vmem:[%s3468 + $0xe8] sm:$0xf]
    %v3528 = vld [vmem:[%s3468 + $0xec] sm:$0xf]
    %v3529 = vld [vmem:[%s3468 + $0xf0] sm:$0xf]
    %v3530 = vld [vmem:[%s3468 + $0xf4] sm:$0xf]
    %v3531 = vld [vmem:[%s3468 + $0xf8] sm:$0xf]
    %v3532 = vld [vmem:[%s3468 + $0xfc] sm:$0xf]
    %v3533 = vld [vmem:[%s4 + $0x6] sm:$0x1]
    %v3535 = vlaneseq
    %v3536 = vshrl.u32 %v3535, 7
    %v3537 = vsub.s32 0, %v3536
    %v3538 = vrot.slane %v3533, %v3537
    %v3604 = vunpack.c.l.b16 %v3469
    %v3605 = vunpack.c.l.b16 %v3470
    %v3606 = vunpack.c.l.b16 %v3471
    %v3607 = vunpack.c.l.b16 %v3472
    %v3608 = vunpack.c.l.b16 %v3473
    %v3609 = vunpack.c.l.b16 %v3474
    %v3610 = vunpack.c.l.b16 %v3475
    %v3611 = vunpack.c.l.b16 %v3476
    %v3612 = vunpack.c.l.b16 %v3477
    %v3613 = vunpack.c.l.b16 %v3478
    %v3614 = vunpack.c.l.b16 %v3479
    %v3615 = vunpack.c.l.b16 %v3480
    %v3616 = vunpack.c.l.b16 %v3481
    %v3617 = vunpack.c.l.b16 %v3482
    %v3618 = vunpack.c.l.b16 %v3483
    %v3619 = vunpack.c.l.b16 %v3484
    %v3620 = vunpack.c.l.b16 %v3485
    %v3621 = vunpack.c.l.b16 %v3486
    %v3622 = vunpack.c.l.b16 %v3487
    %v3623 = vunpack.c.l.b16 %v3488
    %v3624 = vunpack.c.l.b16 %v3489
    %v3625 = vunpack.c.l.b16 %v3490
    %v3626 = vunpack.c.l.b16 %v3491
    %v3627 = vunpack.c.l.b16 %v3492
    %v3628 = vunpack.c.l.b16 %v3493
    %v3629 = vunpack.c.l.b16 %v3494
    %v3630 = vunpack.c.l.b16 %v3495
    %v3631 = vunpack.c.l.b16 %v3496
    %v3632 = vunpack.c.l.b16 %v3497
    %v3633 = vunpack.c.l.b16 %v3498
    %v3634 = vunpack.c.l.b16 %v3499
    %v3635 = vunpack.c.l.b16 %v3500
    %v3636 = vunpack.c.l.b16 %v3501
    %v3637 = vunpack.c.l.b16 %v3502
    %v3638 = vunpack.c.l.b16 %v3503
    %v3639 = vunpack.c.l.b16 %v3504
    %v3640 = vunpack.c.l.b16 %v3505
    %v3641 = vunpack.c.l.b16 %v3506
    %v3642 = vunpack.c.l.b16 %v3507
    %v3643 = vunpack.c.l.b16 %v3508
    %v3644 = vunpack.c.l.b16 %v3509
    %v3645 = vunpack.c.l.b16 %v3510
    %v3646 = vunpack.c.l.b16 %v3511
    %v3647 = vunpack.c.l.b16 %v3512
    %v3648 = vunpack.c.l.b16 %v3513
    %v3649 = vunpack.c.l.b16 %v3514
    %v3650 = vunpack.c.l.b16 %v3515
    %v3651 = vunpack.c.l.b16 %v3516
    %v3652 = vunpack.c.l.b16 %v3517
    %v3653 = vunpack.c.l.b16 %v3518
    %v3654 = vunpack.c.l.b16 %v3519
    %v3655 = vunpack.c.l.b16 %v3520
    %v3656 = vunpack.c.l.b16 %v3521
    %v3657 = vunpack.c.l.b16 %v3522
    %v3658 = vunpack.c.l.b16 %v3523
    %v3659 = vunpack.c.l.b16 %v3524
    %v3660 = vunpack.c.l.b16 %v3525
    %v3661 = vunpack.c.l.b16 %v3526
    %v3662 = vunpack.c.l.b16 %v3527
    %v3663 = vunpack.c.l.b16 %v3528
    %v3664 = vunpack.c.l.b16 %v3529
    %v3665 = vunpack.c.l.b16 %v3530
    %v3666 = vunpack.c.l.b16 %v3531
    %v3667 = vunpack.c.l.b16 %v3532
    %v3668 = vpack.c.b16 %v3605, %v3604
    %v3669 = vpack.c.b16 %v3607, %v3606
    %v3670 = vpack.c.b16 %v3609, %v3608
    %v3671 = vpack.c.b16 %v3611, %v3610
    %v3672 = vpack.c.b16 %v3613, %v3612
    %v3673 = vpack.c.b16 %v3615, %v3614
    %v3674 = vpack.c.b16 %v3617, %v3616
    %v3675 = vpack.c.b16 %v3619, %v3618
    %v3676 = vpack.c.b16 %v3621, %v3620
    %v3677 = vpack.c.b16 %v3623, %v3622
    %v3678 = vpack.c.b16 %v3625, %v3624
    %v3679 = vpack.c.b16 %v3627, %v3626
    %v3680 = vpack.c.b16 %v3629, %v3628
    %v3681 = vpack.c.b16 %v3631, %v3630
    %v3682 = vpack.c.b16 %v3633, %v3632
    %v3683 = vpack.c.b16 %v3635, %v3634
    %v3684 = vpack.c.b16 %v3637, %v3636
    %v3685 = vpack.c.b16 %v3639, %v3638
    %v3686 = vpack.c.b16 %v3641, %v3640
    %v3687 = vpack.c.b16 %v3643, %v3642
    %v3688 = vpack.c.b16 %v3645, %v3644
    %v3689 = vpack.c.b16 %v3647, %v3646
    %v3690 = vpack.c.b16 %v3649, %v3648
    %v3691 = vpack.c.b16 %v3651, %v3650
    %v3692 = vpack.c.b16 %v3653, %v3652
    %v3693 = vpack.c.b16 %v3655, %v3654
    %v3694 = vpack.c.b16 %v3657, %v3656
    %v3695 = vpack.c.b16 %v3659, %v3658
    %v3696 = vpack.c.b16 %v3661, %v3660
    %v3697 = vpack.c.b16 %v3663, %v3662
    %v3698 = vpack.c.b16 %v3665, %v3664
    %v3699 = vpack.c.b16 %v3667, %v3666
    %3732 = vmatprep.subr.bf16.mxu0 0
    %3733 = vmatpush1.bf16.msra.mxu0 %v3675
    %3734 = vmatprep.subr.bf16.mxu0 0
    %3735 = vmatpush1.bf16.msra.mxu0 %v3674
    %3736 = vmatprep.subr.bf16.mxu0 0
    %3737 = vmatpush1.bf16.msra.mxu0 %v3673
    %3738 = vmatprep.subr.bf16.mxu0 0
    %3739 = vmatpush1.bf16.msra.mxu0 %v3672
    %3740 = vmatprep.subr.bf16.mxu0 0
    %3741 = vmatpush1.bf16.msra.mxu0 %v3671
    %3742 = vmatprep.subr.bf16.mxu0 0
    %3743 = vmatpush1.bf16.msra.mxu0 %v3670
    %3744 = vmatprep.subr.bf16.mxu0 0
    %3745 = vmatpush1.bf16.msra.mxu0 %v3669
    %3746 = vmatprep.subr.bf16.mxu0 0
    %3747 = vmatpush1.bf16.msra.mxu0 %v3668
    %3748 = vmatprep.subr.bf16.mxu0 0
    %3749 = vmatpush2.bf16.msra.mxu0 %v3683
    %3750 = vmatprep.subr.bf16.mxu0 0
    %3751 = vmatpush2.bf16.msra.mxu0 %v3682
    %3752 = vmatprep.subr.bf16.mxu0 0
    %3753 = vmatpush2.bf16.msra.mxu0 %v3681
    %3754 = vmatprep.subr.bf16.mxu0 0
    %3755 = vmatpush2.bf16.msra.mxu0 %v3680
    %3756 = vmatprep.subr.bf16.mxu0 0
    %3757 = vmatpush2.bf16.msra.mxu0 %v3679
    %3758 = vmatprep.subr.bf16.mxu0 0
    %3759 = vmatpush2.bf16.msra.mxu0 %v3678
    %3760 = vmatprep.subr.bf16.mxu0 0
    %3761 = vmatpush2.bf16.msra.mxu0 %v3677
    %3762 = vmatprep.subr.bf16.mxu0 0
    %3763 = vmatpush2.bf16.msra.mxu0 %v3676
    %3764 = vmatprep.mubr.bf16.mxu0 %v1318
    %3765 = vmatmul.mubr.bf16.gmra.mxu0 %v1317
    %v3766 = vpop.f32.mrf.mxu0
    %v3767 = vadd.f32 %v3538, %v3766
    %v3768 = vpop.f32.mrf.mxu0
    %v3769 = vpop.f32.mrf.mxu0
    %v3770 = vadd.f32 %v3538, %v3769
    %v3771 = vpop.f32.mrf.mxu0
    %3772 = vdwg.mxu0
    %3773 = vmatprep.subr.bf16.mxu0 0
    %3774 = vmatpush1.bf16.msra.mxu0 %v3691
    %3775 = vmatprep.subr.bf16.mxu0 0
    %3776 = vmatpush1.bf16.msra.mxu0 %v3690
    %3777 = vmatprep.subr.bf16.mxu0 0
    %3778 = vmatpush1.bf16.msra.mxu0 %v3689
    %3779 = vmatprep.subr.bf16.mxu0 0
    %3780 = vmatpush1.bf16.msra.mxu0 %v3688
    %3781 = vmatprep.subr.bf16.mxu0 0
    %3782 = vmatpush1.bf16.msra.mxu0 %v3687
    %3783 = vmatprep.subr.bf16.mxu0 0
    %3784 = vmatpush1.bf16.msra.mxu0 %v3686
    %3785 = vmatprep.subr.bf16.mxu0 0
    %3786 = vmatpush1.bf16.msra.mxu0 %v3685
    %3787 = vmatprep.subr.bf16.mxu0 0
    %3788 = vmatpush1.bf16.msra.mxu0 %v3684
    %3789 = vmatprep.subr.bf16.mxu0 0
    %3790 = vmatpush2.bf16.msra.mxu0 %v3699
    %3791 = vmatprep.subr.bf16.mxu0 0
    %3792 = vmatpush2.bf16.msra.mxu0 %v3698
    %3793 = vmatprep.subr.bf16.mxu0 0
    %3794 = vmatpush2.bf16.msra.mxu0 %v3697
    %3795 = vmatprep.subr.bf16.mxu0 0
    %3796 = vmatpush2.bf16.msra.mxu0 %v3696
    %3797 = vmatprep.subr.bf16.mxu0 0
    %3798 = vmatpush2.bf16.msra.mxu0 %v3695
    %3799 = vmatprep.subr.bf16.mxu0 0
    %3800 = vmatpush2.bf16.msra.mxu0 %v3694
    %3801 = vmatprep.subr.bf16.mxu0 0
    %3802 = vmatpush2.bf16.msra.mxu0 %v3693
    %3803 = vmatprep.subr.bf16.mxu0 0
    %3804 = vmatpush2.bf16.msra.mxu0 %v3692
    %3805 = vmatprep.mubr.bf16.mxu0 %v1320
    %3806 = vmatmul.mubr.bf16.gmra.mxu0 %v1319
    %v3807 = vpop.f32.mrf.mxu0
    %v3808 = vadd.f32 %v3767, %v3807
    %v3809 = vpop.f32.mrf.mxu0
    %v3810 = vpop.f32.mrf.mxu0
    %v3811 = vadd.f32 %v3770, %v3810
    %v3812 = vpop.f32.mrf.mxu0
    %3813 = vdwg.mxu0
    %v3814 = vmax.f32 %v3808, 0.0
    %v3815 = vmax.f32 %v3811, 0.0
    %v3816 = vpack.c.bf16 %v3815, %v3814
    %v3818 = vunpack.c.l.b16 %v3816
    %v3819 = vunpack.c.h.b16 %v3816
    %v3820 = vpack.c.b16 %v3818, %v3818
    %v3821 = vpack.c.b16 %v3819, %v3819
    %3824 = vst [vmem:[#allocation2 + $0x18] sm:$0xf] %v3820
    %3825 = vst [vmem:[#allocation2 + $0x34] sm:$0xf] %v3821
    %v3826 = vld [vmem:[#allocation2] sm:$0xff]
    %v3827 = vld [vmem:[#allocation2 + $0x8] sm:$0xff]
    %v3828 = vld [vmem:[#allocation2 + $0x10] sm:$0xff]
    %v3829 = vld [vmem:[#allocation2 + $0x18] sm:$0xf]
    %v3830 = vld [vmem:[#allocation2 + $0x1c] sm:$0xff]
    %v3831 = vld [vmem:[#allocation2 + $0x24] sm:$0xff]
    %v3832 = vld [vmem:[#allocation2 + $0x2c] sm:$0xff]
    %v3833 = vld [vmem:[#allocation2 + $0x34] sm:$0xf]
    %v3834 = vld [vmem:[#allocation8] sm:$0xf]
    %v3835 = vld [vmem:[#allocation8 + $0x4] sm:$0xf]
    %v3836 = vld [vmem:[#allocation8 + $0x8] sm:$0xf]
    %v3837 = vld [vmem:[#allocation8 + $0xc] sm:$0xf]
    %v3838 = vld [vmem:[#allocation8 + $0x10] sm:$0xf]
    %v3839 = vld [vmem:[#allocation8 + $0x14] sm:$0xf]
    %v3840 = vld [vmem:[#allocation8 + $0x18] sm:$0xf]
    %v3841 = vld [vmem:[#allocation8 + $0x1c] sm:$0xf]
    %v3842 = vld [vmem:[#allocation8 + $0x20] sm:$0xf]
    %v3843 = vld [vmem:[#allocation8 + $0x24] sm:$0xf]
    %v3844 = vld [vmem:[#allocation8 + $0x28] sm:$0xf]
    %v3845 = vld [vmem:[#allocation8 + $0x2c] sm:$0xf]
    %v3846 = vld [vmem:[#allocation8 + $0x30] sm:$0xf]
    %v3847 = vld [vmem:[#allocation8 + $0x34] sm:$0xf]
    %v3848 = vld [vmem:[#allocation8 + $0x38] sm:$0xf]
    %v3849 = vld [vmem:[#allocation8 + $0x3c] sm:$0xf]
    %v3850 = vld [vmem:[#allocation8 + $0x40] sm:$0xf]
    %v3851 = vld [vmem:[#allocation8 + $0x44] sm:$0xf]
    %v3852 = vld [vmem:[#allocation8 + $0x48] sm:$0xf]
    %v3853 = vld [vmem:[#allocation8 + $0x4c] sm:$0xf]
    %v3854 = vld [vmem:[#allocation8 + $0x50] sm:$0xf]
    %v3855 = vld [vmem:[#allocation8 + $0x54] sm:$0xf]
    %v3856 = vld [vmem:[#allocation8 + $0x58] sm:$0xf]
    %v3857 = vld [vmem:[#allocation8 + $0x5c] sm:$0xf]
    %v3858 = vld [vmem:[#allocation8 + $0x60] sm:$0xf]
    %v3859 = vld [vmem:[#allocation8 + $0x64] sm:$0xf]
    %v3860 = vld [vmem:[#allocation8 + $0x68] sm:$0xf]
    %v3861 = vld [vmem:[#allocation8 + $0x6c] sm:$0xf]
    %v3862 = vld [vmem:[#allocation8 + $0x70] sm:$0xf]
    %v3863 = vld [vmem:[#allocation8 + $0x74] sm:$0xf]
    %v3864 = vld [vmem:[#allocation8 + $0x78] sm:$0xf]
    %v3865 = vld [vmem:[#allocation8 + $0x7c] sm:$0xf]
    %v3866 = vld [vmem:[#allocation8 + $0x80] sm:$0xf]
    %v3867 = vld [vmem:[#allocation8 + $0x84] sm:$0xf]
    %v3868 = vld [vmem:[#allocation8 + $0x88] sm:$0xf]
    %v3869 = vld [vmem:[#allocation8 + $0x8c] sm:$0xf]
    %v3870 = vld [vmem:[#allocation8 + $0x90] sm:$0xf]
    %v3871 = vld [vmem:[#allocation8 + $0x94] sm:$0xf]
    %v3872 = vld [vmem:[#allocation8 + $0x98] sm:$0xf]
    %v3873 = vld [vmem:[#allocation8 + $0x9c] sm:$0xf]
    %v3874 = vld [vmem:[#allocation8 + $0xa0] sm:$0xf]
    %v3875 = vld [vmem:[#allocation8 + $0xa4] sm:$0xf]
    %v3876 = vld [vmem:[#allocation8 + $0xa8] sm:$0xf]
    %v3877 = vld [vmem:[#allocation8 + $0xac] sm:$0xf]
    %v3878 = vld [vmem:[#allocation8 + $0xb0] sm:$0xf]
    %v3879 = vld [vmem:[#allocation8 + $0xb4] sm:$0xf]
    %v3880 = vld [vmem:[#allocation8 + $0xb8] sm:$0xf]
    %v3881 = vld [vmem:[#allocation8 + $0xbc] sm:$0xf]
    %v3882 = vld [vmem:[#allocation8 + $0xc0] sm:$0xf]
    %v3883 = vld [vmem:[#allocation8 + $0xc4] sm:$0xf]
    %v3884 = vld [vmem:[#allocation8 + $0xc8] sm:$0xf]
    %v3885 = vld [vmem:[#allocation8 + $0xcc] sm:$0xf]
    %v3886 = vld [vmem:[#allocation8 + $0xd0] sm:$0xf]
    %v3887 = vld [vmem:[#allocation8 + $0xd4] sm:$0xf]
    %v3888 = vld [vmem:[#allocation8 + $0xd8] sm:$0xf]
    %v3889 = vld [vmem:[#allocation8 + $0xdc] sm:$0xf]
    %v3890 = vld [vmem:[#allocation8 + $0xe0] sm:$0xf]
    %v3891 = vld [vmem:[#allocation8 + $0xe4] sm:$0xf]
    %v3892 = vld [vmem:[#allocation8 + $0xe8] sm:$0xf]
    %v3893 = vld [vmem:[#allocation8 + $0xec] sm:$0xf]
    %v3894 = vld [vmem:[#allocation8 + $0xf0] sm:$0xf]
    %v3895 = vld [vmem:[#allocation8 + $0xf4] sm:$0xf]
    %v3896 = vld [vmem:[#allocation8 + $0xf8] sm:$0xf]
    %v3897 = vld [vmem:[#allocation8 + $0xfc] sm:$0xf]
    %v3898 = vld [vmem:[#allocation8 + $0x100] sm:$0xf]
    %v3899 = vld [vmem:[#allocation8 + $0x104] sm:$0xf]
    %v3900 = vld [vmem:[#allocation8 + $0x108] sm:$0xf]
    %v3901 = vld [vmem:[#allocation8 + $0x10c] sm:$0xf]
    %v3902 = vld [vmem:[#allocation8 + $0x110] sm:$0xf]
    %v3903 = vld [vmem:[#allocation8 + $0x114] sm:$0xf]
    %v3904 = vld [vmem:[#allocation8 + $0x118] sm:$0xf]
    %v3905 = vld [vmem:[#allocation8 + $0x11c] sm:$0xf]
    %v3906 = vld [vmem:[#allocation8 + $0x120] sm:$0xf]
    %v3907 = vld [vmem:[#allocation8 + $0x124] sm:$0xf]
    %v3908 = vld [vmem:[#allocation8 + $0x128] sm:$0xf]
    %v3909 = vld [vmem:[#allocation8 + $0x12c] sm:$0xf]
    %v3910 = vld [vmem:[#allocation8 + $0x130] sm:$0xf]
    %v3911 = vld [vmem:[#allocation8 + $0x134] sm:$0xf]
    %v3912 = vld [vmem:[#allocation8 + $0x138] sm:$0xf]
    %v3913 = vld [vmem:[#allocation8 + $0x13c] sm:$0xf]
    %v3914 = vld [vmem:[#allocation8 + $0x140] sm:$0xf]
    %v3915 = vld [vmem:[#allocation8 + $0x144] sm:$0xf]
    %v3916 = vld [vmem:[#allocation8 + $0x148] sm:$0xf]
    %v3917 = vld [vmem:[#allocation8 + $0x14c] sm:$0xf]
    %v3918 = vld [vmem:[#allocation8 + $0x150] sm:$0xf]
    %v3919 = vld [vmem:[#allocation8 + $0x154] sm:$0xf]
    %v3920 = vld [vmem:[#allocation8 + $0x158] sm:$0xf]
    %v3921 = vld [vmem:[#allocation8 + $0x15c] sm:$0xf]
    %v3922 = vld [vmem:[#allocation8 + $0x160] sm:$0xf]
    %v3923 = vld [vmem:[#allocation8 + $0x164] sm:$0xf]
    %v3924 = vld [vmem:[#allocation8 + $0x168] sm:$0xf]
    %v3925 = vld [vmem:[#allocation8 + $0x16c] sm:$0xf]
    %v3926 = vld [vmem:[#allocation8 + $0x170] sm:$0xf]
    %v3927 = vld [vmem:[#allocation8 + $0x174] sm:$0xf]
    %v3928 = vld [vmem:[#allocation8 + $0x178] sm:$0xf]
    %v3929 = vld [vmem:[#allocation8 + $0x17c] sm:$0xf]
    %v3930 = vld [vmem:[#allocation8 + $0x180] sm:$0xf]
    %v3931 = vld [vmem:[#allocation8 + $0x184] sm:$0xf]
    %v3932 = vld [vmem:[#allocation8 + $0x188] sm:$0xf]
    %v3933 = vld [vmem:[#allocation8 + $0x18c] sm:$0xf]
    %v3934 = vld [vmem:[#allocation8 + $0x190] sm:$0xf]
    %v3935 = vld [vmem:[#allocation8 + $0x194] sm:$0xf]
    %v3936 = vld [vmem:[#allocation8 + $0x198] sm:$0xf]
    %v3937 = vld [vmem:[#allocation8 + $0x19c] sm:$0xf]
    %v3938 = vld [vmem:[#allocation8 + $0x1a0] sm:$0xf]
    %v3939 = vld [vmem:[#allocation8 + $0x1a4] sm:$0xf]
    %v3940 = vld [vmem:[#allocation8 + $0x1a8] sm:$0xf]
    %v3941 = vld [vmem:[#allocation8 + $0x1ac] sm:$0xf]
    %v3942 = vld [vmem:[#allocation8 + $0x1b0] sm:$0xf]
    %v3943 = vld [vmem:[#allocation8 + $0x1b4] sm:$0xf]
    %v3944 = vld [vmem:[#allocation8 + $0x1b8] sm:$0xf]
    %v3945 = vld [vmem:[#allocation8 + $0x1bc] sm:$0xf]
    %v3946 = vld [vmem:[%s6] sm:$0x1]
    %v3948 = vlaneseq
    %v3949 = vshrl.u32 %v3948, 7
    %v3950 = vsub.s32 0, %v3949
    %v3951 = vrot.slane %v3946, %v3950
    %v3961 = vunpack.c.l.b16 %v3826
    %v3962 = vunpack.c.h.b16 %v3826
    %v3963 = vunpack.c.l.b16 %v3827
    %v3964 = vunpack.c.h.b16 %v3827
    %v3965 = vunpack.c.l.b16 %v3828
    %v3966 = vunpack.c.h.b16 %v3828
    %v3967 = vunpack.c.l.b16 %v3829
    %v3968 = vunpack.c.l.b16 %v3830
    %v3969 = vunpack.c.h.b16 %v3830
    %v3970 = vunpack.c.l.b16 %v3831
    %v3971 = vunpack.c.h.b16 %v3831
    %v3972 = vunpack.c.l.b16 %v3832
    %v3973 = vunpack.c.h.b16 %v3832
    %v3974 = vunpack.c.l.b16 %v3833
    %v3975 = vpack.c.b16 %v3968, %v3961
    %v3976 = vpack.c.b16 %v3969, %v3962
    %v3977 = vpack.c.b16 %v3970, %v3963
    %v3978 = vpack.c.b16 %v3971, %v3964
    %v3979 = vpack.c.b16 %v3972, %v3965
    %v3980 = vpack.c.b16 %v3973, %v3966
    %v3981 = vpack.c.b16 %v3974, %v3967
    %v4101 = vunpack.c.l.b16 %v3834
    %v4102 = vunpack.c.l.b16 %v3835
    %v4103 = vunpack.c.l.b16 %v3836
    %v4104 = vunpack.c.l.b16 %v3837
    %v4105 = vunpack.c.l.b16 %v3838
    %v4106 = vunpack.c.l.b16 %v3839
    %v4107 = vunpack.c.l.b16 %v3840
    %v4108 = vunpack.c.l.b16 %v3841
    %v4109 = vunpack.c.l.b16 %v3842
    %v4110 = vunpack.c.l.b16 %v3843
    %v4111 = vunpack.c.l.b16 %v3844
    %v4112 = vunpack.c.l.b16 %v3845
    %v4113 = vunpack.c.l.b16 %v3846
    %v4114 = vunpack.c.l.b16 %v3847
    %v4115 = vunpack.c.l.b16 %v3848
    %v4116 = vunpack.c.l.b16 %v3849
    %v4117 = vunpack.c.l.b16 %v3850
    %v4118 = vunpack.c.l.b16 %v3851
    %v4119 = vunpack.c.l.b16 %v3852
    %v4120 = vunpack.c.l.b16 %v3853
    %v4121 = vunpack.c.l.b16 %v3854
    %v4122 = vunpack.c.l.b16 %v3855
    %v4123 = vunpack.c.l.b16 %v3856
    %v4124 = vunpack.c.l.b16 %v3857
    %v4125 = vunpack.c.l.b16 %v3858
    %v4126 = vunpack.c.l.b16 %v3859
    %v4127 = vunpack.c.l.b16 %v3860
    %v4128 = vunpack.c.l.b16 %v3861
    %v4129 = vunpack.c.l.b16 %v3862
    %v4130 = vunpack.c.l.b16 %v3863
    %v4131 = vunpack.c.l.b16 %v3864
    %v4132 = vunpack.c.l.b16 %v3865
    %v4133 = vunpack.c.l.b16 %v3866
    %v4134 = vunpack.c.l.b16 %v3867
    %v4135 = vunpack.c.l.b16 %v3868
    %v4136 = vunpack.c.l.b16 %v3869
    %v4137 = vunpack.c.l.b16 %v3870
    %v4138 = vunpack.c.l.b16 %v3871
    %v4139 = vunpack.c.l.b16 %v3872
    %v4140 = vunpack.c.l.b16 %v3873
    %v4141 = vunpack.c.l.b16 %v3874
    %v4142 = vunpack.c.l.b16 %v3875
    %v4143 = vunpack.c.l.b16 %v3876
    %v4144 = vunpack.c.l.b16 %v3877
    %v4145 = vunpack.c.l.b16 %v3878
    %v4146 = vunpack.c.l.b16 %v3879
    %v4147 = vunpack.c.l.b16 %v3880
    %v4148 = vunpack.c.l.b16 %v3881
    %v4149 = vunpack.c.l.b16 %v3882
    %v4150 = vunpack.c.l.b16 %v3883
    %v4151 = vunpack.c.l.b16 %v3884
    %v4152 = vunpack.c.l.b16 %v3885
    %v4153 = vunpack.c.l.b16 %v3886
    %v4154 = vunpack.c.l.b16 %v3887
    %v4155 = vunpack.c.l.b16 %v3888
    %v4156 = vunpack.c.l.b16 %v3889
    %v4157 = vunpack.c.l.b16 %v3890
    %v4158 = vunpack.c.l.b16 %v3891
    %v4159 = vunpack.c.l.b16 %v3892
    %v4160 = vunpack.c.l.b16 %v3893
    %v4161 = vunpack.c.l.b16 %v3894
    %v4162 = vunpack.c.l.b16 %v3895
    %v4163 = vunpack.c.l.b16 %v3896
    %v4164 = vunpack.c.l.b16 %v3897
    %v4165 = vunpack.c.l.b16 %v3898
    %v4166 = vunpack.c.l.b16 %v3899
    %v4167 = vunpack.c.l.b16 %v3900
    %v4168 = vunpack.c.l.b16 %v3901
    %v4169 = vunpack.c.l.b16 %v3902
    %v4170 = vunpack.c.l.b16 %v3903
    %v4171 = vunpack.c.l.b16 %v3904
    %v4172 = vunpack.c.l.b16 %v3905
    %v4173 = vunpack.c.l.b16 %v3906
    %v4174 = vunpack.c.l.b16 %v3907
    %v4175 = vunpack.c.l.b16 %v3908
    %v4176 = vunpack.c.l.b16 %v3909
    %v4177 = vunpack.c.l.b16 %v3910
    %v4178 = vunpack.c.l.b16 %v3911
    %v4179 = vunpack.c.l.b16 %v3912
    %v4180 = vunpack.c.l.b16 %v3913
    %v4181 = vunpack.c.l.b16 %v3914
    %v4182 = vunpack.c.l.b16 %v3915
    %v4183 = vunpack.c.l.b16 %v3916
    %v4184 = vunpack.c.l.b16 %v3917
    %v4185 = vunpack.c.l.b16 %v3918
    %v4186 = vunpack.c.l.b16 %v3919
    %v4187 = vunpack.c.l.b16 %v3920
    %v4188 = vunpack.c.l.b16 %v3921
    %v4189 = vunpack.c.l.b16 %v3922
    %v4190 = vunpack.c.l.b16 %v3923
    %v4191 = vunpack.c.l.b16 %v3924
    %v4192 = vunpack.c.l.b16 %v3925
    %v4193 = vunpack.c.l.b16 %v3926
    %v4194 = vunpack.c.l.b16 %v3927
    %v4195 = vunpack.c.l.b16 %v3928
    %v4196 = vunpack.c.l.b16 %v3929
    %v4197 = vunpack.c.l.b16 %v3930
    %v4198 = vunpack.c.l.b16 %v3931
    %v4199 = vunpack.c.l.b16 %v3932
    %v4200 = vunpack.c.l.b16 %v3933
    %v4201 = vunpack.c.l.b16 %v3934
    %v4202 = vunpack.c.l.b16 %v3935
    %v4203 = vunpack.c.l.b16 %v3936
    %v4204 = vunpack.c.l.b16 %v3937
    %v4205 = vunpack.c.l.b16 %v3938
    %v4206 = vunpack.c.l.b16 %v3939
    %v4207 = vunpack.c.l.b16 %v3940
    %v4208 = vunpack.c.l.b16 %v3941
    %v4209 = vunpack.c.l.b16 %v3942
    %v4210 = vunpack.c.l.b16 %v3943
    %v4211 = vunpack.c.l.b16 %v3944
    %v4212 = vunpack.c.l.b16 %v3945
    %v4213 = vpack.c.b16 %v4102, %v4101
    %v4214 = vpack.c.b16 %v4104, %v4103
    %v4215 = vpack.c.b16 %v4106, %v4105
    %v4216 = vpack.c.b16 %v4108, %v4107
    %v4217 = vpack.c.b16 %v4110, %v4109
    %v4218 = vpack.c.b16 %v4112, %v4111
    %v4219 = vpack.c.b16 %v4114, %v4113
    %v4220 = vpack.c.b16 %v4116, %v4115
    %v4221 = vpack.c.b16 %v4118, %v4117
    %v4222 = vpack.c.b16 %v4120, %v4119
    %v4223 = vpack.c.b16 %v4122, %v4121
    %v4224 = vpack.c.b16 %v4124, %v4123
    %v4225 = vpack.c.b16 %v4126, %v4125
    %v4226 = vpack.c.b16 %v4128, %v4127
    %v4227 = vpack.c.b16 %v4130, %v4129
    %v4228 = vpack.c.b16 %v4132, %v4131
    %v4229 = vpack.c.b16 %v4134, %v4133
    %v4230 = vpack.c.b16 %v4136, %v4135
    %v4231 = vpack.c.b16 %v4138, %v4137
    %v4232 = vpack.c.b16 %v4140, %v4139
    %v4233 = vpack.c.b16 %v4142, %v4141
    %v4234 = vpack.c.b16 %v4144, %v4143
    %v4235 = vpack.c.b16 %v4146, %v4145
    %v4236 = vpack.c.b16 %v4148, %v4147
    %v4237 = vpack.c.b16 %v4150, %v4149
    %v4238 = vpack.c.b16 %v4152, %v4151
    %v4239 = vpack.c.b16 %v4154, %v4153
    %v4240 = vpack.c.b16 %v4156, %v4155
    %v4241 = vpack.c.b16 %v4158, %v4157
    %v4242 = vpack.c.b16 %v4160, %v4159
    %v4243 = vpack.c.b16 %v4162, %v4161
    %v4244 = vpack.c.b16 %v4164, %v4163
    %v4245 = vpack.c.b16 %v4166, %v4165
    %v4246 = vpack.c.b16 %v4168, %v4167
    %v4247 = vpack.c.b16 %v4170, %v4169
    %v4248 = vpack.c.b16 %v4172, %v4171
    %v4249 = vpack.c.b16 %v4174, %v4173
    %v4250 = vpack.c.b16 %v4176, %v4175
    %v4251 = vpack.c.b16 %v4178, %v4177
    %v4252 = vpack.c.b16 %v4180, %v4179
    %v4253 = vpack.c.b16 %v4182, %v4181
    %v4254 = vpack.c.b16 %v4184, %v4183
    %v4255 = vpack.c.b16 %v4186, %v4185
    %v4256 = vpack.c.b16 %v4188, %v4187
    %v4257 = vpack.c.b16 %v4190, %v4189
    %v4258 = vpack.c.b16 %v4192, %v4191
    %v4259 = vpack.c.b16 %v4194, %v4193
    %v4260 = vpack.c.b16 %v4196, %v4195
    %v4261 = vpack.c.b16 %v4198, %v4197
    %v4262 = vpack.c.b16 %v4200, %v4199
    %v4263 = vpack.c.b16 %v4202, %v4201
    %v4264 = vpack.c.b16 %v4204, %v4203
    %v4265 = vpack.c.b16 %v4206, %v4205
    %v4266 = vpack.c.b16 %v4208, %v4207
    %v4267 = vpack.c.b16 %v4210, %v4209
    %v4268 = vpack.c.b16 %v4212, %v4211
    %4325 = vmatprep.subr.bf16.mxu0 0
    %4326 = vmatpush1.bf16.msra.mxu0 %v4220
    %4327 = vmatprep.subr.bf16.mxu0 0
    %4328 = vmatpush1.bf16.msra.mxu0 %v4219
    %4329 = vmatprep.subr.bf16.mxu0 0
    %4330 = vmatpush1.bf16.msra.mxu0 %v4218
    %4331 = vmatprep.subr.bf16.mxu0 0
    %4332 = vmatpush1.bf16.msra.mxu0 %v4217
    %4333 = vmatprep.subr.bf16.mxu0 0
    %4334 = vmatpush1.bf16.msra.mxu0 %v4216
    %4335 = vmatprep.subr.bf16.mxu0 0
    %4336 = vmatpush1.bf16.msra.mxu0 %v4215
    %4337 = vmatprep.subr.bf16.mxu0 0
    %4338 = vmatpush1.bf16.msra.mxu0 %v4214
    %4339 = vmatprep.subr.bf16.mxu0 0
    %4340 = vmatpush1.bf16.msra.mxu0 %v4213
    %4341 = vmatprep.subr.bf16.mxu0 0
    %4342 = vmatpush2.bf16.msra.mxu0 %v4228
    %4343 = vmatprep.subr.bf16.mxu0 0
    %4344 = vmatpush2.bf16.msra.mxu0 %v4227
    %4345 = vmatprep.subr.bf16.mxu0 0
    %4346 = vmatpush2.bf16.msra.mxu0 %v4226
    %4347 = vmatprep.subr.bf16.mxu0 0
    %4348 = vmatpush2.bf16.msra.mxu0 %v4225
    %4349 = vmatprep.subr.bf16.mxu0 0
    %4350 = vmatpush2.bf16.msra.mxu0 %v4224
    %4351 = vmatprep.subr.bf16.mxu0 0
    %4352 = vmatpush2.bf16.msra.mxu0 %v4223
    %4353 = vmatprep.subr.bf16.mxu0 0
    %4354 = vmatpush2.bf16.msra.mxu0 %v4222
    %4355 = vmatprep.subr.bf16.mxu0 0
    %4356 = vmatpush2.bf16.msra.mxu0 %v4221
    %4357 = vmatprep.mubr.bf16.mxu0 %v3976
    %4358 = vmatmul.mubr.bf16.gmra.mxu0 %v3975
    %v4359 = vpop.f32.mrf.mxu0
    %v4360 = vadd.f32 %v3951, %v4359
    %v4361 = vpop.f32.mrf.mxu0
    %v4362 = vpop.f32.mrf.mxu0
    %v4363 = vadd.f32 %v3951, %v4362
    %v4364 = vpop.f32.mrf.mxu0
    %4365 = vdwg.mxu0
    %4366 = vmatprep.subr.bf16.mxu0 0
    %4367 = vmatpush1.bf16.msra.mxu0 %v4236
    %4368 = vmatprep.subr.bf16.mxu0 0
    %4369 = vmatpush1.bf16.msra.mxu0 %v4235
    %4370 = vmatprep.subr.bf16.mxu0 0
    %4371 = vmatpush1.bf16.msra.mxu0 %v4234
    %4372 = vmatprep.subr.bf16.mxu0 0
    %4373 = vmatpush1.bf16.msra.mxu0 %v4233
    %4374 = vmatprep.subr.bf16.mxu0 0
    %4375 = vmatpush1.bf16.msra.mxu0 %v4232
    %4376 = vmatprep.subr.bf16.mxu0 0
    %4377 = vmatpush1.bf16.msra.mxu0 %v4231
    %4378 = vmatprep.subr.bf16.mxu0 0
    %4379 = vmatpush1.bf16.msra.mxu0 %v4230
    %4380 = vmatprep.subr.bf16.mxu0 0
    %4381 = vmatpush1.bf16.msra.mxu0 %v4229
    %4382 = vmatprep.subr.bf16.mxu0 0
    %4383 = vmatpush2.bf16.msra.mxu0 %v4244
    %4384 = vmatprep.subr.bf16.mxu0 0
    %4385 = vmatpush2.bf16.msra.mxu0 %v4243
    %4386 = vmatprep.subr.bf16.mxu0 0
    %4387 = vmatpush2.bf16.msra.mxu0 %v4242
    %4388 = vmatprep.subr.bf16.mxu0 0
    %4389 = vmatpush2.bf16.msra.mxu0 %v4241
    %4390 = vmatprep.subr.bf16.mxu0 0
    %4391 = vmatpush2.bf16.msra.mxu0 %v4240
    %4392 = vmatprep.subr.bf16.mxu0 0
    %4393 = vmatpush2.bf16.msra.mxu0 %v4239
    %4394 = vmatprep.subr.bf16.mxu0 0
    %4395 = vmatpush2.bf16.msra.mxu0 %v4238
    %4396 = vmatprep.subr.bf16.mxu0 0
    %4397 = vmatpush2.bf16.msra.mxu0 %v4237
    %4398 = vmatprep.mubr.bf16.mxu0 %v3978
    %4399 = vmatmul.mubr.bf16.gmra.mxu0 %v3977
    %v4400 = vpop.f32.mrf.mxu0
    %v4401 = vadd.f32 %v4360, %v4400
    %v4402 = vpop.f32.mrf.mxu0
    %v4403 = vpop.f32.mrf.mxu0
    %v4404 = vadd.f32 %v4363, %v4403
    %v4405 = vpop.f32.mrf.mxu0
    %4406 = vdwg.mxu0
    %4407 = vmatprep.subr.bf16.mxu0 0
    %4408 = vmatpush1.bf16.msra.mxu0 %v4252
    %4409 = vmatprep.subr.bf16.mxu0 0
    %4410 = vmatpush1.bf16.msra.mxu0 %v4251
    %4411 = vmatprep.subr.bf16.mxu0 0
    %4412 = vmatpush1.bf16.msra.mxu0 %v4250
    %4413 = vmatprep.subr.bf16.mxu0 0
    %4414 = vmatpush1.bf16.msra.mxu0 %v4249
    %4415 = vmatprep.subr.bf16.mxu0 0
    %4416 = vmatpush1.bf16.msra.mxu0 %v4248
    %4417 = vmatprep.subr.bf16.mxu0 0
    %4418 = vmatpush1.bf16.msra.mxu0 %v4247
    %4419 = vmatprep.subr.bf16.mxu0 0
    %4420 = vmatpush1.bf16.msra.mxu0 %v4246
    %4421 = vmatprep.subr.bf16.mxu0 0
    %4422 = vmatpush1.bf16.msra.mxu0 %v4245
    %4423 = vmatprep.subr.bf16.mxu0 0
    %4424 = vmatpush2.bf16.msra.mxu0 %v4260
    %4425 = vmatprep.subr.bf16.mxu0 0
    %4426 = vmatpush2.bf16.msra.mxu0 %v4259
    %4427 = vmatprep.subr.bf16.mxu0 0
    %4428 = vmatpush2.bf16.msra.mxu0 %v4258
    %4429 = vmatprep.subr.bf16.mxu0 0
    %4430 = vmatpush2.bf16.msra.mxu0 %v4257
    %4431 = vmatprep.subr.bf16.mxu0 0
    %4432 = vmatpush2.bf16.msra.mxu0 %v4256
    %4433 = vmatprep.subr.bf16.mxu0 0
    %4434 = vmatpush2.bf16.msra.mxu0 %v4255
    %4435 = vmatprep.subr.bf16.mxu0 0
    %4436 = vmatpush2.bf16.msra.mxu0 %v4254
    %4437 = vmatprep.subr.bf16.mxu0 0
    %4438 = vmatpush2.bf16.msra.mxu0 %v4253
    %4439 = vmatprep.mubr.bf16.mxu0 %v3980
    %4440 = vmatmul.mubr.bf16.gmra.mxu0 %v3979
    %v4441 = vpop.f32.mrf.mxu0
    %v4442 = vadd.f32 %v4401, %v4441
    %v4443 = vpop.f32.mrf.mxu0
    %v4444 = vpop.f32.mrf.mxu0
    %v4445 = vadd.f32 %v4404, %v4444
    %v4446 = vpop.f32.mrf.mxu0
    %4447 = vdwg.mxu0
    %4448 = vmatprep.subr.bf16.mxu0 0
    %4449 = vmatpush1.bf16.msra.mxu0 %v4268
    %4450 = vmatprep.subr.bf16.mxu0 0
    %4451 = vmatpush1.bf16.msra.mxu0 %v4267
    %4452 = vmatprep.subr.bf16.mxu0 0
    %4453 = vmatpush1.bf16.msra.mxu0 %v4266
    %4454 = vmatprep.subr.bf16.mxu0 0
    %4455 = vmatpush1.bf16.msra.mxu0 %v4265
    %4456 = vmatprep.subr.bf16.mxu0 0
    %4457 = vmatpush1.bf16.msra.mxu0 %v4264
    %4458 = vmatprep.subr.bf16.mxu0 0
    %4459 = vmatpush1.bf16.msra.mxu0 %v4263
    %4460 = vmatprep.subr.bf16.mxu0 0
    %4461 = vmatpush1.bf16.msra.mxu0 %v4262
    %4462 = vmatprep.subr.bf16.mxu0 0
    %4463 = vmatpush1.bf16.msra.mxu0 %v4261
    %4464 = vmatprep.subr.bf16.mxu0 0
    %4465 = vmatpush2.bf16.msra.mxu0 0
    %4466 = vmatprep.subr.bf16.mxu0 0
    %4467 = vmatpush2.bf16.msra.mxu0 0
    %4468 = vmatprep.subr.bf16.mxu0 0
    %4469 = vmatpush2.bf16.msra.mxu0 0
    %4470 = vmatprep.subr.bf16.mxu0 0
    %4471 = vmatpush2.bf16.msra.mxu0 0
    %4472 = vmatprep.subr.bf16.mxu0 0
    %4473 = vmatpush2.bf16.msra.mxu0 0
    %4474 = vmatprep.subr.bf16.mxu0 0
    %4475 = vmatpush2.bf16.msra.mxu0 0
    %4476 = vmatprep.subr.bf16.mxu0 0
    %4477 = vmatpush2.bf16.msra.mxu0 0
    %4478 = vmatprep.subr.bf16.mxu0 0
    %4479 = vmatpush2.bf16.msra.mxu0 0
    %4480 = vmatprep.mubr.bf16.mxu0 0
    %4481 = vmatmul.mubr.bf16.gmra.mxu0 %v3981
    %v4482 = vpop.f32.mrf.mxu0
    %v4483 = vadd.f32 %v4442, %v4482
    %v4484 = vpop.f32.mrf.mxu0
    %v4485 = vpop.f32.mrf.mxu0
    %v4486 = vadd.f32 %v4445, %v4485
    %v4487 = vpop.f32.mrf.mxu0
    %4488 = vdwg.mxu0
    %4489 = vst [vmem:[#allocation9] sm:$0xff] %v4483
    %4490 = vst [vmem:[#allocation9 + $0x8] sm:$0xff] %v4486
    // Predicated region
    $region42: #{forward.1} parent=1 // pred_check
      _
    $region43: #{forward.1} parent=1 // pred_check_branch
      %4492 = sbr.rel (0) target = $region45
    $region44: #{forward.1} parent=1 // pred_region
      %s4494 = ssub.s32 256, 256
      %4495 = vsyncadd [#allocation5], %s4494
      %s4496 = sshll.u32 [#allocation9], 4
      %s4497 = int_to_ptr.vmem [resolvable:$true] %s4496
      %4502 = dma.vmem_to_hbm [thread:$0]  %s4497, 256, %s7, [#allocation5], 128, 128, 8
    $region45: #{forward.1} parent=1 // pred_fallthru
      _
    // Predicated region
    $region46: #{forward.1} parent=1 // pred_check
      _
    $region47: #{forward.1} parent=1 // pred_check_branch
      %4504 = sbr.rel (0) target = $region49
    $region48: #{forward.1} parent=1 // pred_region
      %4505 = dma.done [#allocation5], 256
    $region49: #{forward.1} parent=1 // pred_fallthru
      _
    %4506 = vsyncpa [#allocation4], 1
    %4507 = vsyncpa [#allocation7], 1
    %4508 = vsyncpa [#allocation5], 1

</llo_original>
